<compile_context>
chip_gen: v5e
topology: v5e:2x2
jax: 0.10.0
libtpu: 0.0.40
codegen_flags: <defaults>
</compile_context>

<pallas_src>
import jax
import jax.numpy as jnp
from jax import lax
from jax.experimental import pallas as pl
from jax.experimental.pallas import tpu as pltpu

PRIMITIVES = ["none", "identity", "avg_pool_3x3", "max_pool_3x3", "conv_1x1", "conv_3x3"]
EPS = 1e-5
NEG_INF = -1e30            # additive max-pool border mask (valid while |x| << 1e30)
TAPWISE_MIN_CIN = 128      # use per-tap matmuls once Cin alone fills the MXU K dim


# --------------------------------------------------------------------------------
# in-kernel helpers
# --------------------------------------------------------------------------------
def _relu_bf16(v):
    return jnp.maximum(v, 0.0).astype(jnp.bfloat16)


def _zero_pad_borders(pad_ref, H, W):
    """Zero only the four 1-wide border strips of the padded scratch (the interior is
    fully overwritten every step). Safe under 'parallel' megacore sharding."""
    bn, _, _, Cin = pad_ref.shape
    dt = pad_ref.dtype
    zrow = jnp.zeros((bn, 1, W + 2, Cin), dt)
    pad_ref[:, 0:1, :, :] = zrow
    pad_ref[:, H + 1:H + 2, :, :] = zrow
    zcol = jnp.zeros((bn, H, 1, Cin), dt)
    pad_ref[:, 1:H + 1, 0:1, :] = zcol
    pad_ref[:, 1:H + 1, W + 1:W + 2, :] = zcol


def _conv_branches(x, xz, w3_ref, w1_ref):
    """ReLU->conv for the 3x3 and 1x1 candidates (bf16 MXU, f32 accumulation).

    x:  (bn, H, W, Cin) raw f32 tile          (center tap / 1x1 input)
    xz: (bn, H+2, W+2, Cin) raw f32 zero-padded tile
    Returns c3, c1: (R, Cout) f32 raw conv outputs (no BN / alpha applied here, so
    pass 1 and pass 2 see bit-identical tensors).
    """
    bn, H, W, Cin = x.shape
    Cout = w1_ref.shape[1]
    R = bn * H * W

    center = _relu_bf16(x).reshape(R, Cin)
    c1 = jnp.dot(center, w1_ref[...], preferred_element_type=jnp.float32)

    if Cin >= TAPWISE_MIN_CIN:
        # Tap-wise accumulation: no 9x-expanded buffer, no (R, 9*Cin) relayouts.
        c3 = jnp.zeros((R, Cout), jnp.float32)
        t = 0
        for dy in range(3):
            for dx in range(3):
                tap = _relu_bf16(xz[:, dy:dy + H, dx:dx + W, :]).reshape(R, Cin)
                c3 = c3 + jnp.dot(tap, w3_ref[t * Cin:(t + 1) * Cin, :],
                                  preferred_element_type=jnp.float32)
                t += 1
    else:
        # Small Cin: build the im2col LHS directly in bf16 (never f32) and run one
        # fused matmul so the MXU K dimension is filled.
        cols = [_relu_bf16(xz[:, dy:dy + H, dx:dx + W, :]).reshape(R, Cin)
                for dy in range(3) for dx in range(3)]
        lhs = jnp.concatenate(cols, axis=-1)                     # (R, 9*Cin) bf16
        c3 = jnp.dot(lhs, w3_ref[...], preferred_element_type=jnp.float32)
    return c3, c1


# --------------------------------------------------------------------------------
# pass 1: per-tile partial BN statistics of the raw conv outputs
# --------------------------------------------------------------------------------
def _stats_kernel(x_ref, w3_ref, w1_ref, stats_ref, pad_ref):
    """x_ref:     (bn, H, W, Cin) f32 NHWC tile
       w3_ref:    (9*Cin, Cout) bf16,  w1_ref: (Cin, Cout) bf16
       stats_ref: (1, 2, 2*Cout) f32 per-tile partial [sum; sumsq] x [conv3 | conv1]
       pad_ref:   (bn, H+2, W+2, Cin) f32 VMEM scratch (zero-padded tile)
    """
    bn, H, W, Cin = x_ref.shape
    x = x_ref[...]
    _zero_pad_borders(pad_ref, H, W)
    pad_ref[:, 1:H + 1, 1:W + 1, :] = x

    c3, c1 = _conv_branches(x, pad_ref[...], w3_ref, w1_ref)

    row_s = jnp.concatenate([jnp.sum(c3, axis=0, keepdims=True),
                             jnp.sum(c1, axis=0, keepdims=True)], axis=1)
    row_q = jnp.concatenate([jnp.sum(c3 * c3, axis=0, keepdims=True),
                             jnp.sum(c1 * c1, axis=0, keepdims=True)], axis=1)
    stats_ref[...] = jnp.concatenate([row_s, row_q], axis=0)[None]


# --------------------------------------------------------------------------------
# pass 2: pooling / identity / BN-normalized convs, weighted sum, output
# --------------------------------------------------------------------------------
def _apply_kernel(x_ref, w3_ref, w1_ref, invc2_ref, bneg_ref, chanp_ref, o_ref, pad_ref):
    """x_ref:     (bn, H, W, Cin) f32 NHWC tile
       w3_ref:    (9*Cin, Cout) bf16,  w1_ref: (Cin, Cout) bf16
       invc2_ref: (1, H, W, 1) f32  alpha_avg / valid-count (count_include_pad=False)
       bneg_ref:  (1, H+2, W+2, 1) f32 additive -inf border mask for max-pool
       chanp_ref: (8, Cout) f32 rows: [alpha_id, alpha_max, s3, s1, bias, 0, 0, 0]
       o_ref:     (bn, H, W, Cout) f32 output tile
       pad_ref:   (bn, H+2, W+2, Cin) f32 VMEM scratch (zero-padded tile)
    """
    bn, H, W, Cin = x_ref.shape
    Cout = o_ref.shape[-1]

    x = x_ref[...]
    _zero_pad_borders(pad_ref, H, W)
    pad_ref[:, 1:H + 1, 1:W + 1, :] = x
    xz = pad_ref[...]

    a_id = chanp_ref[0:1, :]       # (1, Cout) broadcasts over lanes
    a_max = chanp_ref[1:2, :]
    s3 = chanp_ref[2:3, :]
    s1 = chanp_ref[3:4, :]
    bias = chanp_ref[4:5, :]

    # identity ('none' contributes exactly 0)
    out = x * a_id

    # avg_pool_3x3 (separable sum; alpha folded into invc2)
    vs = xz[:, 0:H, :, :] + xz[:, 1:H + 1, :, :] + xz[:, 2:H + 2, :, :]
    psum = vs[:, :, 0:W, :] + vs[:, :, 1:W + 1, :] + vs[:, :, 2:W + 2, :]
    out = out + psum * invc2_ref[...]

    # max_pool_3x3 (implicit -inf padding via additive border mask; separable max)
    xm = xz + bneg_ref[...]
    vm = jnp.maximum(jnp.maximum(xm[:, 0:H, :, :], xm[:, 1:H + 1, :, :]),
                     xm[:, 2:H + 2, :, :])
    pmax = jnp.maximum(jnp.maximum(vm[:, :, 0:W, :], vm[:, :, 1:W + 1, :]),
                       vm[:, :, 2:W + 2, :])
    out = out + pmax * a_max

    # conv_1x1 + conv_3x3 (ReLU -> conv -> BN); raw convs identical to pass 1,
    # BN scale/alpha/mean applied as a cheap f32 per-channel epilogue.
    c3, c1 = _conv_branches(x, xz, w3_ref, w1_ref)
    c = c3 * s3 + c1 * s1 + bias
    out = out + c.reshape(bn, H, W, Cout)

    # TODO(synk): lane-dense output packing ((W,Cout)->(W*Cout) merge, ideally emitting
    # NCHW directly) would remove the masked vst.msk store path for Cout < 128, but the
    # required minor-dim shape-cast is not reliably lowerable by Mosaic today; kept the
    # channels-last full-tile store (last two block dims == full array dims).
    o_ref[...] = out


# --------------------------------------------------------------------------------
# wrapper: generation-aware tiling + two pallas_call passes
# --------------------------------------------------------------------------------
def _vmem_budget_bytes():
    try:
        cap = int(pltpu.get_tpu_info().vmem_capacity_bytes)
    except Exception:
        cap = 64 * 1024 * 1024            # conservative fallback (v7x per-core VMEM)
    return (3 * cap) // 4                 # ~48 MiB on v7x, ~96 MiB on v5e/v6e


def _est_vmem_bytes(bn, H, W, Cin, Cout):
    """Rough per-step working set (double-buffered I/O tiles + scratch + temporaries)."""
    hw, phw = H * W, (H + 2) * (W + 2)
    b = 2 * bn * hw * Cin * 4             # input tile (double-buffered)
    b += 2 * bn * hw * Cout * 4           # output tile (double-buffered)
    b += bn * phw * Cin * 4               # zero-padded f32 scratch
    if Cin < TAPWISE_MIN_CIN:
        b += bn * hw * 9 * Cin * 2        # bf16 im2col LHS
    else:
        b += 2 * bn * hw * Cin * 2        # a couple of bf16 tap slices in flight
    b += 2 * bn * hw * Cout * 4           # c3 / c1 f32 conv results
    b += 4 * bn * hw * Cin * 4            # pooling / epilogue temporaries
    b += 10 * Cin * Cout * 2              # bf16 weights
    return b


def _pick_batch_tile(N, H, W, Cin, Cout, budget):
    """Largest divisor of N whose working set fits the VMEM budget, preferring >= 2
    grid steps (pipelining depth / 2nd TensorCore occupancy)."""
    divs = sorted((d for d in range(1, N + 1) if N % d == 0), reverse=True)
    fit = [d for d in divs if _est_vmem_bytes(d, H, W, Cin, Cout) <= budget]
    if not fit:
        # TODO(synk): add a halo'd H-split grid axis when even bn=1 overflows VMEM.
        return 1
    multi = [d for d in fit if N // d >= 2]
    return multi[0] if multi else fit[0]


def mixed_op(x_nchw, weights, params, stride=1):
    """MixedOp.forward(x, weights). x_nchw: (N, C_in, H, W) f32 -> (N, C_out, H, W)."""
    # TODO(synk): stride > 1 path (Zero subsample / strided conv & pool / FactorizedReduce)
    # is not wired into this synthetic kernel.
    assert stride == 1
    w1 = params["w1"].astype(jnp.float32)       # (Cin, Cout)
    w3 = params["w3"].astype(jnp.float32)       # (9, Cin, Cout), taps row-major (dy, dx)
    N, Cin, H, W = x_nchw.shape
    Cout = w1.shape[1]
    assert Cin == Cout, "identity / pooling primitives require C_in == C_out"

    weights = weights.astype(jnp.float32)
    a_id, a_avg, a_max, a_c1, a_c3 = (weights[1], weights[2], weights[3],
                                      weights[4], weights[5])

    # NHWC compute layout, single un-padded copy (padding is done in-kernel).
    # TODO(synk): keeping the surrounding model NHWC end-to-end (or folding the relayout
    # into the HBM->VMEM DMA) would remove these two full-tensor transposes.
    x = jnp.transpose(x_nchw, (0, 2, 3, 1)).astype(jnp.float32)

    budget = _vmem_budget_bytes()
    bn = _pick_batch_tile(N, H, W, Cin, Cout, budget)
    grid_n = N // bn
    R_total = N * H * W

    # Same bf16 weights in BOTH passes -> BN stats exactly match the normalized tensor.
    w3_bf = w3.reshape(9 * Cin, Cout).astype(jnp.bfloat16)
    w1_bf = w1.astype(jnp.bfloat16)

    # ---------------- pass 1: global BN statistics (per-tile partials, 'parallel') ----
    partial = pl.pallas_call(
        _stats_kernel,
        out_shape=jax.ShapeDtypeStruct((grid_n, 2, 2 * Cout), jnp.float32),
        grid=(grid_n,),
        in_specs=[
            pl.BlockSpec((bn, H, W, Cin), lambda t: (t, 0, 0, 0)),
            pl.BlockSpec((9 * Cin, Cout), lambda t: (0, 0)),
            pl.BlockSpec((Cin, Cout), lambda t: (0, 0)),
        ],
        out_specs=pl.BlockSpec((1, 2, 2 * Cout), lambda t: (t, 0, 0)),
        scratch_shapes=[pltpu.VMEM((bn, H + 2, W + 2, Cin), jnp.float32)],
        compiler_params=pltpu.CompilerParams(
            dimension_semantics=("parallel",),      # per-tile partials -> both TCs usable
            vmem_limit_bytes=budget),
    )(x, w3_bf, w1_bf)

    stats = jnp.sum(partial, axis=0)                # (2, 2*Cout)
    mean = stats[0] / R_total
    var = jnp.maximum(stats[1] / R_total - mean * mean, 0.0)
    invstd = lax.rsqrt(var + EPS)
    mean3, mean1 = mean[:Cout], mean[Cout:]
    s3 = a_c3 * invstd[:Cout]                       # alpha * BN scale, conv3x3
    s1 = a_c1 * invstd[Cout:]                       # alpha * BN scale, conv1x1
    bias = -(s3 * mean3 + s1 * mean1)               # (Cout,)

    chanp = jnp.zeros((8, Cout), jnp.float32)
    chanp = chanp.at[0].set(a_id)
    chanp = chanp.at[1].set(a_max)
    chanp = chanp.at[2].set(s3)
    chanp = chanp.at[3].set(s1)
    chanp = chanp.at[4].set(bias)

    # avg-pool valid-count reciprocal with alpha folded in (count_include_pad=False)
    cr = 3.0 - (jnp.arange(H) == 0).astype(jnp.float32) - (jnp.arange(H) == H - 1).astype(jnp.float32)
    cc = 3.0 - (jnp.arange(W) == 0).astype(jnp.float32) - (jnp.arange(W) == W - 1).astype(jnp.float32)
    invc2 = (a_avg / (cr[:, None] * cc[None, :])).astype(jnp.float32)[None, :, :, None]

    # additive -inf border mask for max-pool (replaces a second full padded input copy)
    bm = jnp.zeros((H + 2, W + 2), jnp.float32)
    bm = bm.at[0, :].set(NEG_INF)
    bm = bm.at[H + 1, :].set(NEG_INF)
    bm = bm.at[:, 0].set(NEG_INF)
    bm = bm.at[:, W + 1].set(NEG_INF)
    border_neg = bm[None, :, :, None]

    # ---------------- pass 2: normalize, pool, weighted sum ----------------
    out_nhwc = pl.pallas_call(
        _apply_kernel,
        out_shape=jax.ShapeDtypeStruct((N, H, W, Cout), jnp.float32),
        grid=(grid_n,),
        in_specs=[
            pl.BlockSpec((bn, H, W, Cin), lambda t: (t, 0, 0, 0)),
            pl.BlockSpec((9 * Cin, Cout), lambda t: (0, 0)),
            pl.BlockSpec((Cin, Cout), lambda t: (0, 0)),
            pl.BlockSpec((1, H, W, 1), lambda t: (0, 0, 0, 0)),
            pl.BlockSpec((1, H + 2, W + 2, 1), lambda t: (0, 0, 0, 0)),
            pl.BlockSpec((8, Cout), lambda t: (0, 0)),
        ],
        out_specs=pl.BlockSpec((bn, H, W, Cout), lambda t: (t, 0, 0, 0)),
        scratch_shapes=[pltpu.VMEM((bn, H + 2, W + 2, Cin), jnp.float32)],
        compiler_params=pltpu.CompilerParams(
            dimension_semantics=("parallel",),      # batch tiles independent -> 2nd TC
            vmem_limit_bytes=budget),
    )(x, w3_bf, w1_bf, invc2, border_neg, chanp)

    return jnp.transpose(out_nhwc, (0, 3, 1, 2))    # back to NCHW


# ----------------------- pure-JAX reference (for checking) -----------------------
def _bn_ref(y):  # NCHW, training-mode BN, affine=False
    mean = jnp.mean(y, axis=(0, 2, 3), keepdims=True)
    var = jnp.mean((y - mean) ** 2, axis=(0, 2, 3), keepdims=True)
    return (y - mean) / jnp.sqrt(var + EPS)


def ref_mixed_op(x_nchw, weights, w1, w3):
    x = x_nchw.astype(jnp.float32)
    N, C, H, W = x.shape
    pad = [(0, 0), (0, 0), (1, 1), (1, 1)]
    outs = []
    outs.append(jnp.zeros_like(x))                                    # none
    outs.append(x)                                                    # identity
    s = lax.reduce_window(x, 0.0, lax.add, (1, 1, 3, 3), (1, 1, 1, 1), pad)
    cnt = lax.reduce_window(jnp.ones_like(x), 0.0, lax.add, (1, 1, 3, 3), (1, 1, 1, 1), pad)
    outs.append(s / cnt)                                              # avg_pool_3x3
    outs.append(lax.reduce_window(x, -jnp.inf, lax.max, (1, 1, 3, 3), (1, 1, 1, 1), pad))
    xr = jnp.maximum(x, 0.0)
    k1 = jnp.transpose(w1, (1, 0))[:, :, None, None]                  # OIHW
    c1 = lax.conv_general_dilated(xr, k1, (1, 1), "VALID",
                                  dimension_numbers=("NCHW", "OIHW", "NCHW"),
                                  precision=lax.Precision.HIGHEST)
    outs.append(_bn_ref(c1))                                          # conv_1x1
    k3 = jnp.transpose(w3.reshape(3, 3, C, C), (3, 2, 0, 1))          # OIHW
    c3 = lax.conv_general_dilated(xr, k3, (1, 1), ((1, 1), (1, 1)),
                                  dimension_numbers=("NCHW", "OIHW", "NCHW"),
                                  precision=lax.Precision.HIGHEST)
    outs.append(_bn_ref(c3))                                          # conv_3x3
    return sum(w * o for w, o in zip(weights, outs))


if __name__ == "__main__":
    key = jax.random.PRNGKey(0)
    kx, kw, k1, k3 = jax.random.split(key, 4)

    N, C, H, W = 2, 8, 16, 16          # C_in == C_out so 'identity' is included
    x = jax.random.normal(kx, (N, C, H, W), jnp.float32)
    weights = jax.nn.softmax(jax.random.normal(kw, (len(PRIMITIVES),), jnp.float32))
    params = {
        "w1": 0.1 * jax.random.normal(k1, (C, C), jnp.float32),       # 1x1 conv (Cin, Cout)
        "w3": 0.1 * jax.random.normal(k3, (9, C, C), jnp.float32),    # 3x3 conv taps (Cin, Cout)
    }

    fn = jax.jit(lambda xx, ww, pp: mixed_op(xx, ww, pp, stride=1))
    out = jax.block_until_ready(fn(x, weights, params))
    assert out.shape == (N, C, H, W)

    ref = ref_mixed_op(x, weights, params["w1"], params["w3"])
    # conv path runs bf16 on the MXU (f32 accumulation) -> bf16-level tolerance
    if not jnp.allclose(out, ref, atol=1e-2, rtol=1e-2):
        raise AssertionError(f"mismatch: max abs err {float(jnp.max(jnp.abs(out - ref)))}")

    print("KERNEL_OK")
</pallas_src>

<mosaic_0001>
module attributes {stable_mosaic.version = 11 : i64} {
  func.func @_stats_kernel(%arg0: i32, %arg1: memref<1x16x16x8xf32, #tpu.memory_space<vmem>>, %arg2: memref<72x8xbf16, #tpu.memory_space<vmem>>, %arg3: memref<8x8xbf16, #tpu.memory_space<vmem>>, %arg4: memref<1x2x16xf32, #tpu.memory_space<vmem>>, %arg5: memref<1x18x18x8xf32, #tpu.memory_space<vmem>>) attributes {dimension_semantics = [#tpu.dimension_semantics<parallel>], iteration_bounds = array<i64: 2>, scalar_prefetch = 0 : i64, scratch_operands = 1 : i64, tpu.core_type = #tpu.core_type<tc>, window_params = [{transform_indices = @transform_0, window_bounds = array<i64: 1, 16, 16, 8>}, {pipeline_mode = #tpu.pipeline_mode<synchronous>, transform_indices = @transform_1, window_bounds = array<i64: 72, 8>}, {pipeline_mode = #tpu.pipeline_mode<synchronous>, transform_indices = @transform_2, window_bounds = array<i64: 8, 8>}, {transform_indices = @transform_3, window_bounds = array<i64: 1, 2, 16>}]} {
    %c0 = arith.constant 0 : index
    %c0_0 = arith.constant 0 : index
    %c0_1 = arith.constant 0 : index
    %c0_2 = arith.constant 0 : index
    %0 = vector.load %arg1[%c0, %c0_0, %c0_1, %c0_2] : memref<1x16x16x8xf32, #tpu.memory_space<vmem>>, vector<1x16x16x8xf32>
    %cst = arith.constant 0.000000e+00 : f32
    %1 = vector.broadcast %cst : f32 to vector<1x1x18x8xf32>
    %c0_3 = arith.constant 0 : index
    %c0_4 = arith.constant 0 : index
    %c0_5 = arith.constant 0 : index
    %c0_6 = arith.constant 0 : index
    %2 = vector.load %arg5[%c0_3, %c0_4, %c0_5, %c0_6] : memref<1x18x18x8xf32, #tpu.memory_space<vmem>>, vector<1x1x18x8xf32>
    tpu.vector_store %arg5[%c0_3, %c0_4, %c0_5, %c0_6], %1 {strides = array<i32>} : memref<1x18x18x8xf32, #tpu.memory_space<vmem>>, vector<1x1x18x8xf32>,
    %c0_7 = arith.constant 0 : index
    %c17 = arith.constant 17 : index
    %c0_8 = arith.constant 0 : index
    %c0_9 = arith.constant 0 : index
    %3 = vector.load %arg5[%c0_7, %c17, %c0_8, %c0_9] : memref<1x18x18x8xf32, #tpu.memory_space<vmem>>, vector<1x1x18x8xf32>
    tpu.vector_store %arg5[%c0_7, %c17, %c0_8, %c0_9], %1 {strides = array<i32>} : memref<1x18x18x8xf32, #tpu.memory_space<vmem>>, vector<1x1x18x8xf32>,
    %cst_10 = arith.constant 0.000000e+00 : f32
    %4 = vector.broadcast %cst_10 : f32 to vector<1x16x1x8xf32>
    %c0_11 = arith.constant 0 : index
    %c1 = arith.constant 1 : index
    %c0_12 = arith.constant 0 : index
    %c0_13 = arith.constant 0 : index
    %5 = vector.load %arg5[%c0_11, %c1, %c0_12, %c0_13] : memref<1x18x18x8xf32, #tpu.memory_space<vmem>>, vector<1x16x1x8xf32>
    tpu.vector_store %arg5[%c0_11, %c1, %c0_12, %c0_13], %4 {strides = array<i32>} : memref<1x18x18x8xf32, #tpu.memory_space<vmem>>, vector<1x16x1x8xf32>,
    %c0_14 = arith.constant 0 : index
    %c1_15 = arith.constant 1 : index
    %c17_16 = arith.constant 17 : index
    %c0_17 = arith.constant 0 : index
    %6 = vector.load %arg5[%c0_14, %c1_15, %c17_16, %c0_17] : memref<1x18x18x8xf32, #tpu.memory_space<vmem>>, vector<1x16x1x8xf32>
    tpu.vector_store %arg5[%c0_14, %c1_15, %c17_16, %c0_17], %4 {strides = array<i32>} : memref<1x18x18x8xf32, #tpu.memory_space<vmem>>, vector<1x16x1x8xf32>,
    %c0_18 = arith.constant 0 : index
    %c1_19 = arith.constant 1 : index
    %c1_20 = arith.constant 1 : index
    %c0_21 = arith.constant 0 : index
    %7 = vector.load %arg5[%c0_18, %c1_19, %c1_20, %c0_21] : memref<1x18x18x8xf32, #tpu.memory_space<vmem>>, vector<1x16x16x8xf32>
    tpu.vector_store %arg5[%c0_18, %c1_19, %c1_20, %c0_21], %0 {strides = array<i32>} : memref<1x18x18x8xf32, #tpu.memory_space<vmem>>, vector<1x16x16x8xf32>,
    %c0_22 = arith.constant 0 : index
    %c0_23 = arith.constant 0 : index
    %c0_24 = arith.constant 0 : index
    %c0_25 = arith.constant 0 : index
    %8 = vector.load %arg5[%c0_22, %c0_23, %c0_24, %c0_25] : memref<1x18x18x8xf32, #tpu.memory_space<vmem>>, vector<1x18x18x8xf32>
    %cst_26 = arith.constant 0.000000e+00 : f32
    %9 = vector.broadcast %cst_26 : f32 to vector<1x16x16x8xf32>
    %10 = arith.maximumf %0, %9 : vector<1x16x16x8xf32>
    %11 = arith.truncf %10 : vector<1x16x16x8xf32> to vector<1x16x16x8xbf16>
    %12 = vector.shape_cast %11 : vector<1x16x16x8xbf16> to vector<256x8xbf16>
    %c0_27 = arith.constant 0 : index
    %c0_28 = arith.constant 0 : index
    %13 = vector.load %arg3[%c0_27, %c0_28] : memref<8x8xbf16, #tpu.memory_space<vmem>>, vector<8x8xbf16>
    %cst_29 = arith.constant dense<0.000000e+00> : vector<256x8xf32>
    %14 = tpu.matmul %12, %13, %cst_29 {dimension_numbers = #tpu.dot_dimension_numbers<[1], [0], [0], [1], [0, 0, 1, 1], [], []>} : vector<256x8xbf16>, vector<8x8xbf16>, vector<256x8xf32> -> vector<256x8xf32>
    %15 = vector.extract_strided_slice %8 {offsets = [0, 0, 0, 0], sizes = [1, 16, 16, 8], strides = [1, 1, 1, 1]} : vector<1x18x18x8xf32> to vector<1x16x16x8xf32>
    %cst_30 = arith.constant 0.000000e+00 : f32
    %16 = vector.broadcast %cst_30 : f32 to vector<1x16x16x8xf32>
    %17 = arith.maximumf %15, %16 : vector<1x16x16x8xf32>
    %18 = arith.truncf %17 : vector<1x16x16x8xf32> to vector<1x16x16x8xbf16>
    %19 = vector.shape_cast %18 : vector<1x16x16x8xbf16> to vector<256x8xbf16>
    %20 = vector.extract_strided_slice %8 {offsets = [0, 0, 1, 0], sizes = [1, 16, 16, 8], strides = [1, 1, 1, 1]} : vector<1x18x18x8xf32> to vector<1x16x16x8xf32>
    %cst_31 = arith.constant 0.000000e+00 : f32
    %21 = vector.broadcast %cst_31 : f32 to vector<1x16x16x8xf32>
    %22 = arith.maximumf %20, %21 : vector<1x16x16x8xf32>
    %23 = arith.truncf %22 : vector<1x16x16x8xf32> to vector<1x16x16x8xbf16>
    %24 = vector.shape_cast %23 : vector<1x16x16x8xbf16> to vector<256x8xbf16>
    %25 = vector.extract_strided_slice %8 {offsets = [0, 0, 2, 0], sizes = [1, 16, 16, 8], strides = [1, 1, 1, 1]} : vector<1x18x18x8xf32> to vector<1x16x16x8xf32>
    %cst_32 = arith.constant 0.000000e+00 : f32
    %26 = vector.broadcast %cst_32 : f32 to vector<1x16x16x8xf32>
    %27 = arith.maximumf %25, %26 : vector<1x16x16x8xf32>
    %28 = arith.truncf %27 : vector<1x16x16x8xf32> to vector<1x16x16x8xbf16>
    %29 = vector.shape_cast %28 : vector<1x16x16x8xbf16> to vector<256x8xbf16>
    %30 = vector.extract_strided_slice %8 {offsets = [0, 1, 0, 0], sizes = [1, 16, 16, 8], strides = [1, 1, 1, 1]} : vector<1x18x18x8xf32> to vector<1x16x16x8xf32>
    %cst_33 = arith.constant 0.000000e+00 : f32
    %31 = vector.broadcast %cst_33 : f32 to vector<1x16x16x8xf32>
    %32 = arith.maximumf %30, %31 : vector<1x16x16x8xf32>
    %33 = arith.truncf %32 : vector<1x16x16x8xf32> to vector<1x16x16x8xbf16>
    %34 = vector.shape_cast %33 : vector<1x16x16x8xbf16> to vector<256x8xbf16>
    %35 = vector.extract_strided_slice %8 {offsets = [0, 1, 1, 0], sizes = [1, 16, 16, 8], strides = [1, 1, 1, 1]} : vector<1x18x18x8xf32> to vector<1x16x16x8xf32>
    %cst_34 = arith.constant 0.000000e+00 : f32
    %36 = vector.broadcast %cst_34 : f32 to vector<1x16x16x8xf32>
    %37 = arith.maximumf %35, %36 : vector<1x16x16x8xf32>
    %38 = arith.truncf %37 : vector<1x16x16x8xf32> to vector<1x16x16x8xbf16>
    %39 = vector.shape_cast %38 : vector<1x16x16x8xbf16> to vector<256x8xbf16>
    %40 = vector.extract_strided_slice %8 {offsets = [0, 1, 2, 0], sizes = [1, 16, 16, 8], strides = [1, 1, 1, 1]} : vector<1x18x18x8xf32> to vector<1x16x16x8xf32>
    %cst_35 = arith.constant 0.000000e+00 : f32
    %41 = vector.broadcast %cst_35 : f32 to vector<1x16x16x8xf32>
    %42 = arith.maximumf %40, %41 : vector<1x16x16x8xf32>
    %43 = arith.truncf %42 : vector<1x16x16x8xf32> to vector<1x16x16x8xbf16>
    %44 = vector.shape_cast %43 : vector<1x16x16x8xbf16> to vector<256x8xbf16>
    %45 = vector.extract_strided_slice %8 {offsets = [0, 2, 0, 0], sizes = [1, 16, 16, 8], strides = [1, 1, 1, 1]} : vector<1x18x18x8xf32> to vector<1x16x16x8xf32>
    %cst_36 = arith.constant 0.000000e+00 : f32
    %46 = vector.broadcast %cst_36 : f32 to vector<1x16x16x8xf32>
    %47 = arith.maximumf %45, %46 : vector<1x16x16x8xf32>
    %48 = arith.truncf %47 : vector<1x16x16x8xf32> to vector<1x16x16x8xbf16>
    %49 = vector.shape_cast %48 : vector<1x16x16x8xbf16> to vector<256x8xbf16>
    %50 = vector.extract_strided_slice %8 {offsets = [0, 2, 1, 0], sizes = [1, 16, 16, 8], strides = [1, 1, 1, 1]} : vector<1x18x18x8xf32> to vector<1x16x16x8xf32>
    %cst_37 = arith.constant 0.000000e+00 : f32
    %51 = vector.broadcast %cst_37 : f32 to vector<1x16x16x8xf32>
    %52 = arith.maximumf %50, %51 : vector<1x16x16x8xf32>
    %53 = arith.truncf %52 : vector<1x16x16x8xf32> to vector<1x16x16x8xbf16>
    %54 = vector.shape_cast %53 : vector<1x16x16x8xbf16> to vector<256x8xbf16>
    %55 = vector.extract_strided_slice %8 {offsets = [0, 2, 2, 0], sizes = [1, 16, 16, 8], strides = [1, 1, 1, 1]} : vector<1x18x18x8xf32> to vector<1x16x16x8xf32>
    %cst_38 = arith.constant 0.000000e+00 : f32
    %56 = vector.broadcast %cst_38 : f32 to vector<1x16x16x8xf32>
    %57 = arith.maximumf %55, %56 : vector<1x16x16x8xf32>
    %58 = arith.truncf %57 : vector<1x16x16x8xf32> to vector<1x16x16x8xbf16>
    %59 = vector.shape_cast %58 : vector<1x16x16x8xbf16> to vector<256x8xbf16>
    %60 = tpu.concatenate %19, %24, %29, %34, %39, %44, %49, %54, %59 in 1 : vector<256x8xbf16>, vector<256x8xbf16>, vector<256x8xbf16>, vector<256x8xbf16>, vector<256x8xbf16>, vector<256x8xbf16>, vector<256x8xbf16>, vector<256x8xbf16>, vector<256x8xbf16> -> vector<256x72xbf16>
    %c0_39 = arith.constant 0 : index
    %c0_40 = arith.constant 0 : index
    %61 = vector.load %arg2[%c0_39, %c0_40] : memref<72x8xbf16, #tpu.memory_space<vmem>>, vector<72x8xbf16>
    %cst_41 = arith.constant dense<0.000000e+00> : vector<256x8xf32>
    %62 = tpu.matmul %60, %61, %cst_41 {dimension_numbers = #tpu.dot_dimension_numbers<[1], [0], [0], [1], [0, 0, 1, 1], [], []>} : vector<256x72xbf16>, vector<72x8xbf16>, vector<256x8xf32> -> vector<256x8xf32>
    %cst_42 = arith.constant dense<0.000000e+00> : vector<8xf32>
    %63 = vector.multi_reduction <add>, %62, %cst_42 [0] : vector<256x8xf32> to vector<8xf32>
    %64 = vector.shape_cast %63 : vector<8xf32> to vector<1x8xf32>
    %cst_43 = arith.constant dense<0.000000e+00> : vector<8xf32>
    %65 = vector.multi_reduction <add>, %14, %cst_43 [0] : vector<256x8xf32> to vector<8xf32>
    %66 = vector.shape_cast %65 : vector<8xf32> to vector<1x8xf32>
    %67 = tpu.concatenate %64, %66 in 1 : vector<1x8xf32>, vector<1x8xf32> -> vector<1x16xf32>
    %68 = arith.mulf %62, %62 : vector<256x8xf32>
    %cst_44 = arith.constant dense<0.000000e+00> : vector<8xf32>
    %69 = vector.multi_reduction <add>, %68, %cst_44 [0] : vector<256x8xf32> to vector<8xf32>
    %70 = vector.shape_cast %69 : vector<8xf32> to vector<1x8xf32>
    %71 = arith.mulf %14, %14 : vector<256x8xf32>
    %cst_45 = arith.constant dense<0.000000e+00> : vector<8xf32>
    %72 = vector.multi_reduction <add>, %71, %cst_45 [0] : vector<256x8xf32> to vector<8xf32>
    %73 = vector.shape_cast %72 : vector<8xf32> to vector<1x8xf32>
    %74 = tpu.concatenate %70, %73 in 1 : vector<1x8xf32>, vector<1x8xf32> -> vector<1x16xf32>
    %75 = tpu.concatenate %67, %74 in 0 : vector<1x16xf32>, vector<1x16xf32> -> vector<2x16xf32>
    %76 = vector.shape_cast %75 : vector<2x16xf32> to vector<1x2x16xf32>
    %c0_46 = arith.constant 0 : index
    %c0_47 = arith.constant 0 : index
    %c0_48 = arith.constant 0 : index
    %77 = vector.load %arg4[%c0_46, %c0_47, %c0_48] : memref<1x2x16xf32, #tpu.memory_space<vmem>>, vector<1x2x16xf32>
    tpu.vector_store %arg4[%c0_46, %c0_47, %c0_48], %76 {strides = array<i32>} : memref<1x2x16xf32, #tpu.memory_space<vmem>>, vector<1x2x16xf32>,
    return
  }
  func.func @transform_0(%arg0: i32) -> (i32, i32, i32, i32) {
    %c0_i32 = arith.constant 0 : i32
    %c0_i32_0 = arith.constant 0 : i32
    %c0_i32_1 = arith.constant 0 : i32
    %c0_i32_2 = arith.constant 0 : i32
    return %arg0, %c0_i32, %c0_i32_0, %c0_i32_1 : i32, i32, i32, i32
  }
  func.func @transform_1(%arg0: i32) -> (i32, i32) {
    %c0_i32 = arith.constant 0 : i32
    %c0_i32_0 = arith.constant 0 : i32
    %c0_i32_1 = arith.constant 0 : i32
    return %c0_i32, %c0_i32_0 : i32, i32
  }
  func.func @transform_2(%arg0: i32) -> (i32, i32) {
    %c0_i32 = arith.constant 0 : i32
    %c0_i32_0 = arith.constant 0 : i32
    %c0_i32_1 = arith.constant 0 : i32
    return %c0_i32, %c0_i32_0 : i32, i32
  }
  func.func @transform_3(%arg0: i32) -> (i32, i32, i32) {
    %c0_i32 = arith.constant 0 : i32
    %c0_i32_0 = arith.constant 0 : i32
    %c0_i32_1 = arith.constant 0 : i32
    return %arg0, %c0_i32, %c0_i32_0 : i32, i32, i32
  }
}

module attributes {stable_mosaic.version = 11 : i64} {
  func.func @_apply_kernel(%arg0: i32, %arg1: memref<1x16x16x8xf32, #tpu.memory_space<vmem>>, %arg2: memref<72x8xbf16, #tpu.memory_space<vmem>>, %arg3: memref<8x8xbf16, #tpu.memory_space<vmem>>, %arg4: memref<1x16x16x1xf32, #tpu.memory_space<vmem>>, %arg5: memref<1x18x18x1xf32, #tpu.memory_space<vmem>>, %arg6: memref<8x8xf32, #tpu.memory_space<vmem>>, %arg7: memref<1x16x16x8xf32, #tpu.memory_space<vmem>>, %arg8: memref<1x18x18x8xf32, #tpu.memory_space<vmem>>) attributes {dimension_semantics = [#tpu.dimension_semantics<parallel>], iteration_bounds = array<i64: 2>, scalar_prefetch = 0 : i64, scratch_operands = 1 : i64, tpu.core_type = #tpu.core_type<tc>, window_params = [{transform_indices = @transform_0, window_bounds = array<i64: 1, 16, 16, 8>}, {pipeline_mode = #tpu.pipeline_mode<synchronous>, transform_indices = @transform_1, window_bounds = array<i64: 72, 8>}, {pipeline_mode = #tpu.pipeline_mode<synchronous>, transform_indices = @transform_2, window_bounds = array<i64: 8, 8>}, {pipeline_mode = #tpu.pipeline_mode<synchronous>, transform_indices = @transform_3, window_bounds = array<i64: 1, 16, 16, 1>}, {pipeline_mode = #tpu.pipeline_mode<synchronous>, transform_indices = @transform_4, window_bounds = array<i64: 1, 18, 18, 1>}, {pipeline_mode = #tpu.pipeline_mode<synchronous>, transform_indices = @transform_5, window_bounds = array<i64: 8, 8>}, {transform_indices = @transform_6, window_bounds = array<i64: 1, 16, 16, 8>}]} {
    %c0 = arith.constant 0 : index
    %c0_0 = arith.constant 0 : index
    %c0_1 = arith.constant 0 : index
    %c0_2 = arith.constant 0 : index
    %0 = vector.load %arg1[%c0, %c0_0, %c0_1, %c0_2] : memref<1x16x16x8xf32, #tpu.memory_space<vmem>>, vector<1x16x16x8xf32>
    %cst = arith.constant 0.000000e+00 : f32
    %1 = vector.broadcast %cst : f32 to vector<1x1x18x8xf32>
    %c0_3 = arith.constant 0 : index
    %c0_4 = arith.constant 0 : index
    %c0_5 = arith.constant 0 : index
    %c0_6 = arith.constant 0 : index
    %2 = vector.load %arg8[%c0_3, %c0_4, %c0_5, %c0_6] : memref<1x18x18x8xf32, #tpu.memory_space<vmem>>, vector<1x1x18x8xf32>
    tpu.vector_store %arg8[%c0_3, %c0_4, %c0_5, %c0_6], %1 {strides = array<i32>} : memref<1x18x18x8xf32, #tpu.memory_space<vmem>>, vector<1x1x18x8xf32>,
    %c0_7 = arith.constant 0 : index
    %c17 = arith.constant 17 : index
    %c0_8 = arith.constant 0 : index
    %c0_9 = arith.constant 0 : index
    %3 = vector.load %arg8[%c0_7, %c17, %c0_8, %c0_9] : memref<1x18x18x8xf32, #tpu.memory_space<vmem>>, vector<1x1x18x8xf32>
    tpu.vector_store %arg8[%c0_7, %c17, %c0_8, %c0_9], %1 {strides = array<i32>} : memref<1x18x18x8xf32, #tpu.memory_space<vmem>>, vector<1x1x18x8xf32>,
    %cst_10 = arith.constant 0.000000e+00 : f32
    %4 = vector.broadcast %cst_10 : f32 to vector<1x16x1x8xf32>
    %c0_11 = arith.constant 0 : index
    %c1 = arith.constant 1 : index
    %c0_12 = arith.constant 0 : index
    %c0_13 = arith.constant 0 : index
    %5 = vector.load %arg8[%c0_11, %c1, %c0_12, %c0_13] : memref<1x18x18x8xf32, #tpu.memory_space<vmem>>, vector<1x16x1x8xf32>
    tpu.vector_store %arg8[%c0_11, %c1, %c0_12, %c0_13], %4 {strides = array<i32>} : memref<1x18x18x8xf32, #tpu.memory_space<vmem>>, vector<1x16x1x8xf32>,
    %c0_14 = arith.constant 0 : index
    %c1_15 = arith.constant 1 : index
    %c17_16 = arith.constant 17 : index
    %c0_17 = arith.constant 0 : index
    %6 = vector.load %arg8[%c0_14, %c1_15, %c17_16, %c0_17] : memref<1x18x18x8xf32, #tpu.memory_space<vmem>>, vector<1x16x1x8xf32>
    tpu.vector_store %arg8[%c0_14, %c1_15, %c17_16, %c0_17], %4 {strides = array<i32>} : memref<1x18x18x8xf32, #tpu.memory_space<vmem>>, vector<1x16x1x8xf32>,
    %c0_18 = arith.constant 0 : index
    %c1_19 = arith.constant 1 : index
    %c1_20 = arith.constant 1 : index
    %c0_21 = arith.constant 0 : index
    %7 = vector.load %arg8[%c0_18, %c1_19, %c1_20, %c0_21] : memref<1x18x18x8xf32, #tpu.memory_space<vmem>>, vector<1x16x16x8xf32>
    tpu.vector_store %arg8[%c0_18, %c1_19, %c1_20, %c0_21], %0 {strides = array<i32>} : memref<1x18x18x8xf32, #tpu.memory_space<vmem>>, vector<1x16x16x8xf32>,
    %c0_22 = arith.constant 0 : index
    %c0_23 = arith.constant 0 : index
    %c0_24 = arith.constant 0 : index
    %c0_25 = arith.constant 0 : index
    %8 = vector.load %arg8[%c0_22, %c0_23, %c0_24, %c0_25] : memref<1x18x18x8xf32, #tpu.memory_space<vmem>>, vector<1x18x18x8xf32>
    %c0_26 = arith.constant 0 : index
    %c0_27 = arith.constant 0 : index
    %9 = vector.load %arg6[%c0_26, %c0_27] : memref<8x8xf32, #tpu.memory_space<vmem>>, vector<1x8xf32>
    %c1_28 = arith.constant 1 : index
    %c0_29 = arith.constant 0 : index
    %10 = vector.load %arg6[%c1_28, %c0_29] : memref<8x8xf32, #tpu.memory_space<vmem>>, vector<1x8xf32>
    %c2 = arith.constant 2 : index
    %c0_30 = arith.constant 0 : index
    %11 = vector.load %arg6[%c2, %c0_30] : memref<8x8xf32, #tpu.memory_space<vmem>>, vector<1x8xf32>
    %c3 = arith.constant 3 : index
    %c0_31 = arith.constant 0 : index
    %12 = vector.load %arg6[%c3, %c0_31] : memref<8x8xf32, #tpu.memory_space<vmem>>, vector<1x8xf32>
    %c4 = arith.constant 4 : index
    %c0_32 = arith.constant 0 : index
    %13 = vector.load %arg6[%c4, %c0_32] : memref<8x8xf32, #tpu.memory_space<vmem>>, vector<1x8xf32>
    %14 = vector.shape_cast %9 : vector<1x8xf32> to vector<1x1x1x8xf32>
    %15 = vector.broadcast %14 : vector<1x1x1x8xf32> to vector<1x16x16x8xf32>
    %16 = arith.mulf %0, %15 : vector<1x16x16x8xf32>
    %17 = vector.extract_strided_slice %8 {offsets = [0, 0, 0, 0], sizes = [1, 16, 18, 8], strides = [1, 1, 1, 1]} : vector<1x18x18x8xf32> to vector<1x16x18x8xf32>
    %18 = vector.extract_strided_slice %8 {offsets = [0, 1, 0, 0], sizes = [1, 16, 18, 8], strides = [1, 1, 1, 1]} : vector<1x18x18x8xf32> to vector<1x16x18x8xf32>
    %19 = arith.addf %17, %18 : vector<1x16x18x8xf32>
    %20 = vector.extract_strided_slice %8 {offsets = [0, 2, 0, 0], sizes = [1, 16, 18, 8], strides = [1, 1, 1, 1]} : vector<1x18x18x8xf32> to vector<1x16x18x8xf32>
    %21 = arith.addf %19, %20 : vector<1x16x18x8xf32>
    %22 = vector.extract_strided_slice %21 {offsets = [0, 0, 0, 0], sizes = [1, 16, 16, 8], strides = [1, 1, 1, 1]} : vector<1x16x18x8xf32> to vector<1x16x16x8xf32>
    %23 = vector.extract_strided_slice %21 {offsets = [0, 0, 1, 0], sizes = [1, 16, 16, 8], strides = [1, 1, 1, 1]} : vector<1x16x18x8xf32> to vector<1x16x16x8xf32>
    %24 = arith.addf %22, %23 : vector<1x16x16x8xf32>
    %25 = vector.extract_strided_slice %21 {offsets = [0, 0, 2, 0], sizes = [1, 16, 16, 8], strides = [1, 1, 1, 1]} : vector<1x16x18x8xf32> to vector<1x16x16x8xf32>
    %26 = arith.addf %24, %25 : vector<1x16x16x8xf32>
    %c0_33 = arith.constant 0 : index
    %c0_34 = arith.constant 0 : index
    %c0_35 = arith.constant 0 : index
    %c0_36 = arith.constant 0 : index
    %27 = vector.load %arg4[%c0_33, %c0_34, %c0_35, %c0_36] : memref<1x16x16x1xf32, #tpu.memory_space<vmem>>, vector<1x16x16x1xf32>
    %28 = vector.broadcast %27 : vector<1x16x16x1xf32> to vector<1x16x16x8xf32>
    %29 = arith.mulf %26, %28 : vector<1x16x16x8xf32>
    %30 = arith.addf %16, %29 : vector<1x16x16x8xf32>
    %c0_37 = arith.constant 0 : index
    %c0_38 = arith.constant 0 : index
    %c0_39 = arith.constant 0 : index
    %c0_40 = arith.constant 0 : index
    %31 = vector.load %arg5[%c0_37, %c0_38, %c0_39, %c0_40] : memref<1x18x18x1xf32, #tpu.memory_space<vmem>>, vector<1x18x18x1xf32>
    %32 = vector.broadcast %31 : vector<1x18x18x1xf32> to vector<1x18x18x8xf32>
    %33 = arith.addf %8, %32 : vector<1x18x18x8xf32>
    %34 = vector.extract_strided_slice %33 {offsets = [0, 0, 0, 0], sizes = [1, 16, 18, 8], strides = [1, 1, 1, 1]} : vector<1x18x18x8xf32> to vector<1x16x18x8xf32>
    %35 = vector.extract_strided_slice %33 {offsets = [0, 1, 0, 0], sizes = [1, 16, 18, 8], strides = [1, 1, 1, 1]} : vector<1x18x18x8xf32> to vector<1x16x18x8xf32>
    %36 = arith.maximumf %34, %35 : vector<1x16x18x8xf32>
    %37 = vector.extract_strided_slice %33 {offsets = [0, 2, 0, 0], sizes = [1, 16, 18, 8], strides = [1, 1, 1, 1]} : vector<1x18x18x8xf32> to vector<1x16x18x8xf32>
    %38 = arith.maximumf %36, %37 : vector<1x16x18x8xf32>
    %39 = vector.extract_strided_slice %38 {offsets = [0, 0, 0, 0], sizes = [1, 16, 16, 8], strides = [1, 1, 1, 1]} : vector<1x16x18x8xf32> to vector<1x16x16x8xf32>
    %40 = vector.extract_strided_slice %38 {offsets = [0, 0, 1, 0], sizes = [1, 16, 16, 8], strides = [1, 1, 1, 1]} : vector<1x16x18x8xf32> to vector<1x16x16x8xf32>
    %41 = arith.maximumf %39, %40 : vector<1x16x16x8xf32>
    %42 = vector.extract_strided_slice %38 {offsets = [0, 0, 2, 0], sizes = [1, 16, 16, 8], strides = [1, 1, 1, 1]} : vector<1x16x18x8xf32> to vector<1x16x16x8xf32>
    %43 = arith.maximumf %41, %42 : vector<1x16x16x8xf32>
    %44 = vector.shape_cast %10 : vector<1x8xf32> to vector<1x1x1x8xf32>
    %45 = vector.broadcast %44 : vector<1x1x1x8xf32> to vector<1x16x16x8xf32>
    %46 = arith.mulf %43, %45 : vector<1x16x16x8xf32>
    %47 = arith.addf %30, %46 : vector<1x16x16x8xf32>
    %cst_41 = arith.constant 0.000000e+00 : f32
    %48 = vector.broadcast %cst_41 : f32 to vector<1x16x16x8xf32>
    %49 = arith.maximumf %0, %48 : vector<1x16x16x8xf32>
    %50 = arith.truncf %49 : vector<1x16x16x8xf32> to vector<1x16x16x8xbf16>
    %51 = vector.shape_cast %50 : vector<1x16x16x8xbf16> to vector<256x8xbf16>
    %c0_42 = arith.constant 0 : index
    %c0_43 = arith.constant 0 : index
    %52 = vector.load %arg3[%c0_42, %c0_43] : memref<8x8xbf16, #tpu.memory_space<vmem>>, vector<8x8xbf16>
    %cst_44 = arith.constant dense<0.000000e+00> : vector<256x8xf32>
    %53 = tpu.matmul %51, %52, %cst_44 {dimension_numbers = #tpu.dot_dimension_numbers<[1], [0], [0], [1], [0, 0, 1, 1], [], []>} : vector<256x8xbf16>, vector<8x8xbf16>, vector<256x8xf32> -> vector<256x8xf32>
    %54 = vector.extract_strided_slice %8 {offsets = [0, 0, 0, 0], sizes = [1, 16, 16, 8], strides = [1, 1, 1, 1]} : vector<1x18x18x8xf32> to vector<1x16x16x8xf32>
    %cst_45 = arith.constant 0.000000e+00 : f32
    %55 = vector.broadcast %cst_45 : f32 to vector<1x16x16x8xf32>
    %56 = arith.maximumf %54, %55 : vector<1x16x16x8xf32>
    %57 = arith.truncf %56 : vector<1x16x16x8xf32> to vector<1x16x16x8xbf16>
    %58 = vector.shape_cast %57 : vector<1x16x16x8xbf16> to vector<256x8xbf16>
    %59 = vector.extract_strided_slice %8 {offsets = [0, 0, 1, 0], sizes = [1, 16, 16, 8], strides = [1, 1, 1, 1]} : vector<1x18x18x8xf32> to vector<1x16x16x8xf32>
    %cst_46 = arith.constant 0.000000e+00 : f32
    %60 = vector.broadcast %cst_46 : f32 to vector<1x16x16x8xf32>
    %61 = arith.maximumf %59, %60 : vector<1x16x16x8xf32>
    %62 = arith.truncf %61 : vector<1x16x16x8xf32> to vector<1x16x16x8xbf16>
    %63 = vector.shape_cast %62 : vector<1x16x16x8xbf16> to vector<256x8xbf16>
    %64 = vector.extract_strided_slice %8 {offsets = [0, 0, 2, 0], sizes = [1, 16, 16, 8], strides = [1, 1, 1, 1]} : vector<1x18x18x8xf32> to vector<1x16x16x8xf32>
    %cst_47 = arith.constant 0.000000e+00 : f32
    %65 = vector.broadcast %cst_47 : f32 to vector<1x16x16x8xf32>
    %66 = arith.maximumf %64, %65 : vector<1x16x16x8xf32>
    %67 = arith.truncf %66 : vector<1x16x16x8xf32> to vector<1x16x16x8xbf16>
    %68 = vector.shape_cast %67 : vector<1x16x16x8xbf16> to vector<256x8xbf16>
    %69 = vector.extract_strided_slice %8 {offsets = [0, 1, 0, 0], sizes = [1, 16, 16, 8], strides = [1, 1, 1, 1]} : vector<1x18x18x8xf32> to vector<1x16x16x8xf32>
    %cst_48 = arith.constant 0.000000e+00 : f32
    %70 = vector.broadcast %cst_48 : f32 to vector<1x16x16x8xf32>
    %71 = arith.maximumf %69, %70 : vector<1x16x16x8xf32>
    %72 = arith.truncf %71 : vector<1x16x16x8xf32> to vector<1x16x16x8xbf16>
    %73 = vector.shape_cast %72 : vector<1x16x16x8xbf16> to vector<256x8xbf16>
    %74 = vector.extract_strided_slice %8 {offsets = [0, 1, 1, 0], sizes = [1, 16, 16, 8], strides = [1, 1, 1, 1]} : vector<1x18x18x8xf32> to vector<1x16x16x8xf32>
    %cst_49 = arith.constant 0.000000e+00 : f32
    %75 = vector.broadcast %cst_49 : f32 to vector<1x16x16x8xf32>
    %76 = arith.maximumf %74, %75 : vector<1x16x16x8xf32>
    %77 = arith.truncf %76 : vector<1x16x16x8xf32> to vector<1x16x16x8xbf16>
    %78 = vector.shape_cast %77 : vector<1x16x16x8xbf16> to vector<256x8xbf16>
    %79 = vector.extract_strided_slice %8 {offsets = [0, 1, 2, 0], sizes = [1, 16, 16, 8], strides = [1, 1, 1, 1]} : vector<1x18x18x8xf32> to vector<1x16x16x8xf32>
    %cst_50 = arith.constant 0.000000e+00 : f32
    %80 = vector.broadcast %cst_50 : f32 to vector<1x16x16x8xf32>
    %81 = arith.maximumf %79, %80 : vector<1x16x16x8xf32>
    %82 = arith.truncf %81 : vector<1x16x16x8xf32> to vector<1x16x16x8xbf16>
    %83 = vector.shape_cast %82 : vector<1x16x16x8xbf16> to vector<256x8xbf16>
    %84 = vector.extract_strided_slice %8 {offsets = [0, 2, 0, 0], sizes = [1, 16, 16, 8], strides = [1, 1, 1, 1]} : vector<1x18x18x8xf32> to vector<1x16x16x8xf32>
    %cst_51 = arith.constant 0.000000e+00 : f32
    %85 = vector.broadcast %cst_51 : f32 to vector<1x16x16x8xf32>
    %86 = arith.maximumf %84, %85 : vector<1x16x16x8xf32>
    %87 = arith.truncf %86 : vector<1x16x16x8xf32> to vector<1x16x16x8xbf16>
    %88 = vector.shape_cast %87 : vector<1x16x16x8xbf16> to vector<256x8xbf16>
    %89 = vector.extract_strided_slice %8 {offsets = [0, 2, 1, 0], sizes = [1, 16, 16, 8], strides = [1, 1, 1, 1]} : vector<1x18x18x8xf32> to vector<1x16x16x8xf32>
    %cst_52 = arith.constant 0.000000e+00 : f32
    %90 = vector.broadcast %cst_52 : f32 to vector<1x16x16x8xf32>
    %91 = arith.maximumf %89, %90 : vector<1x16x16x8xf32>
    %92 = arith.truncf %91 : vector<1x16x16x8xf32> to vector<1x16x16x8xbf16>
    %93 = vector.shape_cast %92 : vector<1x16x16x8xbf16> to vector<256x8xbf16>
    %94 = vector.extract_strided_slice %8 {offsets = [0, 2, 2, 0], sizes = [1, 16, 16, 8], strides = [1, 1, 1, 1]} : vector<1x18x18x8xf32> to vector<1x16x16x8xf32>
    %cst_53 = arith.constant 0.000000e+00 : f32
    %95 = vector.broadcast %cst_53 : f32 to vector<1x16x16x8xf32>
    %96 = arith.maximumf %94, %95 : vector<1x16x16x8xf32>
    %97 = arith.truncf %96 : vector<1x16x16x8xf32> to vector<1x16x16x8xbf16>
    %98 = vector.shape_cast %97 : vector<1x16x16x8xbf16> to vector<256x8xbf16>
    %99 = tpu.concatenate %58, %63, %68, %73, %78, %83, %88, %93, %98 in 1 : vector<256x8xbf16>, vector<256x8xbf16>, vector<256x8xbf16>, vector<256x8xbf16>, vector<256x8xbf16>, vector<256x8xbf16>, vector<256x8xbf16>, vector<256x8xbf16>, vector<256x8xbf16> -> vector<256x72xbf16>
    %c0_54 = arith.constant 0 : index
    %c0_55 = arith.constant 0 : index
    %100 = vector.load %arg2[%c0_54, %c0_55] : memref<72x8xbf16, #tpu.memory_space<vmem>>, vector<72x8xbf16>
    %cst_56 = arith.constant dense<0.000000e+00> : vector<256x8xf32>
    %101 = tpu.matmul %99, %100, %cst_56 {dimension_numbers = #tpu.dot_dimension_numbers<[1], [0], [0], [1], [0, 0, 1, 1], [], []>} : vector<256x72xbf16>, vector<72x8xbf16>, vector<256x8xf32> -> vector<256x8xf32>
    %102 = vector.broadcast %11 : vector<1x8xf32> to vector<256x8xf32>
    %103 = arith.mulf %101, %102 : vector<256x8xf32>
    %104 = vector.broadcast %12 : vector<1x8xf32> to vector<256x8xf32>
    %105 = arith.mulf %53, %104 : vector<256x8xf32>
    %106 = arith.addf %103, %105 : vector<256x8xf32>
    %107 = vector.broadcast %13 : vector<1x8xf32> to vector<256x8xf32>
    %108 = arith.addf %106, %107 : vector<256x8xf32>
    %109 = vector.shape_cast %108 : vector<256x8xf32> to vector<1x16x16x8xf32>
    %110 = arith.addf %47, %109 : vector<1x16x16x8xf32>
    %c0_57 = arith.constant 0 : index
    %c0_58 = arith.constant 0 : index
    %c0_59 = arith.constant 0 : index
    %c0_60 = arith.constant 0 : index
    %111 = vector.load %arg7[%c0_57, %c0_58, %c0_59, %c0_60] : memref<1x16x16x8xf32, #tpu.memory_space<vmem>>, vector<1x16x16x8xf32>
    tpu.vector_store %arg7[%c0_57, %c0_58, %c0_59, %c0_60], %110 {strides = array<i32>} : memref<1x16x16x8xf32, #tpu.memory_space<vmem>>, vector<1x16x16x8xf32>,
    return
  }
  func.func @transform_0(%arg0: i32) -> (i32, i32, i32, i32) {
    %c0_i32 = arith.constant 0 : i32
    %c0_i32_0 = arith.constant 0 : i32
    %c0_i32_1 = arith.constant 0 : i32
    %c0_i32_2 = arith.constant 0 : i32
    return %arg0, %c0_i32, %c0_i32_0, %c0_i32_1 : i32, i32, i32, i32
  }
  func.func @transform_1(%arg0: i32) -> (i32, i32) {
    %c0_i32 = arith.constant 0 : i32
    %c0_i32_0 = arith.constant 0 : i32
    %c0_i32_1 = arith.constant 0 : i32
    return %c0_i32, %c0_i32_0 : i32, i32
  }
  func.func @transform_2(%arg0: i32) -> (i32, i32) {
    %c0_i32 = arith.constant 0 : i32
    %c0_i32_0 = arith.constant 0 : i32
    %c0_i32_1 = arith.constant 0 : i32
    return %c0_i32, %c0_i32_0 : i32, i32
  }
  func.func @transform_3(%arg0: i32) -> (i32, i32, i32, i32) {
    %c0_i32 = arith.constant 0 : i32
    %c0_i32_0 = arith.constant 0 : i32
    %c0_i32_1 = arith.constant 0 : i32
    %c0_i32_2 = arith.constant 0 : i32
    %c0_i32_3 = arith.constant 0 : i32
    return %c0_i32, %c0_i32_0, %c0_i32_1, %c0_i32_2 : i32, i32, i32, i32
  }
  func.func @transform_4(%arg0: i32) -> (i32, i32, i32, i32) {
    %c0_i32 = arith.constant 0 : i32
    %c0_i32_0 = arith.constant 0 : i32
    %c0_i32_1 = arith.constant 0 : i32
    %c0_i32_2 = arith.constant 0 : i32
    %c0_i32_3 = arith.constant 0 : i32
    return %c0_i32, %c0_i32_0, %c0_i32_1, %c0_i32_2 : i32, i32, i32, i32
  }
  func.func @transform_5(%arg0: i32) -> (i32, i32) {
    %c0_i32 = arith.constant 0 : i32
    %c0_i32_0 = arith.constant 0 : i32
    %c0_i32_1 = arith.constant 0 : i32
    return %c0_i32, %c0_i32_0 : i32, i32
  }
  func.func @transform_6(%arg0: i32) -> (i32, i32, i32, i32) {
    %c0_i32 = arith.constant 0 : i32
    %c0_i32_0 = arith.constant 0 : i32
    %c0_i32_1 = arith.constant 0 : i32
    %c0_i32_2 = arith.constant 0 : i32
    return %arg0, %c0_i32, %c0_i32_0, %c0_i32_1 : i32, i32, i32, i32
  }
}

</mosaic_0001>

<llo_original>
// kernel: _lambda_.2
$region0: #{_lambda_.2}
  #allocation0 [shape = 'u32[]', space=smem, size = 0x4, offset = 0x4, fixed_abs, tag = 'smem constant byte address 0x4 - core index']
  #allocation1 [shape = 'u32[72,128]{1,0:T(1,128)}', space=vmem, size = 0x9000, scoped, tag = 'internal scratch']
  #allocation2 [shape = 'f32[1,18,18,8]{3,2,1,0:T(8,128)}', space=vmem, size = 0x36000, scoped, tag = 'scratch operand']
  %s0 = inlined_call_operand.vmem [shape: f32[2,16,16,8], index: 0, kind: input, shape index: {}]
  %s1 = inlined_call_operand.vmem [shape: bf16[72,8], index: 1, kind: input, shape index: {}]
  %s2 = inlined_call_operand.vmem [shape: bf16[8,8], index: 2, kind: input, shape index: {}]
  %s3 = inlined_call_operand.vmem [shape: f32[2,2,16], index: 3, kind: output, shape index: {}]
  %s4 = sld [smem:[#allocation0]]
  $region45: #{_lambda_.2} parent=0
    _
  %s6 = ssub.s32 1, %s4
  %s7 = scalar_select 0, %s6, %s4
  loop: start=0, step=1, limit=4
  $region2: #{_lambda_.2} parent=0 // loop_pre_header
    _
  $region3: #{_lambda_.2} parent=0 // loop_header
    %s9 = sphi 0, %s13
    %p10 = scmp.ge.s32.totalorder %s9, 4
    %s19 = sphi 0, %s21
    %s22 = sphi 0, %s19
    %s23 = sphi 0, %s22
    %s39 = sphi 0, %s23
    %s43 = sphi 0, %s43
    %s45 = sphi 0, %s43
    %s46 = sphi 0, %s45
    %s60 = sphi 0, %s46
    %s64 = sphi 0, %s64
    %s66 = sphi 0, %s64
    %s67 = sphi 0, %s66
    %s81 = sphi 0, %s67
    %s87 = sphi 0, %s89
    %s90 = sphi 0, %s87
    %s91 = sphi 0, %s90
    %s107 = sphi 0, %s91
  $region4: #{_lambda_.2} parent=0 // loop_header_branch
    %12 = sbr.rel (%p10) target = $region8
  $region5: #{_lambda_.2} parent=0 // loop_body
    %s14 = ssub.s32 %s9, 1
    %s15 = ssub.s32 %s9, 2
    %s16 = sadd.s32 %s9, 1
    %s17 = ssub.s32 %s9, %s16
    %p18 = scmp.eq.s32.totalorder %s17, 0
    %s20 = sadd.s32 %s19, 1
    %s21 = scalar_select %p18, %s19, %s20
    %p24 = pneg %p18
    %p25 = scmp.eq.s32.totalorder %s9, 1
    %p26 = por %p24, %p25
    %p27 = scmp.ne.s32.totalorder %s19, %s22
    %p28 = scmp.eq.s32.totalorder %s9, 0
    %p29 = por %p27, %p28
    %p30 = scmp.ne.s32.totalorder %s19, %s22
    %p31 = scmp.eq.s32.totalorder %s14, 1
    %p32 = por %p30, %p31
    %p33 = scmp.ne.s32.totalorder %s22, %s23
    %p34 = scmp.eq.s32.totalorder %s14, 0
    %p35 = por %p33, %p34
    %p36 = scmp.ne.s32.totalorder %s22, %s23
    %p37 = scmp.eq.s32.totalorder %s15, 1
    %p38 = por %p36, %p37
    %p40 = scmp.ne.s32.totalorder %s23, %s39
    %p41 = scmp.eq.s32.totalorder %s15, 0
    %p42 = por %p40, %p41
    %s44 = sadd.s32 %s43, 1
    %p47 = scmp.eq.s32.totalorder %s9, 1
    %p48 = scmp.ne.s32.totalorder %s43, %s45
    %p49 = scmp.eq.s32.totalorder %s9, 0
    %p50 = por %p48, %p49
    %p51 = scmp.ne.s32.totalorder %s43, %s45
    %p52 = scmp.eq.s32.totalorder %s14, 1
    %p53 = por %p51, %p52
    %p54 = scmp.ne.s32.totalorder %s45, %s46
    %p55 = scmp.eq.s32.totalorder %s14, 0
    %p56 = por %p54, %p55
    %p57 = scmp.ne.s32.totalorder %s45, %s46
    %p58 = scmp.eq.s32.totalorder %s15, 1
    %p59 = por %p57, %p58
    %p61 = scmp.ne.s32.totalorder %s46, %s60
    %p62 = scmp.eq.s32.totalorder %s15, 0
    %p63 = por %p61, %p62
    %s65 = sadd.s32 %s64, 1
    %p68 = scmp.eq.s32.totalorder %s9, 1
    %p69 = scmp.ne.s32.totalorder %s64, %s66
    %p70 = scmp.eq.s32.totalorder %s9, 0
    %p71 = por %p69, %p70
    %p72 = scmp.ne.s32.totalorder %s64, %s66
    %p73 = scmp.eq.s32.totalorder %s14, 1
    %p74 = por %p72, %p73
    %p75 = scmp.ne.s32.totalorder %s66, %s67
    %p76 = scmp.eq.s32.totalorder %s14, 0
    %p77 = por %p75, %p76
    %p78 = scmp.ne.s32.totalorder %s66, %s67
    %p79 = scmp.eq.s32.totalorder %s15, 1
    %p80 = por %p78, %p79
    %p82 = scmp.ne.s32.totalorder %s67, %s81
    %p83 = scmp.eq.s32.totalorder %s15, 0
    %p84 = por %p82, %p83
    %s85 = ssub.s32 %s9, %s16
    %p86 = scmp.eq.s32.totalorder %s85, 0
    %s88 = sadd.s32 %s87, 1
    %s89 = scalar_select %p86, %s87, %s88
    %p92 = pneg %p86
    %p93 = scmp.eq.s32.totalorder %s9, 1
    %p94 = por %p92, %p93
    %p95 = scmp.ne.s32.totalorder %s87, %s90
    %p96 = scmp.eq.s32.totalorder %s9, 0
    %p97 = por %p95, %p96
    %p98 = scmp.ne.s32.totalorder %s87, %s90
    %p99 = scmp.eq.s32.totalorder %s14, 1
    %p100 = por %p98, %p99
    %p101 = scmp.ne.s32.totalorder %s90, %s91
    %p102 = scmp.eq.s32.totalorder %s14, 0
    %p103 = por %p101, %p102
    %p104 = scmp.ne.s32.totalorder %s90, %s91
    %p105 = scmp.eq.s32.totalorder %s15, 1
    %p106 = por %p104, %p105
    %p108 = scmp.ne.s32.totalorder %s91, %s107
    %p109 = scmp.eq.s32.totalorder %s15, 0
    %p110 = por %p108, %p109
    %p111 = scmp.le.s32.totalorder 1, %s9
    %p112 = scmp.lt.s32.totalorder %s9, 3
    %p113 = pnand %p111, %p112
    %p114 = pneg %p113
    // Predicated region
    $region9: #{_lambda_.2} parent=5 // pred_check
      _
    $region10: #{_lambda_.2} parent=5 // pred_check_branch
      %116 = sbr.rel (%p113) target = $region12
    $region11: #{_lambda_.2} parent=5 // pred_region
      %s117 = ssub.s32 %s9, 1
      // Predicated region
      $region13: #{_lambda_.2} parent=11 // pred_check
        %p118 = pneg %p56
      $region14: #{_lambda_.2} parent=11 // pred_check_branch
        %120 = sbr.rel (%p118) target = $region16
      $region15: #{_lambda_.2} parent=11 // pred_region
        _
      $region16: #{_lambda_.2} parent=11 // pred_fallthru
        _
      // Predicated region
      $region17: #{_lambda_.2} parent=11 // pred_check
        %p121 = pneg %p77
      $region18: #{_lambda_.2} parent=11 // pred_check_branch
        %123 = sbr.rel (%p121) target = $region20
      $region19: #{_lambda_.2} parent=11 // pred_region
        _
      $region20: #{_lambda_.2} parent=11 // pred_fallthru
        _
    $region12: #{_lambda_.2} parent=5 // pred_fallthru
      _
    %p124 = scmp.lt.s32.totalorder %s9, 2
    // Predicated region
    $region21: #{_lambda_.2} parent=5 // pred_check
      %p125 = pneg %p124
    $region22: #{_lambda_.2} parent=5 // pred_check_branch
      %127 = sbr.rel (%p125) target = $region24
    $region23: #{_lambda_.2} parent=5 // pred_region
      // Predicated region
      $region25: #{_lambda_.2} parent=23 // pred_check
        %p128 = pneg %p29
      $region26: #{_lambda_.2} parent=23 // pred_check_branch
        %130 = sbr.rel (%p128) target = $region28
      $region27: #{_lambda_.2} parent=23 // pred_region
        %p131 = scmp.lt.s32.totalorder %s9, 1
        %s132 = scalar_select %p131, %s9, 1
        %s133 = smul.addr %s132, 32
        %s134 = smul.addr %s133, 8
        %s135 = scalar_lea.vmem %s0, %s134
      $region28: #{_lambda_.2} parent=23 // pred_fallthru
        _
    $region24: #{_lambda_.2} parent=5 // pred_fallthru
      _
    %p136 = scmp.le.s32.totalorder 1, %s9
    %p137 = scmp.lt.s32.totalorder %s9, 3
    %p138 = pnand %p136, %p137
    %p139 = pneg %p138
    // Predicated region
    $region29: #{_lambda_.2} parent=5 // pred_check
      _
    $region30: #{_lambda_.2} parent=5 // pred_check_branch
      %141 = sbr.rel (%p138) target = $region32
    $region31: #{_lambda_.2} parent=5 // pred_region
      %s142 = ssub.s32 %s9, 1
      %p143 = scmp.lt.s32.totalorder %s14, 1
      %s144 = scalar_select %p143, %s14, 1
      %s145 = smul.addr %s144, 32
      %s146 = smul.addr %s145, 8
      %s147 = scalar_lea.vmem %s0, %s146
      %p148 = pneg %p35
      %p149 = pneg %p32
      %p150 = pneg %p56
      %p151 = pneg %p53
      %p152 = pneg %p77
      %p153 = pneg %p74
      %p154 = pneg %p103
      %p155 = pneg %p100
      %p156 = scmp.lt.s32.totalorder %s14, 1
      %s157 = scalar_select %p156, %s14, 1
      %s158 = smul.addr %s157, 2
      %s159 = scalar_lea.vmem %s3, %s158
      %p160 = scmp.lt.s32.totalorder %s14, 1
      %s161 = scalar_select %p160, %s14, 1
      %s162 = smul.addr %s161, 32
      %s163 = smul.addr %s162, 8
      %s164 = scalar_lea.vmem %s0, %s163
      %p165 = scmp.lt.s32.totalorder %s14, 1
      %s166 = scalar_select %p165, %s14, 1
      %s167 = smul.addr %s166, 2
      %s168 = scalar_lea.vmem %s3, %s167
      %v170 = vld [vmem:[%s164] sm:$0xff]
      %v171 = vld [vmem:[%s164 + $0x8] sm:$0xff]
      %v172 = vld [vmem:[%s164 + $0x10] sm:$0xff]
      %v173 = vld [vmem:[%s164 + $0x18] sm:$0xff]
      %v174 = vld [vmem:[%s164 + $0x20] sm:$0xff]
      %v175 = vld [vmem:[%s164 + $0x28] sm:$0xff]
      %v176 = vld [vmem:[%s164 + $0x30] sm:$0xff]
      %v177 = vld [vmem:[%s164 + $0x38] sm:$0xff]
      %v178 = vld [vmem:[%s164 + $0x40] sm:$0xff]
      %v179 = vld [vmem:[%s164 + $0x48] sm:$0xff]
      %v180 = vld [vmem:[%s164 + $0x50] sm:$0xff]
      %v181 = vld [vmem:[%s164 + $0x58] sm:$0xff]
      %v182 = vld [vmem:[%s164 + $0x60] sm:$0xff]
      %v183 = vld [vmem:[%s164 + $0x68] sm:$0xff]
      %v184 = vld [vmem:[%s164 + $0x70] sm:$0xff]
      %v185 = vld [vmem:[%s164 + $0x78] sm:$0xff]
      %v186 = vld [vmem:[%s164 + $0x80] sm:$0xff]
      %v187 = vld [vmem:[%s164 + $0x88] sm:$0xff]
      %v188 = vld [vmem:[%s164 + $0x90] sm:$0xff]
      %v189 = vld [vmem:[%s164 + $0x98] sm:$0xff]
      %v190 = vld [vmem:[%s164 + $0xa0] sm:$0xff]
      %v191 = vld [vmem:[%s164 + $0xa8] sm:$0xff]
      %v192 = vld [vmem:[%s164 + $0xb0] sm:$0xff]
      %v193 = vld [vmem:[%s164 + $0xb8] sm:$0xff]
      %v194 = vld [vmem:[%s164 + $0xc0] sm:$0xff]
      %v195 = vld [vmem:[%s164 + $0xc8] sm:$0xff]
      %v196 = vld [vmem:[%s164 + $0xd0] sm:$0xff]
      %v197 = vld [vmem:[%s164 + $0xd8] sm:$0xff]
      %v198 = vld [vmem:[%s164 + $0xe0] sm:$0xff]
      %v199 = vld [vmem:[%s164 + $0xe8] sm:$0xff]
      %v200 = vld [vmem:[%s164 + $0xf0] sm:$0xff]
      %v201 = vld [vmem:[%s164 + $0xf8] sm:$0xff]
      %vm202 = vcmask 64512
      %203 = vst.msk [vmem:[#allocation2] sm:$0xff] %vm202, 0.0
      %204 = vst.msk [vmem:[#allocation2 + $0x8] sm:$0xff] %vm202, 0.0
      %vm205 = vcmask 58368
      %206 = vst.msk [vmem:[#allocation2 + $0x10] sm:$0x3] %vm205, 0.0
      %s207 = scalar_lea.vmem [#allocation2], 408
      %208 = vst.msk [vmem:[%s207] sm:$0xff] %vm202, 0.0
      %209 = vst.msk [vmem:[%s207 + $0x8] sm:$0xff] %vm202, 0.0
      %210 = vst.msk [vmem:[%s207 + $0x10] sm:$0x3] %vm205, 0.0
      %s211 = scalar_lea.vmem [#allocation2], 24
      %vm212 = vcmask 57344
      %213 = vst.msk [vmem:[%s211] sm:$0x1] %vm212, 0.0
      %214 = vst.msk [vmem:[%s211 + $0x18] sm:$0x1] %vm212, 0.0
      %215 = vst.msk [vmem:[%s211 + $0x30] sm:$0x1] %vm212, 0.0
      %216 = vst.msk [vmem:[%s211 + $0x48] sm:$0x1] %vm212, 0.0
      %217 = vst.msk [vmem:[%s211 + $0x60] sm:$0x1] %vm212, 0.0
      %218 = vst.msk [vmem:[%s211 + $0x78] sm:$0x1] %vm212, 0.0
      %219 = vst.msk [vmem:[%s211 + $0x90] sm:$0x1] %vm212, 0.0
      %220 = vst.msk [vmem:[%s211 + $0xa8] sm:$0x1] %vm212, 0.0
      %221 = vst.msk [vmem:[%s211 + $0xc0] sm:$0x1] %vm212, 0.0
      %222 = vst.msk [vmem:[%s211 + $0xd8] sm:$0x1] %vm212, 0.0
      %223 = vst.msk [vmem:[%s211 + $0xf0] sm:$0x1] %vm212, 0.0
      %224 = vst.msk [vmem:[%s211 + $0x108] sm:$0x1] %vm212, 0.0
      %225 = vst.msk [vmem:[%s211 + $0x120] sm:$0x1] %vm212, 0.0
      %226 = vst.msk [vmem:[%s211 + $0x138] sm:$0x1] %vm212, 0.0
      %227 = vst.msk [vmem:[%s211 + $0x150] sm:$0x1] %vm212, 0.0
      %228 = vst.msk [vmem:[%s211 + $0x168] sm:$0x1] %vm212, 0.0
      %229 = vst.msk [vmem:[%s211 + $0x11] sm:$0x1] %vm212, 0.0
      %230 = vst.msk [vmem:[%s211 + $0x29] sm:$0x1] %vm212, 0.0
      %231 = vst.msk [vmem:[%s211 + $0x41] sm:$0x1] %vm212, 0.0
      %232 = vst.msk [vmem:[%s211 + $0x59] sm:$0x1] %vm212, 0.0
      %233 = vst.msk [vmem:[%s211 + $0x71] sm:$0x1] %vm212, 0.0
      %234 = vst.msk [vmem:[%s211 + $0x89] sm:$0x1] %vm212, 0.0
      %235 = vst.msk [vmem:[%s211 + $0xa1] sm:$0x1] %vm212, 0.0
      %236 = vst.msk [vmem:[%s211 + $0xb9] sm:$0x1] %vm212, 0.0
      %237 = vst.msk [vmem:[%s211 + $0xd1] sm:$0x1] %vm212, 0.0
      %238 = vst.msk [vmem:[%s211 + $0xe9] sm:$0x1] %vm212, 0.0
      %239 = vst.msk [vmem:[%s211 + $0x101] sm:$0x1] %vm212, 0.0
      %240 = vst.msk [vmem:[%s211 + $0x119] sm:$0x1] %vm212, 0.0
      %241 = vst.msk [vmem:[%s211 + $0x131] sm:$0x1] %vm212, 0.0
      %242 = vst.msk [vmem:[%s211 + $0x149] sm:$0x1] %vm212, 0.0
      %243 = vst.msk [vmem:[%s211 + $0x161] sm:$0x1] %vm212, 0.0
      %244 = vst.msk [vmem:[%s211 + $0x179] sm:$0x1] %vm212, 0.0
      %245 = vst.msk [vmem:[%s211 + $0x1] sm:$0xff] %vm202, %v170
      %246 = vst.msk [vmem:[%s211 + $0x9] sm:$0xff] %vm202, %v171
      %247 = vst.msk [vmem:[%s211 + $0x19] sm:$0xff] %vm202, %v172
      %248 = vst.msk [vmem:[%s211 + $0x21] sm:$0xff] %vm202, %v173
      %249 = vst.msk [vmem:[%s211 + $0x31] sm:$0xff] %vm202, %v174
      %250 = vst.msk [vmem:[%s211 + $0x39] sm:$0xff] %vm202, %v175
      %251 = vst.msk [vmem:[%s211 + $0x49] sm:$0xff] %vm202, %v176
      %252 = vst.msk [vmem:[%s211 + $0x51] sm:$0xff] %vm202, %v177
      %253 = vst.msk [vmem:[%s211 + $0x61] sm:$0xff] %vm202, %v178
      %254 = vst.msk [vmem:[%s211 + $0x69] sm:$0xff] %vm202, %v179
      %255 = vst.msk [vmem:[%s211 + $0x79] sm:$0xff] %vm202, %v180
      %256 = vst.msk [vmem:[%s211 + $0x81] sm:$0xff] %vm202, %v181
      %257 = vst.msk [vmem:[%s211 + $0x91] sm:$0xff] %vm202, %v182
      %258 = vst.msk [vmem:[%s211 + $0x99] sm:$0xff] %vm202, %v183
      %259 = vst.msk [vmem:[%s211 + $0xa9] sm:$0xff] %vm202, %v184
      %260 = vst.msk [vmem:[%s211 + $0xb1] sm:$0xff] %vm202, %v185
      %261 = vst.msk [vmem:[%s211 + $0xc1] sm:$0xff] %vm202, %v186
      %262 = vst.msk [vmem:[%s211 + $0xc9] sm:$0xff] %vm202, %v187
      %263 = vst.msk [vmem:[%s211 + $0xd9] sm:$0xff] %vm202, %v188
      %264 = vst.msk [vmem:[%s211 + $0xe1] sm:$0xff] %vm202, %v189
      %265 = vst.msk [vmem:[%s211 + $0xf1] sm:$0xff] %vm202, %v190
      %266 = vst.msk [vmem:[%s211 + $0xf9] sm:$0xff] %vm202, %v191
      %267 = vst.msk [vmem:[%s211 + $0x109] sm:$0xff] %vm202, %v192
      %268 = vst.msk [vmem:[%s211 + $0x111] sm:$0xff] %vm202, %v193
      %269 = vst.msk [vmem:[%s211 + $0x121] sm:$0xff] %vm202, %v194
      %270 = vst.msk [vmem:[%s211 + $0x129] sm:$0xff] %vm202, %v195
      %271 = vst.msk [vmem:[%s211 + $0x139] sm:$0xff] %vm202, %v196
      %272 = vst.msk [vmem:[%s211 + $0x141] sm:$0xff] %vm202, %v197
      %273 = vst.msk [vmem:[%s211 + $0x151] sm:$0xff] %vm202, %v198
      %274 = vst.msk [vmem:[%s211 + $0x159] sm:$0xff] %vm202, %v199
      %275 = vst.msk [vmem:[%s211 + $0x169] sm:$0xff] %vm202, %v200
      %276 = vst.msk [vmem:[%s211 + $0x171] sm:$0xff] %vm202, %v201
      %v277 = vld [vmem:[#allocation2] sm:$0xff]
      %v278 = vld [vmem:[#allocation2 + $0x8] sm:$0xff]
      %v279 = vld [vmem:[#allocation2 + $0x10] sm:$0x3]
      %v280 = vld [vmem:[#allocation2 + $0x18] sm:$0xff]
      %v281 = vld [vmem:[#allocation2 + $0x20] sm:$0xff]
      %v282 = vld [vmem:[#allocation2 + $0x28] sm:$0x3]
      %v283 = vld [vmem:[#allocation2 + $0x30] sm:$0xff]
      %v284 = vld [vmem:[#allocation2 + $0x38] sm:$0xff]
      %v285 = vld [vmem:[#allocation2 + $0x40] sm:$0x3]
      %v286 = vld [vmem:[#allocation2 + $0x48] sm:$0xff]
      %v287 = vld [vmem:[#allocation2 + $0x50] sm:$0xff]
      %v288 = vld [vmem:[#allocation2 + $0x58] sm:$0x3]
      %v289 = vld [vmem:[#allocation2 + $0x60] sm:$0xff]
      %v290 = vld [vmem:[#allocation2 + $0x68] sm:$0xff]
      %v291 = vld [vmem:[#allocation2 + $0x70] sm:$0x3]
      %v292 = vld [vmem:[#allocation2 + $0x78] sm:$0xff]
      %v293 = vld [vmem:[#allocation2 + $0x80] sm:$0xff]
      %v294 = vld [vmem:[#allocation2 + $0x88] sm:$0x3]
      %v295 = vld [vmem:[#allocation2 + $0x90] sm:$0xff]
      %v296 = vld [vmem:[#allocation2 + $0x98] sm:$0xff]
      %v297 = vld [vmem:[#allocation2 + $0xa0] sm:$0x3]
      %v298 = vld [vmem:[#allocation2 + $0xa8] sm:$0xff]
      %v299 = vld [vmem:[#allocation2 + $0xb0] sm:$0xff]
      %v300 = vld [vmem:[#allocation2 + $0xb8] sm:$0x3]
      %v301 = vld [vmem:[#allocation2 + $0xc0] sm:$0xff]
      %v302 = vld [vmem:[#allocation2 + $0xc8] sm:$0xff]
      %v303 = vld [vmem:[#allocation2 + $0xd0] sm:$0x3]
      %v304 = vld [vmem:[#allocation2 + $0xd8] sm:$0xff]
      %v305 = vld [vmem:[#allocation2 + $0xe0] sm:$0xff]
      %v306 = vld [vmem:[#allocation2 + $0xe8] sm:$0x3]
      %v307 = vld [vmem:[#allocation2 + $0xf0] sm:$0xff]
      %v308 = vld [vmem:[#allocation2 + $0xf8] sm:$0xff]
      %v309 = vld [vmem:[#allocation2 + $0x100] sm:$0x3]
      %v310 = vld [vmem:[#allocation2 + $0x108] sm:$0xff]
      %v311 = vld [vmem:[#allocation2 + $0x110] sm:$0xff]
      %v312 = vld [vmem:[#allocation2 + $0x118] sm:$0x3]
      %v313 = vld [vmem:[#allocation2 + $0x120] sm:$0xff]
      %v314 = vld [vmem:[#allocation2 + $0x128] sm:$0xff]
      %v315 = vld [vmem:[#allocation2 + $0x130] sm:$0x3]
      %v316 = vld [vmem:[#allocation2 + $0x138] sm:$0xff]
      %v317 = vld [vmem:[#allocation2 + $0x140] sm:$0xff]
      %v318 = vld [vmem:[#allocation2 + $0x148] sm:$0x3]
      %v319 = vld [vmem:[#allocation2 + $0x150] sm:$0xff]
      %v320 = vld [vmem:[#allocation2 + $0x158] sm:$0xff]
      %v321 = vld [vmem:[#allocation2 + $0x160] sm:$0x3]
      %v322 = vld [vmem:[#allocation2 + $0x168] sm:$0xff]
      %v323 = vld [vmem:[#allocation2 + $0x170] sm:$0xff]
      %v324 = vld [vmem:[#allocation2 + $0x178] sm:$0x3]
      %v325 = vld [vmem:[#allocation2 + $0x180] sm:$0xff]
      %v326 = vld [vmem:[#allocation2 + $0x188] sm:$0xff]
      %v327 = vld [vmem:[#allocation2 + $0x190] sm:$0x3]
      %v328 = vld [vmem:[#allocation2 + $0x198] sm:$0xff]
      %v329 = vld [vmem:[#allocation2 + $0x1a0] sm:$0xff]
      %v330 = vld [vmem:[#allocation2 + $0x1a8] sm:$0x3]
      %v331 = vmax.f32 %v170, 0.0
      %v332 = vmax.f32 %v171, 0.0
      %v333 = vmax.f32 %v172, 0.0
      %v334 = vmax.f32 %v173, 0.0
      %v335 = vmax.f32 %v174, 0.0
      %v336 = vmax.f32 %v175, 0.0
      %v337 = vmax.f32 %v176, 0.0
      %v338 = vmax.f32 %v177, 0.0
      %v339 = vmax.f32 %v178, 0.0
      %v340 = vmax.f32 %v179, 0.0
      %v341 = vmax.f32 %v180, 0.0
      %v342 = vmax.f32 %v181, 0.0
      %v343 = vmax.f32 %v182, 0.0
      %v344 = vmax.f32 %v183, 0.0
      %v345 = vmax.f32 %v184, 0.0
      %v346 = vmax.f32 %v185, 0.0
      %v347 = vmax.f32 %v186, 0.0
      %v348 = vmax.f32 %v187, 0.0
      %v349 = vmax.f32 %v188, 0.0
      %v350 = vmax.f32 %v189, 0.0
      %v351 = vmax.f32 %v190, 0.0
      %v352 = vmax.f32 %v191, 0.0
      %v353 = vmax.f32 %v192, 0.0
      %v354 = vmax.f32 %v193, 0.0
      %v355 = vmax.f32 %v194, 0.0
      %v356 = vmax.f32 %v195, 0.0
      %v357 = vmax.f32 %v196, 0.0
      %v358 = vmax.f32 %v197, 0.0
      %v359 = vmax.f32 %v198, 0.0
      %v360 = vmax.f32 %v199, 0.0
      %v361 = vmax.f32 %v200, 0.0
      %v362 = vmax.f32 %v201, 0.0
      %v363 = vpack.c.bf16 %v331, %v331
      %v364 = vpack.c.bf16 %v332, %v332
      %v365 = vpack.c.bf16 %v333, %v333
      %v366 = vpack.c.bf16 %v334, %v334
      %v367 = vpack.c.bf16 %v335, %v335
      %v368 = vpack.c.bf16 %v336, %v336
      %v369 = vpack.c.bf16 %v337, %v337
      %v370 = vpack.c.bf16 %v338, %v338
      %v371 = vpack.c.bf16 %v339, %v339
      %v372 = vpack.c.bf16 %v340, %v340
      %v373 = vpack.c.bf16 %v341, %v341
      %v374 = vpack.c.bf16 %v342, %v342
      %v375 = vpack.c.bf16 %v343, %v343
      %v376 = vpack.c.bf16 %v344, %v344
      %v377 = vpack.c.bf16 %v345, %v345
      %v378 = vpack.c.bf16 %v346, %v346
      %v379 = vpack.c.bf16 %v347, %v347
      %v380 = vpack.c.bf16 %v348, %v348
      %v381 = vpack.c.bf16 %v349, %v349
      %v382 = vpack.c.bf16 %v350, %v350
      %v383 = vpack.c.bf16 %v351, %v351
      %v384 = vpack.c.bf16 %v352, %v352
      %v385 = vpack.c.bf16 %v353, %v353
      %v386 = vpack.c.bf16 %v354, %v354
      %v387 = vpack.c.bf16 %v355, %v355
      %v388 = vpack.c.bf16 %v356, %v356
      %v389 = vpack.c.bf16 %v357, %v357
      %v390 = vpack.c.bf16 %v358, %v358
      %v391 = vpack.c.bf16 %v359, %v359
      %v392 = vpack.c.bf16 %v360, %v360
      %v393 = vpack.c.bf16 %v361, %v361
      %v394 = vpack.c.bf16 %v362, %v362
      %v395 = vld [vmem:[%s2] sm:$0xf]
      %v428 = vunpack.c.l.b16 %v363
      %v429 = vunpack.c.l.b16 %v364
      %v430 = vunpack.c.l.b16 %v365
      %v431 = vunpack.c.l.b16 %v366
      %v432 = vunpack.c.l.b16 %v367
      %v433 = vunpack.c.l.b16 %v368
      %v434 = vunpack.c.l.b16 %v369
      %v435 = vunpack.c.l.b16 %v370
      %v436 = vunpack.c.l.b16 %v371
      %v437 = vunpack.c.l.b16 %v372
      %v438 = vunpack.c.l.b16 %v373
      %v439 = vunpack.c.l.b16 %v374
      %v440 = vunpack.c.l.b16 %v375
      %v441 = vunpack.c.l.b16 %v376
      %v442 = vunpack.c.l.b16 %v377
      %v443 = vunpack.c.l.b16 %v378
      %v444 = vunpack.c.l.b16 %v379
      %v445 = vunpack.c.l.b16 %v380
      %v446 = vunpack.c.l.b16 %v381
      %v447 = vunpack.c.l.b16 %v382
      %v448 = vunpack.c.l.b16 %v383
      %v449 = vunpack.c.l.b16 %v384
      %v450 = vunpack.c.l.b16 %v385
      %v451 = vunpack.c.l.b16 %v386
      %v452 = vunpack.c.l.b16 %v387
      %v453 = vunpack.c.l.b16 %v388
      %v454 = vunpack.c.l.b16 %v389
      %v455 = vunpack.c.l.b16 %v390
      %v456 = vunpack.c.l.b16 %v391
      %v457 = vunpack.c.l.b16 %v392
      %v458 = vunpack.c.l.b16 %v393
      %v459 = vunpack.c.l.b16 %v394
      %v460 = vpack.c.b16 %v429, %v428
      %v461 = vpack.c.b16 %v431, %v430
      %v462 = vpack.c.b16 %v433, %v432
      %v463 = vpack.c.b16 %v435, %v434
      %v464 = vpack.c.b16 %v437, %v436
      %v465 = vpack.c.b16 %v439, %v438
      %v466 = vpack.c.b16 %v441, %v440
      %v467 = vpack.c.b16 %v443, %v442
      %v468 = vpack.c.b16 %v445, %v444
      %v469 = vpack.c.b16 %v447, %v446
      %v470 = vpack.c.b16 %v449, %v448
      %v471 = vpack.c.b16 %v451, %v450
      %v472 = vpack.c.b16 %v453, %v452
      %v473 = vpack.c.b16 %v455, %v454
      %v474 = vpack.c.b16 %v457, %v456
      %v475 = vpack.c.b16 %v459, %v458
      %v477 = vsel %vm202, %v460, 0
      %v480 = vsel %vm202, %v461, 0
      %v483 = vsel %vm202, %v462, 0
      %v486 = vsel %vm202, %v463, 0
      %v489 = vsel %vm202, %v464, 0
      %v492 = vsel %vm202, %v465, 0
      %v495 = vsel %vm202, %v466, 0
      %v498 = vsel %vm202, %v467, 0
      %v501 = vsel %vm202, %v468, 0
      %v504 = vsel %vm202, %v469, 0
      %v507 = vsel %vm202, %v470, 0
      %v510 = vsel %vm202, %v471, 0
      %v513 = vsel %vm202, %v472, 0
      %v516 = vsel %vm202, %v473, 0
      %v519 = vsel %vm202, %v474, 0
      %v522 = vsel %vm202, %v475, 0
      %vm524 = vcmask 1043456
      %v526 = vsel %vm524, %v395, 0
      %528 = vmatpush.bf16.msra.mxu0 0
      %529 = vmatpush.bf16.msra.mxu0 0
      %530 = vmatpush.bf16.msra.mxu0 0
      %531 = vmatpush.bf16.msra.mxu0 0
      %532 = vmatpush.bf16.msra.mxu0 0
      %533 = vmatpush.bf16.msra.mxu0 0
      %534 = vmatpush.bf16.msra.mxu0 0
      %535 = vmatpush.bf16.msra.mxu0 %v526
      %536 = vmatmul.bf16.gmra.mxu0 %v477
      %v537 = vpop.f32.mrf.mxu0
      %v538 = vadd.f32 0.0, %v537
      %v539 = vpop.f32.mrf.mxu0
      %v540 = vadd.f32 0.0, %v539
      %541 = vmatmul.bf16.gmra.mxu0 %v480
      %v542 = vpop.f32.mrf.mxu0
      %v543 = vadd.f32 0.0, %v542
      %v544 = vpop.f32.mrf.mxu0
      %v545 = vadd.f32 0.0, %v544
      %546 = vmatmul.bf16.gmra.mxu0 %v483
      %v547 = vpop.f32.mrf.mxu0
      %v548 = vadd.f32 0.0, %v547
      %v549 = vpop.f32.mrf.mxu0
      %v550 = vadd.f32 0.0, %v549
      %551 = vmatmul.bf16.gmra.mxu0 %v486
      %v552 = vpop.f32.mrf.mxu0
      %v553 = vadd.f32 0.0, %v552
      %v554 = vpop.f32.mrf.mxu0
      %v555 = vadd.f32 0.0, %v554
      %556 = vmatmul.bf16.gmra.mxu0 %v489
      %v557 = vpop.f32.mrf.mxu0
      %v558 = vadd.f32 0.0, %v557
      %v559 = vpop.f32.mrf.mxu0
      %v560 = vadd.f32 0.0, %v559
      %561 = vmatmul.bf16.gmra.mxu0 %v492
      %v562 = vpop.f32.mrf.mxu0
      %v563 = vadd.f32 0.0, %v562
      %v564 = vpop.f32.mrf.mxu0
      %v565 = vadd.f32 0.0, %v564
      %566 = vmatmul.bf16.gmra.mxu0 %v495
      %v567 = vpop.f32.mrf.mxu0
      %v568 = vadd.f32 0.0, %v567
      %v569 = vpop.f32.mrf.mxu0
      %v570 = vadd.f32 0.0, %v569
      %571 = vmatmul.bf16.gmra.mxu0 %v498
      %v572 = vpop.f32.mrf.mxu0
      %v573 = vadd.f32 0.0, %v572
      %v574 = vpop.f32.mrf.mxu0
      %v575 = vadd.f32 0.0, %v574
      %576 = vmatmul.bf16.gmra.mxu0 %v501
      %v577 = vpop.f32.mrf.mxu0
      %v578 = vadd.f32 0.0, %v577
      %v579 = vpop.f32.mrf.mxu0
      %v580 = vadd.f32 0.0, %v579
      %581 = vmatmul.bf16.gmra.mxu0 %v504
      %v582 = vpop.f32.mrf.mxu0
      %v583 = vadd.f32 0.0, %v582
      %v584 = vpop.f32.mrf.mxu0
      %v585 = vadd.f32 0.0, %v584
      %586 = vmatmul.bf16.gmra.mxu0 %v507
      %v587 = vpop.f32.mrf.mxu0
      %v588 = vadd.f32 0.0, %v587
      %v589 = vpop.f32.mrf.mxu0
      %v590 = vadd.f32 0.0, %v589
      %591 = vmatmul.bf16.gmra.mxu0 %v510
      %v592 = vpop.f32.mrf.mxu0
      %v593 = vadd.f32 0.0, %v592
      %v594 = vpop.f32.mrf.mxu0
      %v595 = vadd.f32 0.0, %v594
      %596 = vmatmul.bf16.gmra.mxu0 %v513
      %v597 = vpop.f32.mrf.mxu0
      %v598 = vadd.f32 0.0, %v597
      %v599 = vpop.f32.mrf.mxu0
      %v600 = vadd.f32 0.0, %v599
      %601 = vmatmul.bf16.gmra.mxu0 %v516
      %v602 = vpop.f32.mrf.mxu0
      %v603 = vadd.f32 0.0, %v602
      %v604 = vpop.f32.mrf.mxu0
      %v605 = vadd.f32 0.0, %v604
      %606 = vmatmul.bf16.gmra.mxu0 %v519
      %v607 = vpop.f32.mrf.mxu0
      %v608 = vadd.f32 0.0, %v607
      %v609 = vpop.f32.mrf.mxu0
      %v610 = vadd.f32 0.0, %v609
      %611 = vmatmul.bf16.gmra.mxu0 %v522
      %v612 = vpop.f32.mrf.mxu0
      %v613 = vadd.f32 0.0, %v612
      %v614 = vpop.f32.mrf.mxu0
      %v615 = vadd.f32 0.0, %v614
      %616 = vdwg.mxu0
      %v617 = vmax.f32 %v277, 0.0
      %v618 = vmax.f32 %v278, 0.0
      %v619 = vmax.f32 %v280, 0.0
      %v620 = vmax.f32 %v281, 0.0
      %v621 = vmax.f32 %v283, 0.0
      %v622 = vmax.f32 %v284, 0.0
      %v623 = vmax.f32 %v286, 0.0
      %v624 = vmax.f32 %v287, 0.0
      %v625 = vmax.f32 %v289, 0.0
      %v626 = vmax.f32 %v290, 0.0
      %v627 = vmax.f32 %v292, 0.0
      %v628 = vmax.f32 %v293, 0.0
      %v629 = vmax.f32 %v295, 0.0
      %v630 = vmax.f32 %v296, 0.0
      %v631 = vmax.f32 %v298, 0.0
      %v632 = vmax.f32 %v299, 0.0
      %v633 = vmax.f32 %v301, 0.0
      %v634 = vmax.f32 %v302, 0.0
      %v635 = vmax.f32 %v304, 0.0
      %v636 = vmax.f32 %v305, 0.0
      %v637 = vmax.f32 %v307, 0.0
      %v638 = vmax.f32 %v308, 0.0
      %v639 = vmax.f32 %v310, 0.0
      %v640 = vmax.f32 %v311, 0.0
      %v641 = vmax.f32 %v313, 0.0
      %v642 = vmax.f32 %v314, 0.0
      %v643 = vmax.f32 %v316, 0.0
      %v644 = vmax.f32 %v317, 0.0
      %v645 = vmax.f32 %v319, 0.0
      %v646 = vmax.f32 %v320, 0.0
      %v647 = vmax.f32 %v322, 0.0
      %v648 = vmax.f32 %v323, 0.0
      %v649 = vpack.c.bf16 %v617, %v617
      %v650 = vpack.c.bf16 %v618, %v618
      %v651 = vpack.c.bf16 %v619, %v619
      %v652 = vpack.c.bf16 %v620, %v620
      %v653 = vpack.c.bf16 %v621, %v621
      %v654 = vpack.c.bf16 %v622, %v622
      %v655 = vpack.c.bf16 %v623, %v623
      %v656 = vpack.c.bf16 %v624, %v624
      %v657 = vpack.c.bf16 %v625, %v625
      %v658 = vpack.c.bf16 %v626, %v626
      %v659 = vpack.c.bf16 %v627, %v627
      %v660 = vpack.c.bf16 %v628, %v628
      %v661 = vpack.c.bf16 %v629, %v629
      %v662 = vpack.c.bf16 %v630, %v630
      %v663 = vpack.c.bf16 %v631, %v631
      %v664 = vpack.c.bf16 %v632, %v632
      %v665 = vpack.c.bf16 %v633, %v633
      %v666 = vpack.c.bf16 %v634, %v634
      %v667 = vpack.c.bf16 %v635, %v635
      %v668 = vpack.c.bf16 %v636, %v636
      %v669 = vpack.c.bf16 %v637, %v637
      %v670 = vpack.c.bf16 %v638, %v638
      %v671 = vpack.c.bf16 %v639, %v639
      %v672 = vpack.c.bf16 %v640, %v640
      %v673 = vpack.c.bf16 %v641, %v641
      %v674 = vpack.c.bf16 %v642, %v642
      %v675 = vpack.c.bf16 %v643, %v643
      %v676 = vpack.c.bf16 %v644, %v644
      %v677 = vpack.c.bf16 %v645, %v645
      %v678 = vpack.c.bf16 %v646, %v646
      %v679 = vpack.c.bf16 %v647, %v647
      %v680 = vpack.c.bf16 %v648, %v648
      %v681 = vmax.f32 %v279, 0.0
      %v682 = vmax.f32 %v282, 0.0
      %v683 = vmax.f32 %v285, 0.0
      %v684 = vmax.f32 %v288, 0.0
      %v685 = vmax.f32 %v291, 0.0
      %v686 = vmax.f32 %v294, 0.0
      %v687 = vmax.f32 %v297, 0.0
      %v688 = vmax.f32 %v300, 0.0
      %v689 = vmax.f32 %v303, 0.0
      %v690 = vmax.f32 %v306, 0.0
      %v691 = vmax.f32 %v309, 0.0
      %v692 = vmax.f32 %v312, 0.0
      %v693 = vmax.f32 %v315, 0.0
      %v694 = vmax.f32 %v318, 0.0
      %v695 = vmax.f32 %v321, 0.0
      %v696 = vmax.f32 %v324, 0.0
      %v697 = vpack.c.bf16 %v681, %v681
      %v698 = vpack.c.bf16 %v682, %v682
      %v699 = vpack.c.bf16 %v683, %v683
      %v700 = vpack.c.bf16 %v684, %v684
      %v701 = vpack.c.bf16 %v685, %v685
      %v702 = vpack.c.bf16 %v686, %v686
      %v703 = vpack.c.bf16 %v687, %v687
      %v704 = vpack.c.bf16 %v688, %v688
      %v705 = vpack.c.bf16 %v689, %v689
      %v706 = vpack.c.bf16 %v690, %v690
      %v707 = vpack.c.bf16 %v691, %v691
      %v708 = vpack.c.bf16 %v692, %v692
      %v709 = vpack.c.bf16 %v693, %v693
      %v710 = vpack.c.bf16 %v694, %v694
      %v711 = vpack.c.bf16 %v695, %v695
      %v712 = vpack.c.bf16 %v696, %v696
      %vm713 = vsmask.f32 3328
      %vm714 = vsmask.f32 7440
      %vm715 = vmor %vm713, %vm714
      %v717 = vshrl.u32 %v649, 16
      %v719 = vrot.slane %v717, 4
      %v720 = vshll.u32 %v649, 16
      %v722 = vrot.slane %v720, 5
      %v723 = vor.u32 %v719, %v722
      %v724 = vrot.slane %v723, 4
      %v726 = vshll.u32 %v650, 16
      %v728 = vrot.slane %v726, 5
      %v729 = vsel %vm715, %v724, %v728
      %v730 = vshrl.u32 %v650, 16
      %v732 = vrot.slane %v730, 4
      %v733 = vor.u32 %v732, %v728
      %v734 = vrot.slane %v733, 4
      %v736 = vshll.u32 %v697, 16
      %v738 = vrot.slane %v736, 5
      %v739 = vsel %vm715, %v734, %v738
      %v741 = vshrl.u32 %v651, 16
      %v743 = vrot.slane %v741, 4
      %v744 = vshll.u32 %v651, 16
      %v746 = vrot.slane %v744, 5
      %v747 = vor.u32 %v743, %v746
      %v748 = vrot.slane %v747, 4
      %v750 = vshll.u32 %v652, 16
      %v752 = vrot.slane %v750, 5
      %v753 = vsel %vm715, %v748, %v752
      %v754 = vshrl.u32 %v652, 16
      %v756 = vrot.slane %v754, 4
      %v757 = vor.u32 %v756, %v752
      %v758 = vrot.slane %v757, 4
      %v760 = vshll.u32 %v698, 16
      %v762 = vrot.slane %v760, 5
      %v763 = vsel %vm715, %v758, %v762
      %v765 = vshrl.u32 %v653, 16
      %v767 = vrot.slane %v765, 4
      %v768 = vshll.u32 %v653, 16
      %v770 = vrot.slane %v768, 5
      %v771 = vor.u32 %v767, %v770
      %v772 = vrot.slane %v771, 4
      %v774 = vshll.u32 %v654, 16
      %v776 = vrot.slane %v774, 5
      %v777 = vsel %vm715, %v772, %v776
      %v778 = vshrl.u32 %v654, 16
      %v780 = vrot.slane %v778, 4
      %v781 = vor.u32 %v780, %v776
      %v782 = vrot.slane %v781, 4
      %v784 = vshll.u32 %v699, 16
      %v786 = vrot.slane %v784, 5
      %v787 = vsel %vm715, %v782, %v786
      %v789 = vshrl.u32 %v655, 16
      %v791 = vrot.slane %v789, 4
      %v792 = vshll.u32 %v655, 16
      %v794 = vrot.slane %v792, 5
      %v795 = vor.u32 %v791, %v794
      %v796 = vrot.slane %v795, 4
      %v798 = vshll.u32 %v656, 16
      %v800 = vrot.slane %v798, 5
      %v801 = vsel %vm715, %v796, %v800
      %v802 = vshrl.u32 %v656, 16
      %v804 = vrot.slane %v802, 4
      %v805 = vor.u32 %v804, %v800
      %v806 = vrot.slane %v805, 4
      %v808 = vshll.u32 %v700, 16
      %v810 = vrot.slane %v808, 5
      %v811 = vsel %vm715, %v806, %v810
      %v813 = vshrl.u32 %v657, 16
      %v815 = vrot.slane %v813, 4
      %v816 = vshll.u32 %v657, 16
      %v818 = vrot.slane %v816, 5
      %v819 = vor.u32 %v815, %v818
      %v820 = vrot.slane %v819, 4
      %v822 = vshll.u32 %v658, 16
      %v824 = vrot.slane %v822, 5
      %v825 = vsel %vm715, %v820, %v824
      %v826 = vshrl.u32 %v658, 16
      %v828 = vrot.slane %v826, 4
      %v829 = vor.u32 %v828, %v824
      %v830 = vrot.slane %v829, 4
      %v832 = vshll.u32 %v701, 16
      %v834 = vrot.slane %v832, 5
      %v835 = vsel %vm715, %v830, %v834
      %v837 = vshrl.u32 %v659, 16
      %v839 = vrot.slane %v837, 4
      %v840 = vshll.u32 %v659, 16
      %v842 = vrot.slane %v840, 5
      %v843 = vor.u32 %v839, %v842
      %v844 = vrot.slane %v843, 4
      %v846 = vshll.u32 %v660, 16
      %v848 = vrot.slane %v846, 5
      %v849 = vsel %vm715, %v844, %v848
      %v850 = vshrl.u32 %v660, 16
      %v852 = vrot.slane %v850, 4
      %v853 = vor.u32 %v852, %v848
      %v854 = vrot.slane %v853, 4
      %v856 = vshll.u32 %v702, 16
      %v858 = vrot.slane %v856, 5
      %v859 = vsel %vm715, %v854, %v858
      %v861 = vshrl.u32 %v661, 16
      %v863 = vrot.slane %v861, 4
      %v864 = vshll.u32 %v661, 16
      %v866 = vrot.slane %v864, 5
      %v867 = vor.u32 %v863, %v866
      %v868 = vrot.slane %v867, 4
      %v870 = vshll.u32 %v662, 16
      %v872 = vrot.slane %v870, 5
      %v873 = vsel %vm715, %v868, %v872
      %v874 = vshrl.u32 %v662, 16
      %v876 = vrot.slane %v874, 4
      %v877 = vor.u32 %v876, %v872
      %v878 = vrot.slane %v877, 4
      %v880 = vshll.u32 %v703, 16
      %v882 = vrot.slane %v880, 5
      %v883 = vsel %vm715, %v878, %v882
      %v885 = vshrl.u32 %v663, 16
      %v887 = vrot.slane %v885, 4
      %v888 = vshll.u32 %v663, 16
      %v890 = vrot.slane %v888, 5
      %v891 = vor.u32 %v887, %v890
      %v892 = vrot.slane %v891, 4
      %v894 = vshll.u32 %v664, 16
      %v896 = vrot.slane %v894, 5
      %v897 = vsel %vm715, %v892, %v896
      %v898 = vshrl.u32 %v664, 16
      %v900 = vrot.slane %v898, 4
      %v901 = vor.u32 %v900, %v896
      %v902 = vrot.slane %v901, 4
      %v904 = vshll.u32 %v704, 16
      %v906 = vrot.slane %v904, 5
      %v907 = vsel %vm715, %v902, %v906
      %v909 = vshrl.u32 %v665, 16
      %v911 = vrot.slane %v909, 4
      %v912 = vshll.u32 %v665, 16
      %v914 = vrot.slane %v912, 5
      %v915 = vor.u32 %v911, %v914
      %v916 = vrot.slane %v915, 4
      %v918 = vshll.u32 %v666, 16
      %v920 = vrot.slane %v918, 5
      %v921 = vsel %vm715, %v916, %v920
      %v922 = vshrl.u32 %v666, 16
      %v924 = vrot.slane %v922, 4
      %v925 = vor.u32 %v924, %v920
      %v926 = vrot.slane %v925, 4
      %v928 = vshll.u32 %v705, 16
      %v930 = vrot.slane %v928, 5
      %v931 = vsel %vm715, %v926, %v930
      %v933 = vshrl.u32 %v667, 16
      %v935 = vrot.slane %v933, 4
      %v936 = vshll.u32 %v667, 16
      %v938 = vrot.slane %v936, 5
      %v939 = vor.u32 %v935, %v938
      %v940 = vrot.slane %v939, 4
      %v942 = vshll.u32 %v668, 16
      %v944 = vrot.slane %v942, 5
      %v945 = vsel %vm715, %v940, %v944
      %v946 = vshrl.u32 %v668, 16
      %v948 = vrot.slane %v946, 4
      %v949 = vor.u32 %v948, %v944
      %v950 = vrot.slane %v949, 4
      %v952 = vshll.u32 %v706, 16
      %v954 = vrot.slane %v952, 5
      %v955 = vsel %vm715, %v950, %v954
      %v957 = vshrl.u32 %v669, 16
      %v959 = vrot.slane %v957, 4
      %v960 = vshll.u32 %v669, 16
      %v962 = vrot.slane %v960, 5
      %v963 = vor.u32 %v959, %v962
      %v964 = vrot.slane %v963, 4
      %v966 = vshll.u32 %v670, 16
      %v968 = vrot.slane %v966, 5
      %v969 = vsel %vm715, %v964, %v968
      %v970 = vshrl.u32 %v670, 16
      %v972 = vrot.slane %v970, 4
      %v973 = vor.u32 %v972, %v968
      %v974 = vrot.slane %v973, 4
      %v976 = vshll.u32 %v707, 16
      %v978 = vrot.slane %v976, 5
      %v979 = vsel %vm715, %v974, %v978
      %v981 = vshrl.u32 %v671, 16
      %v983 = vrot.slane %v981, 4
      %v984 = vshll.u32 %v671, 16
      %v986 = vrot.slane %v984, 5
      %v987 = vor.u32 %v983, %v986
      %v988 = vrot.slane %v987, 4
      %v990 = vshll.u32 %v672, 16
      %v992 = vrot.slane %v990, 5
      %v993 = vsel %vm715, %v988, %v992
      %v994 = vshrl.u32 %v672, 16
      %v996 = vrot.slane %v994, 4
      %v997 = vor.u32 %v996, %v992
      %v998 = vrot.slane %v997, 4
      %v1000 = vshll.u32 %v708, 16
      %v1002 = vrot.slane %v1000, 5
      %v1003 = vsel %vm715, %v998, %v1002
      %v1005 = vshrl.u32 %v673, 16
      %v1007 = vrot.slane %v1005, 4
      %v1008 = vshll.u32 %v673, 16
      %v1010 = vrot.slane %v1008, 5
      %v1011 = vor.u32 %v1007, %v1010
      %v1012 = vrot.slane %v1011, 4
      %v1014 = vshll.u32 %v674, 16
      %v1016 = vrot.slane %v1014, 5
      %v1017 = vsel %vm715, %v1012, %v1016
      %v1018 = vshrl.u32 %v674, 16
      %v1020 = vrot.slane %v1018, 4
      %v1021 = vor.u32 %v1020, %v1016
      %v1022 = vrot.slane %v1021, 4
      %v1024 = vshll.u32 %v709, 16
      %v1026 = vrot.slane %v1024, 5
      %v1027 = vsel %vm715, %v1022, %v1026
      %v1029 = vshrl.u32 %v675, 16
      %v1031 = vrot.slane %v1029, 4
      %v1032 = vshll.u32 %v675, 16
      %v1034 = vrot.slane %v1032, 5
      %v1035 = vor.u32 %v1031, %v1034
      %v1036 = vrot.slane %v1035, 4
      %v1038 = vshll.u32 %v676, 16
      %v1040 = vrot.slane %v1038, 5
      %v1041 = vsel %vm715, %v1036, %v1040
      %v1042 = vshrl.u32 %v676, 16
      %v1044 = vrot.slane %v1042, 4
      %v1045 = vor.u32 %v1044, %v1040
      %v1046 = vrot.slane %v1045, 4
      %v1048 = vshll.u32 %v710, 16
      %v1050 = vrot.slane %v1048, 5
      %v1051 = vsel %vm715, %v1046, %v1050
      %v1053 = vshrl.u32 %v677, 16
      %v1055 = vrot.slane %v1053, 4
      %v1056 = vshll.u32 %v677, 16
      %v1058 = vrot.slane %v1056, 5
      %v1059 = vor.u32 %v1055, %v1058
      %v1060 = vrot.slane %v1059, 4
      %v1062 = vshll.u32 %v678, 16
      %v1064 = vrot.slane %v1062, 5
      %v1065 = vsel %vm715, %v1060, %v1064
      %v1066 = vshrl.u32 %v678, 16
      %v1068 = vrot.slane %v1066, 4
      %v1069 = vor.u32 %v1068, %v1064
      %v1070 = vrot.slane %v1069, 4
      %v1072 = vshll.u32 %v711, 16
      %v1074 = vrot.slane %v1072, 5
      %v1075 = vsel %vm715, %v1070, %v1074
      %v1077 = vshrl.u32 %v679, 16
      %v1079 = vrot.slane %v1077, 4
      %v1080 = vshll.u32 %v679, 16
      %v1082 = vrot.slane %v1080, 5
      %v1083 = vor.u32 %v1079, %v1082
      %v1084 = vrot.slane %v1083, 4
      %v1086 = vshll.u32 %v680, 16
      %v1088 = vrot.slane %v1086, 5
      %v1089 = vsel %vm715, %v1084, %v1088
      %v1090 = vshrl.u32 %v680, 16
      %v1092 = vrot.slane %v1090, 4
      %v1093 = vor.u32 %v1092, %v1088
      %v1094 = vrot.slane %v1093, 4
      %v1096 = vshll.u32 %v712, 16
      %v1098 = vrot.slane %v1096, 5
      %v1099 = vsel %vm715, %v1094, %v1098
      %vm1148 = vcmask 1042432
      %vm1149 = vcmask 1046532
      %vm1150 = vmor %vm1148, %vm1149
      %v1151 = vrot.slane %v649, 5
      %v1152 = vrot.slane %v1151, 4
      %v1153 = vrot.slane %v650, 5
      %v1154 = vsel %vm1150, %v1152, %v1153
      %v1155 = vrot.slane %v1153, 4
      %v1156 = vrot.slane %v697, 5
      %v1157 = vsel %vm1150, %v1155, %v1156
      %v1158 = vrot.slane %v651, 5
      %v1159 = vrot.slane %v1158, 4
      %v1160 = vrot.slane %v652, 5
      %v1161 = vsel %vm1150, %v1159, %v1160
      %v1162 = vrot.slane %v1160, 4
      %v1163 = vrot.slane %v698, 5
      %v1164 = vsel %vm1150, %v1162, %v1163
      %v1165 = vrot.slane %v653, 5
      %v1166 = vrot.slane %v1165, 4
      %v1167 = vrot.slane %v654, 5
      %v1168 = vsel %vm1150, %v1166, %v1167
      %v1169 = vrot.slane %v1167, 4
      %v1170 = vrot.slane %v699, 5
      %v1171 = vsel %vm1150, %v1169, %v1170
      %v1172 = vrot.slane %v655, 5
      %v1173 = vrot.slane %v1172, 4
      %v1174 = vrot.slane %v656, 5
      %v1175 = vsel %vm1150, %v1173, %v1174
      %v1176 = vrot.slane %v1174, 4
      %v1177 = vrot.slane %v700, 5
      %v1178 = vsel %vm1150, %v1176, %v1177
      %v1179 = vrot.slane %v657, 5
      %v1180 = vrot.slane %v1179, 4
      %v1181 = vrot.slane %v658, 5
      %v1182 = vsel %vm1150, %v1180, %v1181
      %v1183 = vrot.slane %v1181, 4
      %v1184 = vrot.slane %v701, 5
      %v1185 = vsel %vm1150, %v1183, %v1184
      %v1186 = vrot.slane %v659, 5
      %v1187 = vrot.slane %v1186, 4
      %v1188 = vrot.slane %v660, 5
      %v1189 = vsel %vm1150, %v1187, %v1188
      %v1190 = vrot.slane %v1188, 4
      %v1191 = vrot.slane %v702, 5
      %v1192 = vsel %vm1150, %v1190, %v1191
      %v1193 = vrot.slane %v661, 5
      %v1194 = vrot.slane %v1193, 4
      %v1195 = vrot.slane %v662, 5
      %v1196 = vsel %vm1150, %v1194, %v1195
      %v1197 = vrot.slane %v1195, 4
      %v1198 = vrot.slane %v703, 5
      %v1199 = vsel %vm1150, %v1197, %v1198
      %v1200 = vrot.slane %v663, 5
      %v1201 = vrot.slane %v1200, 4
      %v1202 = vrot.slane %v664, 5
      %v1203 = vsel %vm1150, %v1201, %v1202
      %v1204 = vrot.slane %v1202, 4
      %v1205 = vrot.slane %v704, 5
      %v1206 = vsel %vm1150, %v1204, %v1205
      %v1207 = vrot.slane %v665, 5
      %v1208 = vrot.slane %v1207, 4
      %v1209 = vrot.slane %v666, 5
      %v1210 = vsel %vm1150, %v1208, %v1209
      %v1211 = vrot.slane %v1209, 4
      %v1212 = vrot.slane %v705, 5
      %v1213 = vsel %vm1150, %v1211, %v1212
      %v1214 = vrot.slane %v667, 5
      %v1215 = vrot.slane %v1214, 4
      %v1216 = vrot.slane %v668, 5
      %v1217 = vsel %vm1150, %v1215, %v1216
      %v1218 = vrot.slane %v1216, 4
      %v1219 = vrot.slane %v706, 5
      %v1220 = vsel %vm1150, %v1218, %v1219
      %v1221 = vrot.slane %v669, 5
      %v1222 = vrot.slane %v1221, 4
      %v1223 = vrot.slane %v670, 5
      %v1224 = vsel %vm1150, %v1222, %v1223
      %v1225 = vrot.slane %v1223, 4
      %v1226 = vrot.slane %v707, 5
      %v1227 = vsel %vm1150, %v1225, %v1226
      %v1228 = vrot.slane %v671, 5
      %v1229 = vrot.slane %v1228, 4
      %v1230 = vrot.slane %v672, 5
      %v1231 = vsel %vm1150, %v1229, %v1230
      %v1232 = vrot.slane %v1230, 4
      %v1233 = vrot.slane %v708, 5
      %v1234 = vsel %vm1150, %v1232, %v1233
      %v1235 = vrot.slane %v673, 5
      %v1236 = vrot.slane %v1235, 4
      %v1237 = vrot.slane %v674, 5
      %v1238 = vsel %vm1150, %v1236, %v1237
      %v1239 = vrot.slane %v1237, 4
      %v1240 = vrot.slane %v709, 5
      %v1241 = vsel %vm1150, %v1239, %v1240
      %v1242 = vrot.slane %v675, 5
      %v1243 = vrot.slane %v1242, 4
      %v1244 = vrot.slane %v676, 5
      %v1245 = vsel %vm1150, %v1243, %v1244
      %v1246 = vrot.slane %v1244, 4
      %v1247 = vrot.slane %v710, 5
      %v1248 = vsel %vm1150, %v1246, %v1247
      %v1249 = vrot.slane %v677, 5
      %v1250 = vrot.slane %v1249, 4
      %v1251 = vrot.slane %v678, 5
      %v1252 = vsel %vm1150, %v1250, %v1251
      %v1253 = vrot.slane %v1251, 4
      %v1254 = vrot.slane %v711, 5
      %v1255 = vsel %vm1150, %v1253, %v1254
      %v1256 = vrot.slane %v679, 5
      %v1257 = vrot.slane %v1256, 4
      %v1258 = vrot.slane %v680, 5
      %v1259 = vsel %vm1150, %v1257, %v1258
      %v1260 = vrot.slane %v1258, 4
      %v1261 = vrot.slane %v712, 5
      %v1262 = vsel %vm1150, %v1260, %v1261
      %v1263 = vmax.f32 %v325, 0.0
      %v1264 = vmax.f32 %v326, 0.0
      %v1265 = vpack.c.bf16 %v1263, %v1263
      %v1266 = vpack.c.bf16 %v1264, %v1264
      %v1267 = vmax.f32 %v327, 0.0
      %v1268 = vpack.c.bf16 %v1267, %v1267
      %v1270 = vshrl.u32 %v1265, 16
      %v1272 = vrot.slane %v1270, 4
      %v1273 = vshll.u32 %v1265, 16
      %v1275 = vrot.slane %v1273, 5
      %v1276 = vor.u32 %v1272, %v1275
      %v1277 = vrot.slane %v1276, 4
      %v1279 = vshll.u32 %v1266, 16
      %v1281 = vrot.slane %v1279, 5
      %v1282 = vsel %vm715, %v1277, %v1281
      %v1283 = vshrl.u32 %v1266, 16
      %v1285 = vrot.slane %v1283, 4
      %v1286 = vor.u32 %v1285, %v1281
      %v1287 = vrot.slane %v1286, 4
      %v1289 = vshll.u32 %v1268, 16
      %v1291 = vrot.slane %v1289, 5
      %v1292 = vsel %vm715, %v1287, %v1291
      %v1296 = vrot.slane %v1265, 5
      %v1297 = vrot.slane %v1296, 4
      %v1298 = vrot.slane %v1266, 5
      %v1299 = vsel %vm1150, %v1297, %v1298
      %v1300 = vrot.slane %v1298, 4
      %v1301 = vrot.slane %v1268, 5
      %v1302 = vsel %vm1150, %v1300, %v1301
      %v1303 = vmax.f32 %v328, 0.0
      %v1304 = vmax.f32 %v329, 0.0
      %v1305 = vpack.c.bf16 %v1303, %v1303
      %v1306 = vpack.c.bf16 %v1304, %v1304
      %v1307 = vmax.f32 %v330, 0.0
      %v1308 = vpack.c.bf16 %v1307, %v1307
      %v1310 = vshrl.u32 %v1305, 16
      %v1312 = vrot.slane %v1310, 4
      %v1313 = vshll.u32 %v1305, 16
      %v1315 = vrot.slane %v1313, 5
      %v1316 = vor.u32 %v1312, %v1315
      %v1317 = vrot.slane %v1316, 4
      %v1319 = vshll.u32 %v1306, 16
      %v1321 = vrot.slane %v1319, 5
      %v1322 = vsel %vm715, %v1317, %v1321
      %v1323 = vshrl.u32 %v1306, 16
      %v1325 = vrot.slane %v1323, 4
      %v1326 = vor.u32 %v1325, %v1321
      %v1327 = vrot.slane %v1326, 4
      %v1329 = vshll.u32 %v1308, 16
      %v1331 = vrot.slane %v1329, 5
      %v1332 = vsel %vm715, %v1327, %v1331
      %v1336 = vrot.slane %v1305, 5
      %v1337 = vrot.slane %v1336, 4
      %v1338 = vrot.slane %v1306, 5
      %v1339 = vsel %vm1150, %v1337, %v1338
      %v1340 = vrot.slane %v1338, 4
      %v1341 = vrot.slane %v1308, 5
      %v1342 = vsel %vm1150, %v1340, %v1341
      %v1343 = vunpack.c.l.b16 %v649
      %v1344 = vunpack.c.l.b16 %v650
      %v1345 = vunpack.c.l.b16 %v651
      %v1346 = vunpack.c.l.b16 %v652
      %v1347 = vunpack.c.l.b16 %v653
      %v1348 = vunpack.c.l.b16 %v654
      %v1349 = vunpack.c.l.b16 %v655
      %v1350 = vunpack.c.l.b16 %v656
      %v1351 = vunpack.c.l.b16 %v657
      %v1352 = vunpack.c.l.b16 %v658
      %v1353 = vunpack.c.l.b16 %v659
      %v1354 = vunpack.c.l.b16 %v660
      %v1355 = vunpack.c.l.b16 %v661
      %v1356 = vunpack.c.l.b16 %v662
      %v1357 = vunpack.c.l.b16 %v663
      %v1358 = vunpack.c.l.b16 %v664
      %v1359 = vunpack.c.l.b16 %v665
      %v1360 = vunpack.c.l.b16 %v666
      %v1361 = vunpack.c.l.b16 %v667
      %v1362 = vunpack.c.l.b16 %v668
      %v1363 = vunpack.c.l.b16 %v669
      %v1364 = vunpack.c.l.b16 %v670
      %v1365 = vunpack.c.l.b16 %v671
      %v1366 = vunpack.c.l.b16 %v672
      %v1367 = vunpack.c.l.b16 %v673
      %v1368 = vunpack.c.l.b16 %v674
      %v1369 = vunpack.c.l.b16 %v675
      %v1370 = vunpack.c.l.b16 %v676
      %v1371 = vunpack.c.l.b16 %v677
      %v1372 = vunpack.c.l.b16 %v678
      %v1373 = vunpack.c.l.b16 %v679
      %v1374 = vunpack.c.l.b16 %v680
      %v1375 = vpack.c.b16 %v1344, %v1343
      %v1376 = vpack.c.b16 %v1346, %v1345
      %v1377 = vpack.c.b16 %v1348, %v1347
      %v1378 = vpack.c.b16 %v1350, %v1349
      %v1379 = vpack.c.b16 %v1352, %v1351
      %v1380 = vpack.c.b16 %v1354, %v1353
      %v1381 = vpack.c.b16 %v1356, %v1355
      %v1382 = vpack.c.b16 %v1358, %v1357
      %v1383 = vpack.c.b16 %v1360, %v1359
      %v1384 = vpack.c.b16 %v1362, %v1361
      %v1385 = vpack.c.b16 %v1364, %v1363
      %v1386 = vpack.c.b16 %v1366, %v1365
      %v1387 = vpack.c.b16 %v1368, %v1367
      %v1388 = vpack.c.b16 %v1370, %v1369
      %v1389 = vpack.c.b16 %v1372, %v1371
      %v1390 = vpack.c.b16 %v1374, %v1373
      %v1391 = vunpack.c.l.b16 %v729
      %v1392 = vunpack.c.l.b16 %v739
      %v1393 = vunpack.c.l.b16 %v753
      %v1394 = vunpack.c.l.b16 %v763
      %v1395 = vunpack.c.l.b16 %v777
      %v1396 = vunpack.c.l.b16 %v787
      %v1397 = vunpack.c.l.b16 %v801
      %v1398 = vunpack.c.l.b16 %v811
      %v1399 = vunpack.c.l.b16 %v825
      %v1400 = vunpack.c.l.b16 %v835
      %v1401 = vunpack.c.l.b16 %v849
      %v1402 = vunpack.c.l.b16 %v859
      %v1403 = vunpack.c.l.b16 %v873
      %v1404 = vunpack.c.l.b16 %v883
      %v1405 = vunpack.c.l.b16 %v897
      %v1406 = vunpack.c.l.b16 %v907
      %v1407 = vunpack.c.l.b16 %v921
      %v1408 = vunpack.c.l.b16 %v931
      %v1409 = vunpack.c.l.b16 %v945
      %v1410 = vunpack.c.l.b16 %v955
      %v1411 = vunpack.c.l.b16 %v969
      %v1412 = vunpack.c.l.b16 %v979
      %v1413 = vunpack.c.l.b16 %v993
      %v1414 = vunpack.c.l.b16 %v1003
      %v1415 = vunpack.c.l.b16 %v1017
      %v1416 = vunpack.c.l.b16 %v1027
      %v1417 = vunpack.c.l.b16 %v1041
      %v1418 = vunpack.c.l.b16 %v1051
      %v1419 = vunpack.c.l.b16 %v1065
      %v1420 = vunpack.c.l.b16 %v1075
      %v1421 = vunpack.c.l.b16 %v1089
      %v1422 = vunpack.c.l.b16 %v1099
      %v1423 = vpack.c.b16 %v1392, %v1391
      %v1424 = vpack.c.b16 %v1394, %v1393
      %v1425 = vpack.c.b16 %v1396, %v1395
      %v1426 = vpack.c.b16 %v1398, %v1397
      %v1427 = vpack.c.b16 %v1400, %v1399
      %v1428 = vpack.c.b16 %v1402, %v1401
      %v1429 = vpack.c.b16 %v1404, %v1403
      %v1430 = vpack.c.b16 %v1406, %v1405
      %v1431 = vpack.c.b16 %v1408, %v1407
      %v1432 = vpack.c.b16 %v1410, %v1409
      %v1433 = vpack.c.b16 %v1412, %v1411
      %v1434 = vpack.c.b16 %v1414, %v1413
      %v1435 = vpack.c.b16 %v1416, %v1415
      %v1436 = vpack.c.b16 %v1418, %v1417
      %v1437 = vpack.c.b16 %v1420, %v1419
      %v1438 = vpack.c.b16 %v1422, %v1421
      %1439 = vrot.lane.b32.xlu0 %v1423, 8
      %v1440 = vpop.permute.xlu0 %1439
      %1441 = vrot.lane.b32.xlu0 %v1424, 8
      %v1442 = vpop.permute.xlu0 %1441
      %1443 = vrot.lane.b32.xlu0 %v1425, 8
      %v1444 = vpop.permute.xlu0 %1443
      %1445 = vrot.lane.b32.xlu0 %v1426, 8
      %v1446 = vpop.permute.xlu0 %1445
      %1447 = vrot.lane.b32.xlu0 %v1427, 8
      %v1448 = vpop.permute.xlu0 %1447
      %1449 = vrot.lane.b32.xlu0 %v1428, 8
      %v1450 = vpop.permute.xlu0 %1449
      %1451 = vrot.lane.b32.xlu0 %v1429, 8
      %v1452 = vpop.permute.xlu0 %1451
      %1453 = vrot.lane.b32.xlu0 %v1430, 8
      %v1454 = vpop.permute.xlu0 %1453
      %1455 = vrot.lane.b32.xlu0 %v1431, 8
      %v1456 = vpop.permute.xlu0 %1455
      %1457 = vrot.lane.b32.xlu0 %v1432, 8
      %v1458 = vpop.permute.xlu0 %1457
      %1459 = vrot.lane.b32.xlu0 %v1433, 8
      %v1460 = vpop.permute.xlu0 %1459
      %1461 = vrot.lane.b32.xlu0 %v1434, 8
      %v1462 = vpop.permute.xlu0 %1461
      %1463 = vrot.lane.b32.xlu0 %v1435, 8
      %v1464 = vpop.permute.xlu0 %1463
      %1465 = vrot.lane.b32.xlu0 %v1436, 8
      %v1466 = vpop.permute.xlu0 %1465
      %1467 = vrot.lane.b32.xlu0 %v1437, 8
      %v1468 = vpop.permute.xlu0 %1467
      %1469 = vrot.lane.b32.xlu0 %v1438, 8
      %v1470 = vpop.permute.xlu0 %1469
      %v1471 = vunpack.c.l.b16 %v1154
      %v1472 = vunpack.c.l.b16 %v1157
      %v1473 = vunpack.c.l.b16 %v1161
      %v1474 = vunpack.c.l.b16 %v1164
      %v1475 = vunpack.c.l.b16 %v1168
      %v1476 = vunpack.c.l.b16 %v1171
      %v1477 = vunpack.c.l.b16 %v1175
      %v1478 = vunpack.c.l.b16 %v1178
      %v1479 = vunpack.c.l.b16 %v1182
      %v1480 = vunpack.c.l.b16 %v1185
      %v1481 = vunpack.c.l.b16 %v1189
      %v1482 = vunpack.c.l.b16 %v1192
      %v1483 = vunpack.c.l.b16 %v1196
      %v1484 = vunpack.c.l.b16 %v1199
      %v1485 = vunpack.c.l.b16 %v1203
      %v1486 = vunpack.c.l.b16 %v1206
      %v1487 = vunpack.c.l.b16 %v1210
      %v1488 = vunpack.c.l.b16 %v1213
      %v1489 = vunpack.c.l.b16 %v1217
      %v1490 = vunpack.c.l.b16 %v1220
      %v1491 = vunpack.c.l.b16 %v1224
      %v1492 = vunpack.c.l.b16 %v1227
      %v1493 = vunpack.c.l.b16 %v1231
      %v1494 = vunpack.c.l.b16 %v1234
      %v1495 = vunpack.c.l.b16 %v1238
      %v1496 = vunpack.c.l.b16 %v1241
      %v1497 = vunpack.c.l.b16 %v1245
      %v1498 = vunpack.c.l.b16 %v1248
      %v1499 = vunpack.c.l.b16 %v1252
      %v1500 = vunpack.c.l.b16 %v1255
      %v1501 = vunpack.c.l.b16 %v1259
      %v1502 = vunpack.c.l.b16 %v1262
      %v1503 = vpack.c.b16 %v1472, %v1471
      %v1504 = vpack.c.b16 %v1474, %v1473
      %v1505 = vpack.c.b16 %v1476, %v1475
      %v1506 = vpack.c.b16 %v1478, %v1477
      %v1507 = vpack.c.b16 %v1480, %v1479
      %v1508 = vpack.c.b16 %v1482, %v1481
      %v1509 = vpack.c.b16 %v1484, %v1483
      %v1510 = vpack.c.b16 %v1486, %v1485
      %v1511 = vpack.c.b16 %v1488, %v1487
      %v1512 = vpack.c.b16 %v1490, %v1489
      %v1513 = vpack.c.b16 %v1492, %v1491
      %v1514 = vpack.c.b16 %v1494, %v1493
      %v1515 = vpack.c.b16 %v1496, %v1495
      %v1516 = vpack.c.b16 %v1498, %v1497
      %v1517 = vpack.c.b16 %v1500, %v1499
      %v1518 = vpack.c.b16 %v1502, %v1501
      %1519 = vrot.lane.b32.xlu0 %v1503, 16
      %v1520 = vpop.permute.xlu0 %1519
      %1521 = vrot.lane.b32.xlu0 %v1504, 16
      %v1522 = vpop.permute.xlu0 %1521
      %1523 = vrot.lane.b32.xlu0 %v1505, 16
      %v1524 = vpop.permute.xlu0 %1523
      %1525 = vrot.lane.b32.xlu0 %v1506, 16
      %v1526 = vpop.permute.xlu0 %1525
      %1527 = vrot.lane.b32.xlu0 %v1507, 16
      %v1528 = vpop.permute.xlu0 %1527
      %1529 = vrot.lane.b32.xlu0 %v1508, 16
      %v1530 = vpop.permute.xlu0 %1529
      %1531 = vrot.lane.b32.xlu0 %v1509, 16
      %v1532 = vpop.permute.xlu0 %1531
      %1533 = vrot.lane.b32.xlu0 %v1510, 16
      %v1534 = vpop.permute.xlu0 %1533
      %1535 = vrot.lane.b32.xlu0 %v1511, 16
      %v1536 = vpop.permute.xlu0 %1535
      %1537 = vrot.lane.b32.xlu0 %v1512, 16
      %v1538 = vpop.permute.xlu0 %1537
      %1539 = vrot.lane.b32.xlu0 %v1513, 16
      %v1540 = vpop.permute.xlu0 %1539
      %1541 = vrot.lane.b32.xlu0 %v1514, 16
      %v1542 = vpop.permute.xlu0 %1541
      %1543 = vrot.lane.b32.xlu0 %v1515, 16
      %v1544 = vpop.permute.xlu0 %1543
      %1545 = vrot.lane.b32.xlu0 %v1516, 16
      %v1546 = vpop.permute.xlu0 %1545
      %1547 = vrot.lane.b32.xlu0 %v1517, 16
      %v1548 = vpop.permute.xlu0 %1547
      %1549 = vrot.lane.b32.xlu0 %v1518, 16
      %v1550 = vpop.permute.xlu0 %1549
      %v1551 = vunpack.c.l.b16 %v1265
      %v1552 = vunpack.c.l.b16 %v1266
      %v1553 = vpack.c.b16 %v1552, %v1551
      %1554 = vrot.lane.b32.xlu0 %v1376, 24
      %v1555 = vpop.permute.xlu0 %1554
      %1556 = vrot.lane.b32.xlu0 %v1377, 24
      %v1557 = vpop.permute.xlu0 %1556
      %1558 = vrot.lane.b32.xlu0 %v1378, 24
      %v1559 = vpop.permute.xlu0 %1558
      %1560 = vrot.lane.b32.xlu0 %v1379, 24
      %v1561 = vpop.permute.xlu0 %1560
      %1562 = vrot.lane.b32.xlu0 %v1380, 24
      %v1563 = vpop.permute.xlu0 %1562
      %1564 = vrot.lane.b32.xlu0 %v1381, 24
      %v1565 = vpop.permute.xlu0 %1564
      %1566 = vrot.lane.b32.xlu0 %v1382, 24
      %v1567 = vpop.permute.xlu0 %1566
      %1568 = vrot.lane.b32.xlu0 %v1383, 24
      %v1569 = vpop.permute.xlu0 %1568
      %1570 = vrot.lane.b32.xlu0 %v1384, 24
      %v1571 = vpop.permute.xlu0 %1570
      %1572 = vrot.lane.b32.xlu0 %v1385, 24
      %v1573 = vpop.permute.xlu0 %1572
      %1574 = vrot.lane.b32.xlu0 %v1386, 24
      %v1575 = vpop.permute.xlu0 %1574
      %1576 = vrot.lane.b32.xlu0 %v1387, 24
      %v1577 = vpop.permute.xlu0 %1576
      %1578 = vrot.lane.b32.xlu0 %v1388, 24
      %v1579 = vpop.permute.xlu0 %1578
      %1580 = vrot.lane.b32.xlu0 %v1389, 24
      %v1581 = vpop.permute.xlu0 %1580
      %1582 = vrot.lane.b32.xlu0 %v1390, 24
      %v1583 = vpop.permute.xlu0 %1582
      %1584 = vrot.lane.b32.xlu0 %v1553, 24
      %v1585 = vpop.permute.xlu0 %1584
      %v1586 = vunpack.c.l.b16 %v1282
      %v1587 = vunpack.c.l.b16 %v1292
      %v1588 = vpack.c.b16 %v1587, %v1586
      %1589 = vrot.lane.b32.xlu0 %v1424, 32
      %v1590 = vpop.permute.xlu0 %1589
      %1591 = vrot.lane.b32.xlu0 %v1425, 32
      %v1592 = vpop.permute.xlu0 %1591
      %1593 = vrot.lane.b32.xlu0 %v1426, 32
      %v1594 = vpop.permute.xlu0 %1593
      %1595 = vrot.lane.b32.xlu0 %v1427, 32
      %v1596 = vpop.permute.xlu0 %1595
      %1597 = vrot.lane.b32.xlu0 %v1428, 32
      %v1598 = vpop.permute.xlu0 %1597
      %1599 = vrot.lane.b32.xlu0 %v1429, 32
      %v1600 = vpop.permute.xlu0 %1599
      %1601 = vrot.lane.b32.xlu0 %v1430, 32
      %v1602 = vpop.permute.xlu0 %1601
      %1603 = vrot.lane.b32.xlu0 %v1431, 32
      %v1604 = vpop.permute.xlu0 %1603
      %1605 = vrot.lane.b32.xlu0 %v1432, 32
      %v1606 = vpop.permute.xlu0 %1605
      %1607 = vrot.lane.b32.xlu0 %v1433, 32
      %v1608 = vpop.permute.xlu0 %1607
      %1609 = vrot.lane.b32.xlu0 %v1434, 32
      %v1610 = vpop.permute.xlu0 %1609
      %1611 = vrot.lane.b32.xlu0 %v1435, 32
      %v1612 = vpop.permute.xlu0 %1611
      %1613 = vrot.lane.b32.xlu0 %v1436, 32
      %v1614 = vpop.permute.xlu0 %1613
      %1615 = vrot.lane.b32.xlu0 %v1437, 32
      %v1616 = vpop.permute.xlu0 %1615
      %1617 = vrot.lane.b32.xlu0 %v1438, 32
      %v1618 = vpop.permute.xlu0 %1617
      %1619 = vrot.lane.b32.xlu0 %v1588, 32
      %v1620 = vpop.permute.xlu0 %1619
      %v1621 = vunpack.c.l.b16 %v1299
      %v1622 = vunpack.c.l.b16 %v1302
      %v1623 = vpack.c.b16 %v1622, %v1621
      %1624 = vrot.lane.b32.xlu0 %v1504, 40
      %v1625 = vpop.permute.xlu0 %1624
      %1626 = vrot.lane.b32.xlu0 %v1505, 40
      %v1627 = vpop.permute.xlu0 %1626
      %1628 = vrot.lane.b32.xlu0 %v1506, 40
      %v1629 = vpop.permute.xlu0 %1628
      %1630 = vrot.lane.b32.xlu0 %v1507, 40
      %v1631 = vpop.permute.xlu0 %1630
      %1632 = vrot.lane.b32.xlu0 %v1508, 40
      %v1633 = vpop.permute.xlu0 %1632
      %1634 = vrot.lane.b32.xlu0 %v1509, 40
      %v1635 = vpop.permute.xlu0 %1634
      %1636 = vrot.lane.b32.xlu0 %v1510, 40
      %v1637 = vpop.permute.xlu0 %1636
      %1638 = vrot.lane.b32.xlu0 %v1511, 40
      %v1639 = vpop.permute.xlu0 %1638
      %1640 = vrot.lane.b32.xlu0 %v1512, 40
      %v1641 = vpop.permute.xlu0 %1640
      %1642 = vrot.lane.b32.xlu0 %v1513, 40
      %v1643 = vpop.permute.xlu0 %1642
      %1644 = vrot.lane.b32.xlu0 %v1514, 40
      %v1645 = vpop.permute.xlu0 %1644
      %1646 = vrot.lane.b32.xlu0 %v1515, 40
      %v1647 = vpop.permute.xlu0 %1646
      %1648 = vrot.lane.b32.xlu0 %v1516, 40
      %v1649 = vpop.permute.xlu0 %1648
      %1650 = vrot.lane.b32.xlu0 %v1517, 40
      %v1651 = vpop.permute.xlu0 %1650
      %1652 = vrot.lane.b32.xlu0 %v1518, 40
      %v1653 = vpop.permute.xlu0 %1652
      %1654 = vrot.lane.b32.xlu0 %v1623, 40
      %v1655 = vpop.permute.xlu0 %1654
      %v1656 = vunpack.c.l.b16 %v1305
      %v1657 = vunpack.c.l.b16 %v1306
      %v1658 = vpack.c.b16 %v1657, %v1656
      %1659 = vrot.lane.b32.xlu0 %v1377, 48
      %v1660 = vpop.permute.xlu0 %1659
      %1661 = vrot.lane.b32.xlu0 %v1378, 48
      %v1662 = vpop.permute.xlu0 %1661
      %1663 = vrot.lane.b32.xlu0 %v1379, 48
      %v1664 = vpop.permute.xlu0 %1663
      %1665 = vrot.lane.b32.xlu0 %v1380, 48
      %v1666 = vpop.permute.xlu0 %1665
      %1667 = vrot.lane.b32.xlu0 %v1381, 48
      %v1668 = vpop.permute.xlu0 %1667
      %1669 = vrot.lane.b32.xlu0 %v1382, 48
      %v1670 = vpop.permute.xlu0 %1669
      %1671 = vrot.lane.b32.xlu0 %v1383, 48
      %v1672 = vpop.permute.xlu0 %1671
      %1673 = vrot.lane.b32.xlu0 %v1384, 48
      %v1674 = vpop.permute.xlu0 %1673
      %1675 = vrot.lane.b32.xlu0 %v1385, 48
      %v1676 = vpop.permute.xlu0 %1675
      %1677 = vrot.lane.b32.xlu0 %v1386, 48
      %v1678 = vpop.permute.xlu0 %1677
      %1679 = vrot.lane.b32.xlu0 %v1387, 48
      %v1680 = vpop.permute.xlu0 %1679
      %1681 = vrot.lane.b32.xlu0 %v1388, 48
      %v1682 = vpop.permute.xlu0 %1681
      %1683 = vrot.lane.b32.xlu0 %v1389, 48
      %v1684 = vpop.permute.xlu0 %1683
      %1685 = vrot.lane.b32.xlu0 %v1390, 48
      %v1686 = vpop.permute.xlu0 %1685
      %1687 = vrot.lane.b32.xlu0 %v1553, 48
      %v1688 = vpop.permute.xlu0 %1687
      %1689 = vrot.lane.b32.xlu0 %v1658, 48
      %v1690 = vpop.permute.xlu0 %1689
      %v1691 = vunpack.c.l.b16 %v1322
      %v1692 = vunpack.c.l.b16 %v1332
      %v1693 = vpack.c.b16 %v1692, %v1691
      %1694 = vrot.lane.b32.xlu0 %v1425, 56
      %v1695 = vpop.permute.xlu0 %1694
      %1696 = vrot.lane.b32.xlu0 %v1426, 56
      %v1697 = vpop.permute.xlu0 %1696
      %1698 = vrot.lane.b32.xlu0 %v1427, 56
      %v1699 = vpop.permute.xlu0 %1698
      %1700 = vrot.lane.b32.xlu0 %v1428, 56
      %v1701 = vpop.permute.xlu0 %1700
      %1702 = vrot.lane.b32.xlu0 %v1429, 56
      %v1703 = vpop.permute.xlu0 %1702
      %1704 = vrot.lane.b32.xlu0 %v1430, 56
      %v1705 = vpop.permute.xlu0 %1704
      %1706 = vrot.lane.b32.xlu0 %v1431, 56
      %v1707 = vpop.permute.xlu0 %1706
      %1708 = vrot.lane.b32.xlu0 %v1432, 56
      %v1709 = vpop.permute.xlu0 %1708
      %1710 = vrot.lane.b32.xlu0 %v1433, 56
      %v1711 = vpop.permute.xlu0 %1710
      %1712 = vrot.lane.b32.xlu0 %v1434, 56
      %v1713 = vpop.permute.xlu0 %1712
      %1714 = vrot.lane.b32.xlu0 %v1435, 56
      %v1715 = vpop.permute.xlu0 %1714
      %1716 = vrot.lane.b32.xlu0 %v1436, 56
      %v1717 = vpop.permute.xlu0 %1716
      %1718 = vrot.lane.b32.xlu0 %v1437, 56
      %v1719 = vpop.permute.xlu0 %1718
      %1720 = vrot.lane.b32.xlu0 %v1438, 56
      %v1721 = vpop.permute.xlu0 %1720
      %1722 = vrot.lane.b32.xlu0 %v1588, 56
      %v1723 = vpop.permute.xlu0 %1722
      %1724 = vrot.lane.b32.xlu0 %v1693, 56
      %v1725 = vpop.permute.xlu0 %1724
      %v1726 = vunpack.c.l.b16 %v1339
      %v1727 = vunpack.c.l.b16 %v1342
      %v1728 = vpack.c.b16 %v1727, %v1726
      %1729 = vrot.lane.b32.xlu0 %v1505, 64
      %v1730 = vpop.permute.xlu0 %1729
      %1731 = vrot.lane.b32.xlu0 %v1506, 64
      %v1732 = vpop.permute.xlu0 %1731
      %1733 = vrot.lane.b32.xlu0 %v1507, 64
      %v1734 = vpop.permute.xlu0 %1733
      %1735 = vrot.lane.b32.xlu0 %v1508, 64
      %v1736 = vpop.permute.xlu0 %1735
      %1737 = vrot.lane.b32.xlu0 %v1509, 64
      %v1738 = vpop.permute.xlu0 %1737
      %1739 = vrot.lane.b32.xlu0 %v1510, 64
      %v1740 = vpop.permute.xlu0 %1739
      %1741 = vrot.lane.b32.xlu0 %v1511, 64
      %v1742 = vpop.permute.xlu0 %1741
      %1743 = vrot.lane.b32.xlu0 %v1512, 64
      %v1744 = vpop.permute.xlu0 %1743
      %1745 = vrot.lane.b32.xlu0 %v1513, 64
      %v1746 = vpop.permute.xlu0 %1745
      %1747 = vrot.lane.b32.xlu0 %v1514, 64
      %v1748 = vpop.permute.xlu0 %1747
      %1749 = vrot.lane.b32.xlu0 %v1515, 64
      %v1750 = vpop.permute.xlu0 %1749
      %1751 = vrot.lane.b32.xlu0 %v1516, 64
      %v1752 = vpop.permute.xlu0 %1751
      %1753 = vrot.lane.b32.xlu0 %v1517, 64
      %v1754 = vpop.permute.xlu0 %1753
      %1755 = vrot.lane.b32.xlu0 %v1518, 64
      %v1756 = vpop.permute.xlu0 %1755
      %1757 = vrot.lane.b32.xlu0 %v1623, 64
      %v1758 = vpop.permute.xlu0 %1757
      %1759 = vrot.lane.b32.xlu0 %v1728, 64
      %v1760 = vpop.permute.xlu0 %1759
      %v1763 = vsel %vm202, %v1375, %v1440
      %v1766 = vsel %vm202, %v1376, %v1442
      %v1769 = vsel %vm202, %v1377, %v1444
      %v1772 = vsel %vm202, %v1378, %v1446
      %v1775 = vsel %vm202, %v1379, %v1448
      %v1778 = vsel %vm202, %v1380, %v1450
      %v1781 = vsel %vm202, %v1381, %v1452
      %v1784 = vsel %vm202, %v1382, %v1454
      %v1787 = vsel %vm202, %v1383, %v1456
      %v1790 = vsel %vm202, %v1384, %v1458
      %v1793 = vsel %vm202, %v1385, %v1460
      %v1796 = vsel %vm202, %v1386, %v1462
      %v1799 = vsel %vm202, %v1387, %v1464
      %v1802 = vsel %vm202, %v1388, %v1466
      %v1805 = vsel %vm202, %v1389, %v1468
      %v1808 = vsel %vm202, %v1390, %v1470
      %vm1809 = vcmask 130048
      %v1811 = vsel %vm1809, %v1763, %v1520
      %v1813 = vsel %vm1809, %v1766, %v1522
      %v1815 = vsel %vm1809, %v1769, %v1524
      %v1817 = vsel %vm1809, %v1772, %v1526
      %v1819 = vsel %vm1809, %v1775, %v1528
      %v1821 = vsel %vm1809, %v1778, %v1530
      %v1823 = vsel %vm1809, %v1781, %v1532
      %v1825 = vsel %vm1809, %v1784, %v1534
      %v1827 = vsel %vm1809, %v1787, %v1536
      %v1829 = vsel %vm1809, %v1790, %v1538
      %v1831 = vsel %vm1809, %v1793, %v1540
      %v1833 = vsel %vm1809, %v1796, %v1542
      %v1835 = vsel %vm1809, %v1799, %v1544
      %v1837 = vsel %vm1809, %v1802, %v1546
      %v1839 = vsel %vm1809, %v1805, %v1548
      %v1841 = vsel %vm1809, %v1808, %v1550
      %vm1842 = vcmask 195584
      %v1844 = vsel %vm1842, %v1811, %v1555
      %v1846 = vsel %vm1842, %v1813, %v1557
      %v1848 = vsel %vm1842, %v1815, %v1559
      %v1850 = vsel %vm1842, %v1817, %v1561
      %v1852 = vsel %vm1842, %v1819, %v1563
      %v1854 = vsel %vm1842, %v1821, %v1565
      %v1856 = vsel %vm1842, %v1823, %v1567
      %v1858 = vsel %vm1842, %v1825, %v1569
      %v1860 = vsel %vm1842, %v1827, %v1571
      %v1862 = vsel %vm1842, %v1829, %v1573
      %v1864 = vsel %vm1842, %v1831, %v1575
      %v1866 = vsel %vm1842, %v1833, %v1577
      %v1868 = vsel %vm1842, %v1835, %v1579
      %v1870 = vsel %vm1842, %v1837, %v1581
      %v1872 = vsel %vm1842, %v1839, %v1583
      %v1874 = vsel %vm1842, %v1841, %v1585
      %vm1875 = vcmask 261120
      %v1877 = vsel %vm1875, %v1844, %v1590
      %v1879 = vsel %vm1875, %v1846, %v1592
      %v1881 = vsel %vm1875, %v1848, %v1594
      %v1883 = vsel %vm1875, %v1850, %v1596
      %v1885 = vsel %vm1875, %v1852, %v1598
      %v1887 = vsel %vm1875, %v1854, %v1600
      %v1889 = vsel %vm1875, %v1856, %v1602
      %v1891 = vsel %vm1875, %v1858, %v1604
      %v1893 = vsel %vm1875, %v1860, %v1606
      %v1895 = vsel %vm1875, %v1862, %v1608
      %v1897 = vsel %vm1875, %v1864, %v1610
      %v1899 = vsel %vm1875, %v1866, %v1612
      %v1901 = vsel %vm1875, %v1868, %v1614
      %v1903 = vsel %vm1875, %v1870, %v1616
      %v1905 = vsel %vm1875, %v1872, %v1618
      %v1907 = vsel %vm1875, %v1874, %v1620
      %vm1908 = vcmask 326656
      %v1910 = vsel %vm1908, %v1877, %v1625
      %v1912 = vsel %vm1908, %v1879, %v1627
      %v1914 = vsel %vm1908, %v1881, %v1629
      %v1916 = vsel %vm1908, %v1883, %v1631
      %v1918 = vsel %vm1908, %v1885, %v1633
      %v1920 = vsel %vm1908, %v1887, %v1635
      %v1922 = vsel %vm1908, %v1889, %v1637
      %v1924 = vsel %vm1908, %v1891, %v1639
      %v1926 = vsel %vm1908, %v1893, %v1641
      %v1928 = vsel %vm1908, %v1895, %v1643
      %v1930 = vsel %vm1908, %v1897, %v1645
      %v1932 = vsel %vm1908, %v1899, %v1647
      %v1934 = vsel %vm1908, %v1901, %v1649
      %v1936 = vsel %vm1908, %v1903, %v1651
      %v1938 = vsel %vm1908, %v1905, %v1653
      %v1940 = vsel %vm1908, %v1907, %v1655
      %vm1941 = vcmask 392192
      %v1943 = vsel %vm1941, %v1910, %v1660
      %v1945 = vsel %vm1941, %v1912, %v1662
      %v1947 = vsel %vm1941, %v1914, %v1664
      %v1949 = vsel %vm1941, %v1916, %v1666
      %v1951 = vsel %vm1941, %v1918, %v1668
      %v1953 = vsel %vm1941, %v1920, %v1670
      %v1955 = vsel %vm1941, %v1922, %v1672
      %v1957 = vsel %vm1941, %v1924, %v1674
      %v1959 = vsel %vm1941, %v1926, %v1676
      %v1961 = vsel %vm1941, %v1928, %v1678
      %v1963 = vsel %vm1941, %v1930, %v1680
      %v1965 = vsel %vm1941, %v1932, %v1682
      %v1967 = vsel %vm1941, %v1934, %v1684
      %v1969 = vsel %vm1941, %v1936, %v1686
      %v1971 = vsel %vm1941, %v1938, %v1688
      %v1973 = vsel %vm1941, %v1940, %v1690
      %vm1974 = vcmask 457728
      %v1976 = vsel %vm1974, %v1943, %v1695
      %v1978 = vsel %vm1974, %v1945, %v1697
      %v1980 = vsel %vm1974, %v1947, %v1699
      %v1982 = vsel %vm1974, %v1949, %v1701
      %v1984 = vsel %vm1974, %v1951, %v1703
      %v1986 = vsel %vm1974, %v1953, %v1705
      %v1988 = vsel %vm1974, %v1955, %v1707
      %v1990 = vsel %vm1974, %v1957, %v1709
      %v1992 = vsel %vm1974, %v1959, %v1711
      %v1994 = vsel %vm1974, %v1961, %v1713
      %v1996 = vsel %vm1974, %v1963, %v1715
      %v1998 = vsel %vm1974, %v1965, %v1717
      %v2000 = vsel %vm1974, %v1967, %v1719
      %v2002 = vsel %vm1974, %v1969, %v1721
      %v2004 = vsel %vm1974, %v1971, %v1723
      %v2006 = vsel %vm1974, %v1973, %v1725
      %vm2007 = vcmask 523264
      %v2009 = vsel %vm2007, %v1976, %v1730
      %v2011 = vsel %vm2007, %v1978, %v1732
      %v2013 = vsel %vm2007, %v1980, %v1734
      %v2015 = vsel %vm2007, %v1982, %v1736
      %v2017 = vsel %vm2007, %v1984, %v1738
      %v2019 = vsel %vm2007, %v1986, %v1740
      %v2021 = vsel %vm2007, %v1988, %v1742
      %v2023 = vsel %vm2007, %v1990, %v1744
      %v2025 = vsel %vm2007, %v1992, %v1746
      %v2027 = vsel %vm2007, %v1994, %v1748
      %v2029 = vsel %vm2007, %v1996, %v1750
      %v2031 = vsel %vm2007, %v1998, %v1752
      %v2033 = vsel %vm2007, %v2000, %v1754
      %v2035 = vsel %vm2007, %v2002, %v1756
      %v2037 = vsel %vm2007, %v2004, %v1758
      %v2039 = vsel %vm2007, %v2006, %v1760
      %v2040 = vld [vmem:[%s1] sm:$0xf]
      %v2041 = vld [vmem:[%s1 + $0x4] sm:$0xf]
      %v2042 = vld [vmem:[%s1 + $0x8] sm:$0xf]
      %v2043 = vld [vmem:[%s1 + $0xc] sm:$0xf]
      %v2044 = vld [vmem:[%s1 + $0x10] sm:$0xf]
      %v2045 = vld [vmem:[%s1 + $0x14] sm:$0xf]
      %v2046 = vld [vmem:[%s1 + $0x18] sm:$0xf]
      %v2047 = vld [vmem:[%s1 + $0x1c] sm:$0xf]
      %v2048 = vld [vmem:[%s1 + $0x20] sm:$0xf]
      %v2058 = vunpack.c.l.b16 %v2040
      %v2059 = vunpack.c.l.b16 %v2041
      %v2060 = vunpack.c.l.b16 %v2042
      %v2061 = vunpack.c.l.b16 %v2043
      %v2062 = vunpack.c.l.b16 %v2044
      %v2063 = vunpack.c.l.b16 %v2045
      %v2064 = vunpack.c.l.b16 %v2046
      %v2065 = vunpack.c.l.b16 %v2047
      %v2066 = vunpack.c.l.b16 %v2048
      %v2067 = vpack.c.b16 %v2059, %v2058
      %v2068 = vpack.c.b16 %v2061, %v2060
      %v2069 = vpack.c.b16 %v2063, %v2062
      %v2070 = vpack.c.b16 %v2065, %v2064
      %v2071 = vpack.c.b16 %v2066, %v2066
      %vm2076 = vcmask 588800
      %v2077 = vsel %vm2076, %v2009, 0
      %v2079 = vsel %vm2076, %v2011, 0
      %v2081 = vsel %vm2076, %v2013, 0
      %v2083 = vsel %vm2076, %v2015, 0
      %v2085 = vsel %vm2076, %v2017, 0
      %v2087 = vsel %vm2076, %v2019, 0
      %v2089 = vsel %vm2076, %v2021, 0
      %v2091 = vsel %vm2076, %v2023, 0
      %v2093 = vsel %vm2076, %v2025, 0
      %v2095 = vsel %vm2076, %v2027, 0
      %v2097 = vsel %vm2076, %v2029, 0
      %v2099 = vsel %vm2076, %v2031, 0
      %v2101 = vsel %vm2076, %v2033, 0
      %v2103 = vsel %vm2076, %v2035, 0
      %v2105 = vsel %vm2076, %v2037, 0
      %v2107 = vsel %vm2076, %v2039, 0
      %v2110 = vsel %vm524, %v2071, 0
      %2112 = vmatpush.bf16.msra.mxu0 0
      %2113 = vmatpush.bf16.msra.mxu0 0
      %2114 = vmatpush.bf16.msra.mxu0 0
      %2115 = vmatpush.bf16.msra.mxu0 %v2110
      %2116 = vmatpush.bf16.msra.mxu0 %v2070
      %2117 = vmatpush.bf16.msra.mxu0 %v2069
      %2118 = vmatpush.bf16.msra.mxu0 %v2068
      %2119 = vmatpush.bf16.msra.mxu0 %v2067
      %2120 = vmatmul.bf16.gmra.mxu0 %v2077
      %v2121 = vpop.f32.mrf.mxu0
      %v2122 = vadd.f32 0.0, %v2121
      %v2123 = vpop.f32.mrf.mxu0
      %v2124 = vadd.f32 0.0, %v2123
      %2125 = vmatmul.bf16.gmra.mxu0 %v2079
      %v2126 = vpop.f32.mrf.mxu0
      %v2127 = vadd.f32 0.0, %v2126
      %v2128 = vpop.f32.mrf.mxu0
      %v2129 = vadd.f32 0.0, %v2128
      %2130 = vmatmul.bf16.gmra.mxu0 %v2081
      %v2131 = vpop.f32.mrf.mxu0
      %v2132 = vadd.f32 0.0, %v2131
      %v2133 = vpop.f32.mrf.mxu0
      %v2134 = vadd.f32 0.0, %v2133
      %2135 = vmatmul.bf16.gmra.mxu0 %v2083
      %v2136 = vpop.f32.mrf.mxu0
      %v2137 = vadd.f32 0.0, %v2136
      %v2138 = vpop.f32.mrf.mxu0
      %v2139 = vadd.f32 0.0, %v2138
      %2140 = vmatmul.bf16.gmra.mxu0 %v2085
      %v2141 = vpop.f32.mrf.mxu0
      %v2142 = vadd.f32 0.0, %v2141
      %v2143 = vpop.f32.mrf.mxu0
      %v2144 = vadd.f32 0.0, %v2143
      %2145 = vmatmul.bf16.gmra.mxu0 %v2087
      %v2146 = vpop.f32.mrf.mxu0
      %v2147 = vadd.f32 0.0, %v2146
      %v2148 = vpop.f32.mrf.mxu0
      %v2149 = vadd.f32 0.0, %v2148
      %2150 = vmatmul.bf16.gmra.mxu0 %v2089
      %v2151 = vpop.f32.mrf.mxu0
      %v2152 = vadd.f32 0.0, %v2151
      %v2153 = vpop.f32.mrf.mxu0
      %v2154 = vadd.f32 0.0, %v2153
      %2155 = vmatmul.bf16.gmra.mxu0 %v2091
      %v2156 = vpop.f32.mrf.mxu0
      %v2157 = vadd.f32 0.0, %v2156
      %v2158 = vpop.f32.mrf.mxu0
      %v2159 = vadd.f32 0.0, %v2158
      %2160 = vmatmul.bf16.gmra.mxu0 %v2093
      %v2161 = vpop.f32.mrf.mxu0
      %v2162 = vadd.f32 0.0, %v2161
      %v2163 = vpop.f32.mrf.mxu0
      %v2164 = vadd.f32 0.0, %v2163
      %2165 = vmatmul.bf16.gmra.mxu0 %v2095
      %v2166 = vpop.f32.mrf.mxu0
      %v2167 = vadd.f32 0.0, %v2166
      %v2168 = vpop.f32.mrf.mxu0
      %v2169 = vadd.f32 0.0, %v2168
      %2170 = vmatmul.bf16.gmra.mxu0 %v2097
      %v2171 = vpop.f32.mrf.mxu0
      %v2172 = vadd.f32 0.0, %v2171
      %v2173 = vpop.f32.mrf.mxu0
      %v2174 = vadd.f32 0.0, %v2173
      %2175 = vmatmul.bf16.gmra.mxu0 %v2099
      %v2176 = vpop.f32.mrf.mxu0
      %v2177 = vadd.f32 0.0, %v2176
      %v2178 = vpop.f32.mrf.mxu0
      %v2179 = vadd.f32 0.0, %v2178
      %2180 = vmatmul.bf16.gmra.mxu0 %v2101
      %v2181 = vpop.f32.mrf.mxu0
      %v2182 = vadd.f32 0.0, %v2181
      %v2183 = vpop.f32.mrf.mxu0
      %v2184 = vadd.f32 0.0, %v2183
      %2185 = vmatmul.bf16.gmra.mxu0 %v2103
      %v2186 = vpop.f32.mrf.mxu0
      %v2187 = vadd.f32 0.0, %v2186
      %v2188 = vpop.f32.mrf.mxu0
      %v2189 = vadd.f32 0.0, %v2188
      %2190 = vmatmul.bf16.gmra.mxu0 %v2105
      %v2191 = vpop.f32.mrf.mxu0
      %v2192 = vadd.f32 0.0, %v2191
      %v2193 = vpop.f32.mrf.mxu0
      %v2194 = vadd.f32 0.0, %v2193
      %2195 = vmatmul.bf16.gmra.mxu0 %v2107
      %v2196 = vpop.f32.mrf.mxu0
      %v2197 = vadd.f32 0.0, %v2196
      %v2198 = vpop.f32.mrf.mxu0
      %v2199 = vadd.f32 0.0, %v2198
      %2200 = vdwg.mxu0
      %v2201 = vsel %vm202, %v2122, 0.0
      %v2202 = vsel %vm202, %v2124, 0.0
      %v2203 = vadd.f32 %v2201, %v2202
      %v2204 = vsel %vm202, %v2127, 0.0
      %v2205 = vadd.f32 %v2203, %v2204
      %v2206 = vsel %vm202, %v2129, 0.0
      %v2207 = vadd.f32 %v2205, %v2206
      %v2208 = vsel %vm202, %v2132, 0.0
      %v2209 = vadd.f32 %v2207, %v2208
      %v2210 = vsel %vm202, %v2134, 0.0
      %v2211 = vadd.f32 %v2209, %v2210
      %v2212 = vsel %vm202, %v2137, 0.0
      %v2213 = vadd.f32 %v2211, %v2212
      %v2214 = vsel %vm202, %v2139, 0.0
      %v2215 = vadd.f32 %v2213, %v2214
      %v2216 = vsel %vm202, %v2142, 0.0
      %v2217 = vadd.f32 %v2215, %v2216
      %v2218 = vsel %vm202, %v2144, 0.0
      %v2219 = vadd.f32 %v2217, %v2218
      %v2220 = vsel %vm202, %v2147, 0.0
      %v2221 = vadd.f32 %v2219, %v2220
      %v2222 = vsel %vm202, %v2149, 0.0
      %v2223 = vadd.f32 %v2221, %v2222
      %v2224 = vsel %vm202, %v2152, 0.0
      %v2225 = vadd.f32 %v2223, %v2224
      %v2226 = vsel %vm202, %v2154, 0.0
      %v2227 = vadd.f32 %v2225, %v2226
      %v2228 = vsel %vm202, %v2157, 0.0
      %v2229 = vadd.f32 %v2227, %v2228
      %v2230 = vsel %vm202, %v2159, 0.0
      %v2231 = vadd.f32 %v2229, %v2230
      %v2232 = vsel %vm202, %v2162, 0.0
      %v2233 = vadd.f32 %v2231, %v2232
      %v2234 = vsel %vm202, %v2164, 0.0
      %v2235 = vadd.f32 %v2233, %v2234
      %v2236 = vsel %vm202, %v2167, 0.0
      %v2237 = vadd.f32 %v2235, %v2236
      %v2238 = vsel %vm202, %v2169, 0.0
      %v2239 = vadd.f32 %v2237, %v2238
      %v2240 = vsel %vm202, %v2172, 0.0
      %v2241 = vadd.f32 %v2239, %v2240
      %v2242 = vsel %vm202, %v2174, 0.0
      %v2243 = vadd.f32 %v2241, %v2242
      %v2244 = vsel %vm202, %v2177, 0.0
      %v2245 = vadd.f32 %v2243, %v2244
      %v2246 = vsel %vm202, %v2179, 0.0
      %v2247 = vadd.f32 %v2245, %v2246
      %v2248 = vsel %vm202, %v2182, 0.0
      %v2249 = vadd.f32 %v2247, %v2248
      %v2250 = vsel %vm202, %v2184, 0.0
      %v2251 = vadd.f32 %v2249, %v2250
      %v2252 = vsel %vm202, %v2187, 0.0
      %v2253 = vadd.f32 %v2251, %v2252
      %v2254 = vsel %vm202, %v2189, 0.0
      %v2255 = vadd.f32 %v2253, %v2254
      %v2256 = vsel %vm202, %v2192, 0.0
      %v2257 = vadd.f32 %v2255, %v2256
      %v2258 = vsel %vm202, %v2194, 0.0
      %v2259 = vadd.f32 %v2257, %v2258
      %v2260 = vsel %vm202, %v2197, 0.0
      %v2261 = vadd.f32 %v2259, %v2260
      %v2262 = vsel %vm202, %v2199, 0.0
      %v2263 = vadd.f32 %v2261, %v2262
      %v2264 = vrot.slane %v2263, 4
      %v2265 = vadd.f32 %v2263, %v2264
      %v2266 = vrot.slane %v2265, 2
      %v2267 = vadd.f32 %v2265, %v2266
      %v2268 = vrot.slane %v2267, 1
      %v2269 = vadd.f32 %v2267, %v2268
      %v2270 = vsel %vm202, %v538, 0.0
      %v2271 = vsel %vm202, %v540, 0.0
      %v2272 = vadd.f32 %v2270, %v2271
      %v2273 = vsel %vm202, %v543, 0.0
      %v2274 = vadd.f32 %v2272, %v2273
      %v2275 = vsel %vm202, %v545, 0.0
      %v2276 = vadd.f32 %v2274, %v2275
      %v2277 = vsel %vm202, %v548, 0.0
      %v2278 = vadd.f32 %v2276, %v2277
      %v2279 = vsel %vm202, %v550, 0.0
      %v2280 = vadd.f32 %v2278, %v2279
      %v2281 = vsel %vm202, %v553, 0.0
      %v2282 = vadd.f32 %v2280, %v2281
      %v2283 = vsel %vm202, %v555, 0.0
      %v2284 = vadd.f32 %v2282, %v2283
      %v2285 = vsel %vm202, %v558, 0.0
      %v2286 = vadd.f32 %v2284, %v2285
      %v2287 = vsel %vm202, %v560, 0.0
      %v2288 = vadd.f32 %v2286, %v2287
      %v2289 = vsel %vm202, %v563, 0.0
      %v2290 = vadd.f32 %v2288, %v2289
      %v2291 = vsel %vm202, %v565, 0.0
      %v2292 = vadd.f32 %v2290, %v2291
      %v2293 = vsel %vm202, %v568, 0.0
      %v2294 = vadd.f32 %v2292, %v2293
      %v2295 = vsel %vm202, %v570, 0.0
      %v2296 = vadd.f32 %v2294, %v2295
      %v2297 = vsel %vm202, %v573, 0.0
      %v2298 = vadd.f32 %v2296, %v2297
      %v2299 = vsel %vm202, %v575, 0.0
      %v2300 = vadd.f32 %v2298, %v2299
      %v2301 = vsel %vm202, %v578, 0.0
      %v2302 = vadd.f32 %v2300, %v2301
      %v2303 = vsel %vm202, %v580, 0.0
      %v2304 = vadd.f32 %v2302, %v2303
      %v2305 = vsel %vm202, %v583, 0.0
      %v2306 = vadd.f32 %v2304, %v2305
      %v2307 = vsel %vm202, %v585, 0.0
      %v2308 = vadd.f32 %v2306, %v2307
      %v2309 = vsel %vm202, %v588, 0.0
      %v2310 = vadd.f32 %v2308, %v2309
      %v2311 = vsel %vm202, %v590, 0.0
      %v2312 = vadd.f32 %v2310, %v2311
      %v2313 = vsel %vm202, %v593, 0.0
      %v2314 = vadd.f32 %v2312, %v2313
      %v2315 = vsel %vm202, %v595, 0.0
      %v2316 = vadd.f32 %v2314, %v2315
      %v2317 = vsel %vm202, %v598, 0.0
      %v2318 = vadd.f32 %v2316, %v2317
      %v2319 = vsel %vm202, %v600, 0.0
      %v2320 = vadd.f32 %v2318, %v2319
      %v2321 = vsel %vm202, %v603, 0.0
      %v2322 = vadd.f32 %v2320, %v2321
      %v2323 = vsel %vm202, %v605, 0.0
      %v2324 = vadd.f32 %v2322, %v2323
      %v2325 = vsel %vm202, %v608, 0.0
      %v2326 = vadd.f32 %v2324, %v2325
      %v2327 = vsel %vm202, %v610, 0.0
      %v2328 = vadd.f32 %v2326, %v2327
      %v2329 = vsel %vm202, %v613, 0.0
      %v2330 = vadd.f32 %v2328, %v2329
      %v2331 = vsel %vm202, %v615, 0.0
      %v2332 = vadd.f32 %v2330, %v2331
      %v2333 = vrot.slane %v2332, 4
      %v2334 = vadd.f32 %v2332, %v2333
      %v2335 = vrot.slane %v2334, 2
      %v2336 = vadd.f32 %v2334, %v2335
      %v2337 = vrot.slane %v2336, 1
      %v2338 = vadd.f32 %v2336, %v2337
      %2340 = vrot.lane.b32.xlu0 %v2338, 8
      %v2341 = vpop.permute.xlu0 %2340
      %v2343 = vsel %vm202, %v2269, %v2341
      %v2344 = vmul.f32 %v2122, %v2122
      %v2345 = vmul.f32 %v2124, %v2124
      %v2346 = vmul.f32 %v2127, %v2127
      %v2347 = vmul.f32 %v2129, %v2129
      %v2348 = vmul.f32 %v2132, %v2132
      %v2349 = vmul.f32 %v2134, %v2134
      %v2350 = vmul.f32 %v2137, %v2137
      %v2351 = vmul.f32 %v2139, %v2139
      %v2352 = vmul.f32 %v2142, %v2142
      %v2353 = vmul.f32 %v2144, %v2144
      %v2354 = vmul.f32 %v2147, %v2147
      %v2355 = vmul.f32 %v2149, %v2149
      %v2356 = vmul.f32 %v2152, %v2152
      %v2357 = vmul.f32 %v2154, %v2154
      %v2358 = vmul.f32 %v2157, %v2157
      %v2359 = vmul.f32 %v2159, %v2159
      %v2360 = vmul.f32 %v2162, %v2162
      %v2361 = vmul.f32 %v2164, %v2164
      %v2362 = vmul.f32 %v2167, %v2167
      %v2363 = vmul.f32 %v2169, %v2169
      %v2364 = vmul.f32 %v2172, %v2172
      %v2365 = vmul.f32 %v2174, %v2174
      %v2366 = vmul.f32 %v2177, %v2177
      %v2367 = vmul.f32 %v2179, %v2179
      %v2368 = vmul.f32 %v2182, %v2182
      %v2369 = vmul.f32 %v2184, %v2184
      %v2370 = vmul.f32 %v2187, %v2187
      %v2371 = vmul.f32 %v2189, %v2189
      %v2372 = vmul.f32 %v2192, %v2192
      %v2373 = vmul.f32 %v2194, %v2194
      %v2374 = vmul.f32 %v2197, %v2197
      %v2375 = vmul.f32 %v2199, %v2199
      %v2376 = vsel %vm202, %v2344, 0.0
      %v2377 = vsel %vm202, %v2345, 0.0
      %v2378 = vadd.f32 %v2376, %v2377
      %v2379 = vsel %vm202, %v2346, 0.0
      %v2380 = vadd.f32 %v2378, %v2379
      %v2381 = vsel %vm202, %v2347, 0.0
      %v2382 = vadd.f32 %v2380, %v2381
      %v2383 = vsel %vm202, %v2348, 0.0
      %v2384 = vadd.f32 %v2382, %v2383
      %v2385 = vsel %vm202, %v2349, 0.0
      %v2386 = vadd.f32 %v2384, %v2385
      %v2387 = vsel %vm202, %v2350, 0.0
      %v2388 = vadd.f32 %v2386, %v2387
      %v2389 = vsel %vm202, %v2351, 0.0
      %v2390 = vadd.f32 %v2388, %v2389
      %v2391 = vsel %vm202, %v2352, 0.0
      %v2392 = vadd.f32 %v2390, %v2391
      %v2393 = vsel %vm202, %v2353, 0.0
      %v2394 = vadd.f32 %v2392, %v2393
      %v2395 = vsel %vm202, %v2354, 0.0
      %v2396 = vadd.f32 %v2394, %v2395
      %v2397 = vsel %vm202, %v2355, 0.0
      %v2398 = vadd.f32 %v2396, %v2397
      %v2399 = vsel %vm202, %v2356, 0.0
      %v2400 = vadd.f32 %v2398, %v2399
      %v2401 = vsel %vm202, %v2357, 0.0
      %v2402 = vadd.f32 %v2400, %v2401
      %v2403 = vsel %vm202, %v2358, 0.0
      %v2404 = vadd.f32 %v2402, %v2403
      %v2405 = vsel %vm202, %v2359, 0.0
      %v2406 = vadd.f32 %v2404, %v2405
      %v2407 = vsel %vm202, %v2360, 0.0
      %v2408 = vadd.f32 %v2406, %v2407
      %v2409 = vsel %vm202, %v2361, 0.0
      %v2410 = vadd.f32 %v2408, %v2409
      %v2411 = vsel %vm202, %v2362, 0.0
      %v2412 = vadd.f32 %v2410, %v2411
      %v2413 = vsel %vm202, %v2363, 0.0
      %v2414 = vadd.f32 %v2412, %v2413
      %v2415 = vsel %vm202, %v2364, 0.0
      %v2416 = vadd.f32 %v2414, %v2415
      %v2417 = vsel %vm202, %v2365, 0.0
      %v2418 = vadd.f32 %v2416, %v2417
      %v2419 = vsel %vm202, %v2366, 0.0
      %v2420 = vadd.f32 %v2418, %v2419
      %v2421 = vsel %vm202, %v2367, 0.0
      %v2422 = vadd.f32 %v2420, %v2421
      %v2423 = vsel %vm202, %v2368, 0.0
      %v2424 = vadd.f32 %v2422, %v2423
      %v2425 = vsel %vm202, %v2369, 0.0
      %v2426 = vadd.f32 %v2424, %v2425
      %v2427 = vsel %vm202, %v2370, 0.0
      %v2428 = vadd.f32 %v2426, %v2427
      %v2429 = vsel %vm202, %v2371, 0.0
      %v2430 = vadd.f32 %v2428, %v2429
      %v2431 = vsel %vm202, %v2372, 0.0
      %v2432 = vadd.f32 %v2430, %v2431
      %v2433 = vsel %vm202, %v2373, 0.0
      %v2434 = vadd.f32 %v2432, %v2433
      %v2435 = vsel %vm202, %v2374, 0.0
      %v2436 = vadd.f32 %v2434, %v2435
      %v2437 = vsel %vm202, %v2375, 0.0
      %v2438 = vadd.f32 %v2436, %v2437
      %v2439 = vrot.slane %v2438, 4
      %v2440 = vadd.f32 %v2438, %v2439
      %v2441 = vrot.slane %v2440, 2
      %v2442 = vadd.f32 %v2440, %v2441
      %v2443 = vrot.slane %v2442, 1
      %v2444 = vadd.f32 %v2442, %v2443
      %v2445 = vmul.f32 %v538, %v538
      %v2446 = vmul.f32 %v540, %v540
      %v2447 = vmul.f32 %v543, %v543
      %v2448 = vmul.f32 %v545, %v545
      %v2449 = vmul.f32 %v548, %v548
      %v2450 = vmul.f32 %v550, %v550
      %v2451 = vmul.f32 %v553, %v553
      %v2452 = vmul.f32 %v555, %v555
      %v2453 = vmul.f32 %v558, %v558
      %v2454 = vmul.f32 %v560, %v560
      %v2455 = vmul.f32 %v563, %v563
      %v2456 = vmul.f32 %v565, %v565
      %v2457 = vmul.f32 %v568, %v568
      %v2458 = vmul.f32 %v570, %v570
      %v2459 = vmul.f32 %v573, %v573
      %v2460 = vmul.f32 %v575, %v575
      %v2461 = vmul.f32 %v578, %v578
      %v2462 = vmul.f32 %v580, %v580
      %v2463 = vmul.f32 %v583, %v583
      %v2464 = vmul.f32 %v585, %v585
      %v2465 = vmul.f32 %v588, %v588
      %v2466 = vmul.f32 %v590, %v590
      %v2467 = vmul.f32 %v593, %v593
      %v2468 = vmul.f32 %v595, %v595
      %v2469 = vmul.f32 %v598, %v598
      %v2470 = vmul.f32 %v600, %v600
      %v2471 = vmul.f32 %v603, %v603
      %v2472 = vmul.f32 %v605, %v605
      %v2473 = vmul.f32 %v608, %v608
      %v2474 = vmul.f32 %v610, %v610
      %v2475 = vmul.f32 %v613, %v613
      %v2476 = vmul.f32 %v615, %v615
      %v2477 = vsel %vm202, %v2445, 0.0
      %v2478 = vsel %vm202, %v2446, 0.0
      %v2479 = vadd.f32 %v2477, %v2478
      %v2480 = vsel %vm202, %v2447, 0.0
      %v2481 = vadd.f32 %v2479, %v2480
      %v2482 = vsel %vm202, %v2448, 0.0
      %v2483 = vadd.f32 %v2481, %v2482
      %v2484 = vsel %vm202, %v2449, 0.0
      %v2485 = vadd.f32 %v2483, %v2484
      %v2486 = vsel %vm202, %v2450, 0.0
      %v2487 = vadd.f32 %v2485, %v2486
      %v2488 = vsel %vm202, %v2451, 0.0
      %v2489 = vadd.f32 %v2487, %v2488
      %v2490 = vsel %vm202, %v2452, 0.0
      %v2491 = vadd.f32 %v2489, %v2490
      %v2492 = vsel %vm202, %v2453, 0.0
      %v2493 = vadd.f32 %v2491, %v2492
      %v2494 = vsel %vm202, %v2454, 0.0
      %v2495 = vadd.f32 %v2493, %v2494
      %v2496 = vsel %vm202, %v2455, 0.0
      %v2497 = vadd.f32 %v2495, %v2496
      %v2498 = vsel %vm202, %v2456, 0.0
      %v2499 = vadd.f32 %v2497, %v2498
      %v2500 = vsel %vm202, %v2457, 0.0
      %v2501 = vadd.f32 %v2499, %v2500
      %v2502 = vsel %vm202, %v2458, 0.0
      %v2503 = vadd.f32 %v2501, %v2502
      %v2504 = vsel %vm202, %v2459, 0.0
      %v2505 = vadd.f32 %v2503, %v2504
      %v2506 = vsel %vm202, %v2460, 0.0
      %v2507 = vadd.f32 %v2505, %v2506
      %v2508 = vsel %vm202, %v2461, 0.0
      %v2509 = vadd.f32 %v2507, %v2508
      %v2510 = vsel %vm202, %v2462, 0.0
      %v2511 = vadd.f32 %v2509, %v2510
      %v2512 = vsel %vm202, %v2463, 0.0
      %v2513 = vadd.f32 %v2511, %v2512
      %v2514 = vsel %vm202, %v2464, 0.0
      %v2515 = vadd.f32 %v2513, %v2514
      %v2516 = vsel %vm202, %v2465, 0.0
      %v2517 = vadd.f32 %v2515, %v2516
      %v2518 = vsel %vm202, %v2466, 0.0
      %v2519 = vadd.f32 %v2517, %v2518
      %v2520 = vsel %vm202, %v2467, 0.0
      %v2521 = vadd.f32 %v2519, %v2520
      %v2522 = vsel %vm202, %v2468, 0.0
      %v2523 = vadd.f32 %v2521, %v2522
      %v2524 = vsel %vm202, %v2469, 0.0
      %v2525 = vadd.f32 %v2523, %v2524
      %v2526 = vsel %vm202, %v2470, 0.0
      %v2527 = vadd.f32 %v2525, %v2526
      %v2528 = vsel %vm202, %v2471, 0.0
      %v2529 = vadd.f32 %v2527, %v2528
      %v2530 = vsel %vm202, %v2472, 0.0
      %v2531 = vadd.f32 %v2529, %v2530
      %v2532 = vsel %vm202, %v2473, 0.0
      %v2533 = vadd.f32 %v2531, %v2532
      %v2534 = vsel %vm202, %v2474, 0.0
      %v2535 = vadd.f32 %v2533, %v2534
      %v2536 = vsel %vm202, %v2475, 0.0
      %v2537 = vadd.f32 %v2535, %v2536
      %v2538 = vsel %vm202, %v2476, 0.0
      %v2539 = vadd.f32 %v2537, %v2538
      %v2540 = vrot.slane %v2539, 4
      %v2541 = vadd.f32 %v2539, %v2540
      %v2542 = vrot.slane %v2541, 2
      %v2543 = vadd.f32 %v2541, %v2542
      %v2544 = vrot.slane %v2543, 1
      %v2545 = vadd.f32 %v2543, %v2544
      %2547 = vrot.lane.b32.xlu0 %v2545, 8
      %v2548 = vpop.permute.xlu0 %2547
      %v2550 = vsel %vm202, %v2444, %v2548
      %v2552 = vrot.slane %v2550, 7
      %vm2554 = vcmask 1040384
      %v2555 = vsel %vm2554, %v2343, %v2552
      %vm2556 = vcmask 123904
      %2557 = vst.msk [vmem:[%s168] sm:$0x3] %vm2556, %v2555
      %p2558 = scmp.lt.s32.totalorder %s14, 1
      %s2559 = scalar_select %p2558, %s14, 1
      %s2560 = smul.addr %s2559, 2
      %s2561 = scalar_lea.vmem %s3, %s2560
      // Predicated region
      $region33: #{_lambda_.2} parent=31 // pred_check
        %p2562 = pneg %p100
      $region34: #{_lambda_.2} parent=31 // pred_check_branch
        %2564 = sbr.rel (%p2562) target = $region36
      $region35: #{_lambda_.2} parent=31 // pred_region
        _
      $region36: #{_lambda_.2} parent=31 // pred_fallthru
        _
    $region32: #{_lambda_.2} parent=5 // pred_fallthru
      _
    %p2565 = scmp.le.s32.totalorder 2, %s9
    // Predicated region
    $region37: #{_lambda_.2} parent=5 // pred_check
      %p2566 = pneg %p2565
    $region38: #{_lambda_.2} parent=5 // pred_check_branch
      %2568 = sbr.rel (%p2566) target = $region40
    $region39: #{_lambda_.2} parent=5 // pred_region
      %s2569 = ssub.s32 %s9, 2
      // Predicated region
      $region41: #{_lambda_.2} parent=39 // pred_check
        %p2570 = pneg %p106
      $region42: #{_lambda_.2} parent=39 // pred_check_branch
        %2572 = sbr.rel (%p2570) target = $region44
      $region43: #{_lambda_.2} parent=39 // pred_region
        %p2573 = scmp.lt.s32.totalorder %s15, 1
        %s2574 = scalar_select %p2573, %s15, 1
        %s2575 = smul.addr %s2574, 2
        %s2576 = scalar_lea.vmem %s3, %s2575
      $region44: #{_lambda_.2} parent=39 // pred_fallthru
        _
    $region40: #{_lambda_.2} parent=5 // pred_fallthru
      _
  $region6: #{_lambda_.2} parent=0 // loop_footer
    %s13 = sadd.s32 1, %s9
  $region7: #{_lambda_.2} parent=0 // loop_footer_branch
    %8 = sbr.rel target = $region3
  $region8: #{_lambda_.2} parent=0 // loop_exit
    _

// kernel: _lambda_.3
$region0: #{_lambda_.3}
  #allocation0 [shape = 'u32[]', space=smem, size = 0x4, offset = 0x4, fixed_abs, tag = 'smem constant byte address 0x4 - core index']
  #allocation1 [shape = 'u32[72,128]{1,0:T(1,128)}', space=vmem, size = 0x9000, scoped, tag = 'internal scratch']
  #allocation2 [shape = 'f32[1,18,18,8]{3,2,1,0:T(8,128)}', space=vmem, size = 0x36000, scoped, tag = 'scratch operand']
  %s0 = inlined_call_operand.vmem [shape: f32[2,16,16,8], index: 0, kind: input, shape index: {}]
  %s1 = inlined_call_operand.vmem [shape: bf16[72,8], index: 1, kind: input, shape index: {}]
  %s2 = inlined_call_operand.vmem [shape: bf16[8,8], index: 2, kind: input, shape index: {}]
  %s3 = inlined_call_operand.vmem [shape: f32[1,16,16,1], index: 3, kind: input, shape index: {}]
  %s4 = inlined_call_operand.vmem [shape: f32[1,18,18,1], index: 4, kind: input, shape index: {}]
  %s5 = inlined_call_operand.vmem [shape: f32[8,8], index: 5, kind: input, shape index: {}]
  %s6 = inlined_call_operand.vmem [shape: f32[2,16,16,8], index: 6, kind: output, shape index: {}]
  %s7 = sld [smem:[#allocation0]]
  $region57: #{_lambda_.3} parent=0
    _
  %s9 = ssub.s32 1, %s7
  %s10 = scalar_select 0, %s9, %s7
  loop: start=0, step=1, limit=4
  $region2: #{_lambda_.3} parent=0 // loop_pre_header
    _
  $region3: #{_lambda_.3} parent=0 // loop_header
    %s12 = sphi 0, %s16
    %p13 = scmp.ge.s32.totalorder %s12, 4
    %s22 = sphi 0, %s24
    %s25 = sphi 0, %s22
    %s26 = sphi 0, %s25
    %s42 = sphi 0, %s26
    %s46 = sphi 0, %s46
    %s48 = sphi 0, %s46
    %s49 = sphi 0, %s48
    %s63 = sphi 0, %s49
    %s67 = sphi 0, %s67
    %s69 = sphi 0, %s67
    %s70 = sphi 0, %s69
    %s84 = sphi 0, %s70
    %s88 = sphi 0, %s88
    %s90 = sphi 0, %s88
    %s91 = sphi 0, %s90
    %s105 = sphi 0, %s91
    %s109 = sphi 0, %s109
    %s111 = sphi 0, %s109
    %s112 = sphi 0, %s111
    %s126 = sphi 0, %s112
    %s130 = sphi 0, %s130
    %s132 = sphi 0, %s130
    %s133 = sphi 0, %s132
    %s147 = sphi 0, %s133
    %s153 = sphi 0, %s155
    %s156 = sphi 0, %s153
    %s157 = sphi 0, %s156
    %s173 = sphi 0, %s157
  $region4: #{_lambda_.3} parent=0 // loop_header_branch
    %15 = sbr.rel (%p13) target = $region8
  $region5: #{_lambda_.3} parent=0 // loop_body
    %s17 = ssub.s32 %s12, 1
    %s18 = ssub.s32 %s12, 2
    %s19 = sadd.s32 %s12, 1
    %s20 = ssub.s32 %s12, %s19
    %p21 = scmp.eq.s32.totalorder %s20, 0
    %s23 = sadd.s32 %s22, 1
    %s24 = scalar_select %p21, %s22, %s23
    %p27 = pneg %p21
    %p28 = scmp.eq.s32.totalorder %s12, 1
    %p29 = por %p27, %p28
    %p30 = scmp.ne.s32.totalorder %s22, %s25
    %p31 = scmp.eq.s32.totalorder %s12, 0
    %p32 = por %p30, %p31
    %p33 = scmp.ne.s32.totalorder %s22, %s25
    %p34 = scmp.eq.s32.totalorder %s17, 1
    %p35 = por %p33, %p34
    %p36 = scmp.ne.s32.totalorder %s25, %s26
    %p37 = scmp.eq.s32.totalorder %s17, 0
    %p38 = por %p36, %p37
    %p39 = scmp.ne.s32.totalorder %s25, %s26
    %p40 = scmp.eq.s32.totalorder %s18, 1
    %p41 = por %p39, %p40
    %p43 = scmp.ne.s32.totalorder %s26, %s42
    %p44 = scmp.eq.s32.totalorder %s18, 0
    %p45 = por %p43, %p44
    %s47 = sadd.s32 %s46, 1
    %p50 = scmp.eq.s32.totalorder %s12, 1
    %p51 = scmp.ne.s32.totalorder %s46, %s48
    %p52 = scmp.eq.s32.totalorder %s12, 0
    %p53 = por %p51, %p52
    %p54 = scmp.ne.s32.totalorder %s46, %s48
    %p55 = scmp.eq.s32.totalorder %s17, 1
    %p56 = por %p54, %p55
    %p57 = scmp.ne.s32.totalorder %s48, %s49
    %p58 = scmp.eq.s32.totalorder %s17, 0
    %p59 = por %p57, %p58
    %p60 = scmp.ne.s32.totalorder %s48, %s49
    %p61 = scmp.eq.s32.totalorder %s18, 1
    %p62 = por %p60, %p61
    %p64 = scmp.ne.s32.totalorder %s49, %s63
    %p65 = scmp.eq.s32.totalorder %s18, 0
    %p66 = por %p64, %p65
    %s68 = sadd.s32 %s67, 1
    %p71 = scmp.eq.s32.totalorder %s12, 1
    %p72 = scmp.ne.s32.totalorder %s67, %s69
    %p73 = scmp.eq.s32.totalorder %s12, 0
    %p74 = por %p72, %p73
    %p75 = scmp.ne.s32.totalorder %s67, %s69
    %p76 = scmp.eq.s32.totalorder %s17, 1
    %p77 = por %p75, %p76
    %p78 = scmp.ne.s32.totalorder %s69, %s70
    %p79 = scmp.eq.s32.totalorder %s17, 0
    %p80 = por %p78, %p79
    %p81 = scmp.ne.s32.totalorder %s69, %s70
    %p82 = scmp.eq.s32.totalorder %s18, 1
    %p83 = por %p81, %p82
    %p85 = scmp.ne.s32.totalorder %s70, %s84
    %p86 = scmp.eq.s32.totalorder %s18, 0
    %p87 = por %p85, %p86
    %s89 = sadd.s32 %s88, 1
    %p92 = scmp.eq.s32.totalorder %s12, 1
    %p93 = scmp.ne.s32.totalorder %s88, %s90
    %p94 = scmp.eq.s32.totalorder %s12, 0
    %p95 = por %p93, %p94
    %p96 = scmp.ne.s32.totalorder %s88, %s90
    %p97 = scmp.eq.s32.totalorder %s17, 1
    %p98 = por %p96, %p97
    %p99 = scmp.ne.s32.totalorder %s90, %s91
    %p100 = scmp.eq.s32.totalorder %s17, 0
    %p101 = por %p99, %p100
    %p102 = scmp.ne.s32.totalorder %s90, %s91
    %p103 = scmp.eq.s32.totalorder %s18, 1
    %p104 = por %p102, %p103
    %p106 = scmp.ne.s32.totalorder %s91, %s105
    %p107 = scmp.eq.s32.totalorder %s18, 0
    %p108 = por %p106, %p107
    %s110 = sadd.s32 %s109, 1
    %p113 = scmp.eq.s32.totalorder %s12, 1
    %p114 = scmp.ne.s32.totalorder %s109, %s111
    %p115 = scmp.eq.s32.totalorder %s12, 0
    %p116 = por %p114, %p115
    %p117 = scmp.ne.s32.totalorder %s109, %s111
    %p118 = scmp.eq.s32.totalorder %s17, 1
    %p119 = por %p117, %p118
    %p120 = scmp.ne.s32.totalorder %s111, %s112
    %p121 = scmp.eq.s32.totalorder %s17, 0
    %p122 = por %p120, %p121
    %p123 = scmp.ne.s32.totalorder %s111, %s112
    %p124 = scmp.eq.s32.totalorder %s18, 1
    %p125 = por %p123, %p124
    %p127 = scmp.ne.s32.totalorder %s112, %s126
    %p128 = scmp.eq.s32.totalorder %s18, 0
    %p129 = por %p127, %p128
    %s131 = sadd.s32 %s130, 1
    %p134 = scmp.eq.s32.totalorder %s12, 1
    %p135 = scmp.ne.s32.totalorder %s130, %s132
    %p136 = scmp.eq.s32.totalorder %s12, 0
    %p137 = por %p135, %p136
    %p138 = scmp.ne.s32.totalorder %s130, %s132
    %p139 = scmp.eq.s32.totalorder %s17, 1
    %p140 = por %p138, %p139
    %p141 = scmp.ne.s32.totalorder %s132, %s133
    %p142 = scmp.eq.s32.totalorder %s17, 0
    %p143 = por %p141, %p142
    %p144 = scmp.ne.s32.totalorder %s132, %s133
    %p145 = scmp.eq.s32.totalorder %s18, 1
    %p146 = por %p144, %p145
    %p148 = scmp.ne.s32.totalorder %s133, %s147
    %p149 = scmp.eq.s32.totalorder %s18, 0
    %p150 = por %p148, %p149
    %s151 = ssub.s32 %s12, %s19
    %p152 = scmp.eq.s32.totalorder %s151, 0
    %s154 = sadd.s32 %s153, 1
    %s155 = scalar_select %p152, %s153, %s154
    %p158 = pneg %p152
    %p159 = scmp.eq.s32.totalorder %s12, 1
    %p160 = por %p158, %p159
    %p161 = scmp.ne.s32.totalorder %s153, %s156
    %p162 = scmp.eq.s32.totalorder %s12, 0
    %p163 = por %p161, %p162
    %p164 = scmp.ne.s32.totalorder %s153, %s156
    %p165 = scmp.eq.s32.totalorder %s17, 1
    %p166 = por %p164, %p165
    %p167 = scmp.ne.s32.totalorder %s156, %s157
    %p168 = scmp.eq.s32.totalorder %s17, 0
    %p169 = por %p167, %p168
    %p170 = scmp.ne.s32.totalorder %s156, %s157
    %p171 = scmp.eq.s32.totalorder %s18, 1
    %p172 = por %p170, %p171
    %p174 = scmp.ne.s32.totalorder %s157, %s173
    %p175 = scmp.eq.s32.totalorder %s18, 0
    %p176 = por %p174, %p175
    %p177 = scmp.le.s32.totalorder 1, %s12
    %p178 = scmp.lt.s32.totalorder %s12, 3
    %p179 = pnand %p177, %p178
    %p180 = pneg %p179
    // Predicated region
    $region9: #{_lambda_.3} parent=5 // pred_check
      _
    $region10: #{_lambda_.3} parent=5 // pred_check_branch
      %182 = sbr.rel (%p179) target = $region12
    $region11: #{_lambda_.3} parent=5 // pred_region
      %s183 = ssub.s32 %s12, 1
      // Predicated region
      $region13: #{_lambda_.3} parent=11 // pred_check
        %p184 = pneg %p59
      $region14: #{_lambda_.3} parent=11 // pred_check_branch
        %186 = sbr.rel (%p184) target = $region16
      $region15: #{_lambda_.3} parent=11 // pred_region
        _
      $region16: #{_lambda_.3} parent=11 // pred_fallthru
        _
      // Predicated region
      $region17: #{_lambda_.3} parent=11 // pred_check
        %p187 = pneg %p80
      $region18: #{_lambda_.3} parent=11 // pred_check_branch
        %189 = sbr.rel (%p187) target = $region20
      $region19: #{_lambda_.3} parent=11 // pred_region
        _
      $region20: #{_lambda_.3} parent=11 // pred_fallthru
        _
      // Predicated region
      $region21: #{_lambda_.3} parent=11 // pred_check
        %p190 = pneg %p101
      $region22: #{_lambda_.3} parent=11 // pred_check_branch
        %192 = sbr.rel (%p190) target = $region24
      $region23: #{_lambda_.3} parent=11 // pred_region
        _
      $region24: #{_lambda_.3} parent=11 // pred_fallthru
        _
      // Predicated region
      $region25: #{_lambda_.3} parent=11 // pred_check
        %p193 = pneg %p122
      $region26: #{_lambda_.3} parent=11 // pred_check_branch
        %195 = sbr.rel (%p193) target = $region28
      $region27: #{_lambda_.3} parent=11 // pred_region
        _
      $region28: #{_lambda_.3} parent=11 // pred_fallthru
        _
      // Predicated region
      $region29: #{_lambda_.3} parent=11 // pred_check
        %p196 = pneg %p143
      $region30: #{_lambda_.3} parent=11 // pred_check_branch
        %198 = sbr.rel (%p196) target = $region32
      $region31: #{_lambda_.3} parent=11 // pred_region
        _
      $region32: #{_lambda_.3} parent=11 // pred_fallthru
        _
    $region12: #{_lambda_.3} parent=5 // pred_fallthru
      _
    %p199 = scmp.lt.s32.totalorder %s12, 2
    // Predicated region
    $region33: #{_lambda_.3} parent=5 // pred_check
      %p200 = pneg %p199
    $region34: #{_lambda_.3} parent=5 // pred_check_branch
      %202 = sbr.rel (%p200) target = $region36
    $region35: #{_lambda_.3} parent=5 // pred_region
      // Predicated region
      $region37: #{_lambda_.3} parent=35 // pred_check
        %p203 = pneg %p32
      $region38: #{_lambda_.3} parent=35 // pred_check_branch
        %205 = sbr.rel (%p203) target = $region40
      $region39: #{_lambda_.3} parent=35 // pred_region
        %p206 = scmp.lt.s32.totalorder %s12, 1
        %s207 = scalar_select %p206, %s12, 1
        %s208 = smul.addr %s207, 32
        %s209 = smul.addr %s208, 8
        %s210 = scalar_lea.vmem %s0, %s209
      $region40: #{_lambda_.3} parent=35 // pred_fallthru
        _
    $region36: #{_lambda_.3} parent=5 // pred_fallthru
      _
    %p211 = scmp.le.s32.totalorder 1, %s12
    %p212 = scmp.lt.s32.totalorder %s12, 3
    %p213 = pnand %p211, %p212
    %p214 = pneg %p213
    // Predicated region
    $region41: #{_lambda_.3} parent=5 // pred_check
      _
    $region42: #{_lambda_.3} parent=5 // pred_check_branch
      %216 = sbr.rel (%p213) target = $region44
    $region43: #{_lambda_.3} parent=5 // pred_region
      %s217 = ssub.s32 %s12, 1
      %p218 = scmp.lt.s32.totalorder %s17, 1
      %s219 = scalar_select %p218, %s17, 1
      %s220 = smul.addr %s219, 32
      %s221 = smul.addr %s220, 8
      %s222 = scalar_lea.vmem %s0, %s221
      %p223 = pneg %p38
      %p224 = pneg %p35
      %p225 = pneg %p59
      %p226 = pneg %p56
      %p227 = pneg %p80
      %p228 = pneg %p77
      %p229 = pneg %p101
      %p230 = pneg %p98
      %p231 = pneg %p122
      %p232 = pneg %p119
      %p233 = pneg %p143
      %p234 = pneg %p140
      %p235 = pneg %p169
      %p236 = pneg %p166
      %p237 = scmp.lt.s32.totalorder %s17, 1
      %s238 = scalar_select %p237, %s17, 1
      %s239 = smul.addr %s238, 32
      %s240 = smul.addr %s239, 8
      %s241 = scalar_lea.vmem %s6, %s240
      %p242 = scmp.lt.s32.totalorder %s17, 1
      %s243 = scalar_select %p242, %s17, 1
      %s244 = smul.addr %s243, 32
      %s245 = smul.addr %s244, 8
      %s246 = scalar_lea.vmem %s0, %s245
      %p247 = scmp.lt.s32.totalorder %s17, 1
      %s248 = scalar_select %p247, %s17, 1
      %s249 = smul.addr %s248, 32
      %s250 = smul.addr %s249, 8
      %s251 = scalar_lea.vmem %s6, %s250
      %v253 = vld [vmem:[%s246] sm:$0xff]
      %v254 = vld [vmem:[%s246 + $0x8] sm:$0xff]
      %v255 = vld [vmem:[%s246 + $0x10] sm:$0xff]
      %v256 = vld [vmem:[%s246 + $0x18] sm:$0xff]
      %v257 = vld [vmem:[%s246 + $0x20] sm:$0xff]
      %v258 = vld [vmem:[%s246 + $0x28] sm:$0xff]
      %v259 = vld [vmem:[%s246 + $0x30] sm:$0xff]
      %v260 = vld [vmem:[%s246 + $0x38] sm:$0xff]
      %v261 = vld [vmem:[%s246 + $0x40] sm:$0xff]
      %v262 = vld [vmem:[%s246 + $0x48] sm:$0xff]
      %v263 = vld [vmem:[%s246 + $0x50] sm:$0xff]
      %v264 = vld [vmem:[%s246 + $0x58] sm:$0xff]
      %v265 = vld [vmem:[%s246 + $0x60] sm:$0xff]
      %v266 = vld [vmem:[%s246 + $0x68] sm:$0xff]
      %v267 = vld [vmem:[%s246 + $0x70] sm:$0xff]
      %v268 = vld [vmem:[%s246 + $0x78] sm:$0xff]
      %v269 = vld [vmem:[%s246 + $0x80] sm:$0xff]
      %v270 = vld [vmem:[%s246 + $0x88] sm:$0xff]
      %v271 = vld [vmem:[%s246 + $0x90] sm:$0xff]
      %v272 = vld [vmem:[%s246 + $0x98] sm:$0xff]
      %v273 = vld [vmem:[%s246 + $0xa0] sm:$0xff]
      %v274 = vld [vmem:[%s246 + $0xa8] sm:$0xff]
      %v275 = vld [vmem:[%s246 + $0xb0] sm:$0xff]
      %v276 = vld [vmem:[%s246 + $0xb8] sm:$0xff]
      %v277 = vld [vmem:[%s246 + $0xc0] sm:$0xff]
      %v278 = vld [vmem:[%s246 + $0xc8] sm:$0xff]
      %v279 = vld [vmem:[%s246 + $0xd0] sm:$0xff]
      %v280 = vld [vmem:[%s246 + $0xd8] sm:$0xff]
      %v281 = vld [vmem:[%s246 + $0xe0] sm:$0xff]
      %v282 = vld [vmem:[%s246 + $0xe8] sm:$0xff]
      %v283 = vld [vmem:[%s246 + $0xf0] sm:$0xff]
      %v284 = vld [vmem:[%s246 + $0xf8] sm:$0xff]
      %vm285 = vcmask 64512
      %286 = vst.msk [vmem:[#allocation2] sm:$0xff] %vm285, 0.0
      %287 = vst.msk [vmem:[#allocation2 + $0x8] sm:$0xff] %vm285, 0.0
      %vm288 = vcmask 58368
      %289 = vst.msk [vmem:[#allocation2 + $0x10] sm:$0x3] %vm288, 0.0
      %s290 = scalar_lea.vmem [#allocation2], 408
      %291 = vst.msk [vmem:[%s290] sm:$0xff] %vm285, 0.0
      %292 = vst.msk [vmem:[%s290 + $0x8] sm:$0xff] %vm285, 0.0
      %293 = vst.msk [vmem:[%s290 + $0x10] sm:$0x3] %vm288, 0.0
      %s294 = scalar_lea.vmem [#allocation2], 24
      %vm295 = vcmask 57344
      %296 = vst.msk [vmem:[%s294] sm:$0x1] %vm295, 0.0
      %297 = vst.msk [vmem:[%s294 + $0x18] sm:$0x1] %vm295, 0.0
      %298 = vst.msk [vmem:[%s294 + $0x30] sm:$0x1] %vm295, 0.0
      %299 = vst.msk [vmem:[%s294 + $0x48] sm:$0x1] %vm295, 0.0
      %300 = vst.msk [vmem:[%s294 + $0x60] sm:$0x1] %vm295, 0.0
      %301 = vst.msk [vmem:[%s294 + $0x78] sm:$0x1] %vm295, 0.0
      %302 = vst.msk [vmem:[%s294 + $0x90] sm:$0x1] %vm295, 0.0
      %303 = vst.msk [vmem:[%s294 + $0xa8] sm:$0x1] %vm295, 0.0
      %304 = vst.msk [vmem:[%s294 + $0xc0] sm:$0x1] %vm295, 0.0
      %305 = vst.msk [vmem:[%s294 + $0xd8] sm:$0x1] %vm295, 0.0
      %306 = vst.msk [vmem:[%s294 + $0xf0] sm:$0x1] %vm295, 0.0
      %307 = vst.msk [vmem:[%s294 + $0x108] sm:$0x1] %vm295, 0.0
      %308 = vst.msk [vmem:[%s294 + $0x120] sm:$0x1] %vm295, 0.0
      %309 = vst.msk [vmem:[%s294 + $0x138] sm:$0x1] %vm295, 0.0
      %310 = vst.msk [vmem:[%s294 + $0x150] sm:$0x1] %vm295, 0.0
      %311 = vst.msk [vmem:[%s294 + $0x168] sm:$0x1] %vm295, 0.0
      %312 = vst.msk [vmem:[%s294 + $0x11] sm:$0x1] %vm295, 0.0
      %313 = vst.msk [vmem:[%s294 + $0x29] sm:$0x1] %vm295, 0.0
      %314 = vst.msk [vmem:[%s294 + $0x41] sm:$0x1] %vm295, 0.0
      %315 = vst.msk [vmem:[%s294 + $0x59] sm:$0x1] %vm295, 0.0
      %316 = vst.msk [vmem:[%s294 + $0x71] sm:$0x1] %vm295, 0.0
      %317 = vst.msk [vmem:[%s294 + $0x89] sm:$0x1] %vm295, 0.0
      %318 = vst.msk [vmem:[%s294 + $0xa1] sm:$0x1] %vm295, 0.0
      %319 = vst.msk [vmem:[%s294 + $0xb9] sm:$0x1] %vm295, 0.0
      %320 = vst.msk [vmem:[%s294 + $0xd1] sm:$0x1] %vm295, 0.0
      %321 = vst.msk [vmem:[%s294 + $0xe9] sm:$0x1] %vm295, 0.0
      %322 = vst.msk [vmem:[%s294 + $0x101] sm:$0x1] %vm295, 0.0
      %323 = vst.msk [vmem:[%s294 + $0x119] sm:$0x1] %vm295, 0.0
      %324 = vst.msk [vmem:[%s294 + $0x131] sm:$0x1] %vm295, 0.0
      %325 = vst.msk [vmem:[%s294 + $0x149] sm:$0x1] %vm295, 0.0
      %326 = vst.msk [vmem:[%s294 + $0x161] sm:$0x1] %vm295, 0.0
      %327 = vst.msk [vmem:[%s294 + $0x179] sm:$0x1] %vm295, 0.0
      %328 = vst.msk [vmem:[%s294 + $0x1] sm:$0xff] %vm285, %v253
      %329 = vst.msk [vmem:[%s294 + $0x9] sm:$0xff] %vm285, %v254
      %330 = vst.msk [vmem:[%s294 + $0x19] sm:$0xff] %vm285, %v255
      %331 = vst.msk [vmem:[%s294 + $0x21] sm:$0xff] %vm285, %v256
      %332 = vst.msk [vmem:[%s294 + $0x31] sm:$0xff] %vm285, %v257
      %333 = vst.msk [vmem:[%s294 + $0x39] sm:$0xff] %vm285, %v258
      %334 = vst.msk [vmem:[%s294 + $0x49] sm:$0xff] %vm285, %v259
      %335 = vst.msk [vmem:[%s294 + $0x51] sm:$0xff] %vm285, %v260
      %336 = vst.msk [vmem:[%s294 + $0x61] sm:$0xff] %vm285, %v261
      %337 = vst.msk [vmem:[%s294 + $0x69] sm:$0xff] %vm285, %v262
      %338 = vst.msk [vmem:[%s294 + $0x79] sm:$0xff] %vm285, %v263
      %339 = vst.msk [vmem:[%s294 + $0x81] sm:$0xff] %vm285, %v264
      %340 = vst.msk [vmem:[%s294 + $0x91] sm:$0xff] %vm285, %v265
      %341 = vst.msk [vmem:[%s294 + $0x99] sm:$0xff] %vm285, %v266
      %342 = vst.msk [vmem:[%s294 + $0xa9] sm:$0xff] %vm285, %v267
      %343 = vst.msk [vmem:[%s294 + $0xb1] sm:$0xff] %vm285, %v268
      %344 = vst.msk [vmem:[%s294 + $0xc1] sm:$0xff] %vm285, %v269
      %345 = vst.msk [vmem:[%s294 + $0xc9] sm:$0xff] %vm285, %v270
      %346 = vst.msk [vmem:[%s294 + $0xd9] sm:$0xff] %vm285, %v271
      %347 = vst.msk [vmem:[%s294 + $0xe1] sm:$0xff] %vm285, %v272
      %348 = vst.msk [vmem:[%s294 + $0xf1] sm:$0xff] %vm285, %v273
      %349 = vst.msk [vmem:[%s294 + $0xf9] sm:$0xff] %vm285, %v274
      %350 = vst.msk [vmem:[%s294 + $0x109] sm:$0xff] %vm285, %v275
      %351 = vst.msk [vmem:[%s294 + $0x111] sm:$0xff] %vm285, %v276
      %352 = vst.msk [vmem:[%s294 + $0x121] sm:$0xff] %vm285, %v277
      %353 = vst.msk [vmem:[%s294 + $0x129] sm:$0xff] %vm285, %v278
      %354 = vst.msk [vmem:[%s294 + $0x139] sm:$0xff] %vm285, %v279
      %355 = vst.msk [vmem:[%s294 + $0x141] sm:$0xff] %vm285, %v280
      %356 = vst.msk [vmem:[%s294 + $0x151] sm:$0xff] %vm285, %v281
      %357 = vst.msk [vmem:[%s294 + $0x159] sm:$0xff] %vm285, %v282
      %358 = vst.msk [vmem:[%s294 + $0x169] sm:$0xff] %vm285, %v283
      %359 = vst.msk [vmem:[%s294 + $0x171] sm:$0xff] %vm285, %v284
      %v360 = vld [vmem:[#allocation2] sm:$0xff]
      %v361 = vld [vmem:[#allocation2 + $0x8] sm:$0xff]
      %v362 = vld [vmem:[#allocation2 + $0x10] sm:$0x3]
      %v363 = vld [vmem:[#allocation2 + $0x18] sm:$0xff]
      %v364 = vld [vmem:[#allocation2 + $0x20] sm:$0xff]
      %v365 = vld [vmem:[#allocation2 + $0x28] sm:$0x3]
      %v366 = vld [vmem:[#allocation2 + $0x30] sm:$0xff]
      %v367 = vld [vmem:[#allocation2 + $0x38] sm:$0xff]
      %v368 = vld [vmem:[#allocation2 + $0x40] sm:$0x3]
      %v369 = vld [vmem:[#allocation2 + $0x48] sm:$0xff]
      %v370 = vld [vmem:[#allocation2 + $0x50] sm:$0xff]
      %v371 = vld [vmem:[#allocation2 + $0x58] sm:$0x3]
      %v372 = vld [vmem:[#allocation2 + $0x60] sm:$0xff]
      %v373 = vld [vmem:[#allocation2 + $0x68] sm:$0xff]
      %v374 = vld [vmem:[#allocation2 + $0x70] sm:$0x3]
      %v375 = vld [vmem:[#allocation2 + $0x78] sm:$0xff]
      %v376 = vld [vmem:[#allocation2 + $0x80] sm:$0xff]
      %v377 = vld [vmem:[#allocation2 + $0x88] sm:$0x3]
      %v378 = vld [vmem:[#allocation2 + $0x90] sm:$0xff]
      %v379 = vld [vmem:[#allocation2 + $0x98] sm:$0xff]
      %v380 = vld [vmem:[#allocation2 + $0xa0] sm:$0x3]
      %v381 = vld [vmem:[#allocation2 + $0xa8] sm:$0xff]
      %v382 = vld [vmem:[#allocation2 + $0xb0] sm:$0xff]
      %v383 = vld [vmem:[#allocation2 + $0xb8] sm:$0x3]
      %v384 = vld [vmem:[#allocation2 + $0xc0] sm:$0xff]
      %v385 = vld [vmem:[#allocation2 + $0xc8] sm:$0xff]
      %v386 = vld [vmem:[#allocation2 + $0xd0] sm:$0x3]
      %v387 = vld [vmem:[#allocation2 + $0xd8] sm:$0xff]
      %v388 = vld [vmem:[#allocation2 + $0xe0] sm:$0xff]
      %v389 = vld [vmem:[#allocation2 + $0xe8] sm:$0x3]
      %v390 = vld [vmem:[#allocation2 + $0xf0] sm:$0xff]
      %v391 = vld [vmem:[#allocation2 + $0xf8] sm:$0xff]
      %v392 = vld [vmem:[#allocation2 + $0x100] sm:$0x3]
      %v393 = vld [vmem:[#allocation2 + $0x108] sm:$0xff]
      %v394 = vld [vmem:[#allocation2 + $0x110] sm:$0xff]
      %v395 = vld [vmem:[#allocation2 + $0x118] sm:$0x3]
      %v396 = vld [vmem:[#allocation2 + $0x120] sm:$0xff]
      %v397 = vld [vmem:[#allocation2 + $0x128] sm:$0xff]
      %v398 = vld [vmem:[#allocation2 + $0x130] sm:$0x3]
      %v399 = vld [vmem:[#allocation2 + $0x138] sm:$0xff]
      %v400 = vld [vmem:[#allocation2 + $0x140] sm:$0xff]
      %v401 = vld [vmem:[#allocation2 + $0x148] sm:$0x3]
      %v402 = vld [vmem:[#allocation2 + $0x150] sm:$0xff]
      %v403 = vld [vmem:[#allocation2 + $0x158] sm:$0xff]
      %v404 = vld [vmem:[#allocation2 + $0x160] sm:$0x3]
      %v405 = vld [vmem:[#allocation2 + $0x168] sm:$0xff]
      %v406 = vld [vmem:[#allocation2 + $0x170] sm:$0xff]
      %v407 = vld [vmem:[#allocation2 + $0x178] sm:$0x3]
      %v408 = vld [vmem:[#allocation2 + $0x180] sm:$0xff]
      %v409 = vld [vmem:[#allocation2 + $0x188] sm:$0xff]
      %v410 = vld [vmem:[#allocation2 + $0x190] sm:$0x3]
      %v411 = vld [vmem:[#allocation2 + $0x198] sm:$0xff]
      %v412 = vld [vmem:[#allocation2 + $0x1a0] sm:$0xff]
      %v413 = vld [vmem:[#allocation2 + $0x1a8] sm:$0x3]
      %v414 = vld [vmem:[%s5] sm:$0x1]
      %v415 = vld [vmem:[%s5 + $0x1] sm:$0x1]
      %v416 = vld [vmem:[%s5 + $0x2] sm:$0x1]
      %v417 = vld [vmem:[%s5 + $0x3] sm:$0x1]
      %v418 = vld [vmem:[%s5 + $0x4] sm:$0x1]
      %v419 = vperm.slane %v414, 0
      %v420 = vmul.f32 %v253, %v419
      %v421 = vmul.f32 %v254, %v419
      %v422 = vmul.f32 %v255, %v419
      %v423 = vmul.f32 %v256, %v419
      %v424 = vmul.f32 %v257, %v419
      %v425 = vmul.f32 %v258, %v419
      %v426 = vmul.f32 %v259, %v419
      %v427 = vmul.f32 %v260, %v419
      %v428 = vmul.f32 %v261, %v419
      %v429 = vmul.f32 %v262, %v419
      %v430 = vmul.f32 %v263, %v419
      %v431 = vmul.f32 %v264, %v419
      %v432 = vmul.f32 %v265, %v419
      %v433 = vmul.f32 %v266, %v419
      %v434 = vmul.f32 %v267, %v419
      %v435 = vmul.f32 %v268, %v419
      %v436 = vmul.f32 %v269, %v419
      %v437 = vmul.f32 %v270, %v419
      %v438 = vmul.f32 %v271, %v419
      %v439 = vmul.f32 %v272, %v419
      %v440 = vmul.f32 %v273, %v419
      %v441 = vmul.f32 %v274, %v419
      %v442 = vmul.f32 %v275, %v419
      %v443 = vmul.f32 %v276, %v419
      %v444 = vmul.f32 %v277, %v419
      %v445 = vmul.f32 %v278, %v419
      %v446 = vmul.f32 %v279, %v419
      %v447 = vmul.f32 %v280, %v419
      %v448 = vmul.f32 %v281, %v419
      %v449 = vmul.f32 %v282, %v419
      %v450 = vmul.f32 %v283, %v419
      %v451 = vmul.f32 %v284, %v419
      %v452 = vadd.f32 %v360, %v363
      %v453 = vadd.f32 %v361, %v364
      %v454 = vadd.f32 %v362, %v365
      %v455 = vadd.f32 %v363, %v366
      %v456 = vadd.f32 %v364, %v367
      %v457 = vadd.f32 %v365, %v368
      %v458 = vadd.f32 %v366, %v369
      %v459 = vadd.f32 %v367, %v370
      %v460 = vadd.f32 %v368, %v371
      %v461 = vadd.f32 %v369, %v372
      %v462 = vadd.f32 %v370, %v373
      %v463 = vadd.f32 %v371, %v374
      %v464 = vadd.f32 %v372, %v375
      %v465 = vadd.f32 %v373, %v376
      %v466 = vadd.f32 %v374, %v377
      %v467 = vadd.f32 %v375, %v378
      %v468 = vadd.f32 %v376, %v379
      %v469 = vadd.f32 %v377, %v380
      %v470 = vadd.f32 %v378, %v381
      %v471 = vadd.f32 %v379, %v382
      %v472 = vadd.f32 %v380, %v383
      %v473 = vadd.f32 %v381, %v384
      %v474 = vadd.f32 %v382, %v385
      %v475 = vadd.f32 %v383, %v386
      %v476 = vadd.f32 %v384, %v387
      %v477 = vadd.f32 %v385, %v388
      %v478 = vadd.f32 %v386, %v389
      %v479 = vadd.f32 %v387, %v390
      %v480 = vadd.f32 %v388, %v391
      %v481 = vadd.f32 %v389, %v392
      %v482 = vadd.f32 %v390, %v393
      %v483 = vadd.f32 %v391, %v394
      %v484 = vadd.f32 %v392, %v395
      %v485 = vadd.f32 %v393, %v396
      %v486 = vadd.f32 %v394, %v397
      %v487 = vadd.f32 %v395, %v398
      %v488 = vadd.f32 %v396, %v399
      %v489 = vadd.f32 %v397, %v400
      %v490 = vadd.f32 %v398, %v401
      %v491 = vadd.f32 %v399, %v402
      %v492 = vadd.f32 %v400, %v403
      %v493 = vadd.f32 %v401, %v404
      %v494 = vadd.f32 %v402, %v405
      %v495 = vadd.f32 %v403, %v406
      %v496 = vadd.f32 %v404, %v407
      %v497 = vadd.f32 %v405, %v408
      %v498 = vadd.f32 %v406, %v409
      %v499 = vadd.f32 %v407, %v410
      %v500 = vadd.f32 %v452, %v366
      %v501 = vadd.f32 %v453, %v367
      %v502 = vadd.f32 %v454, %v368
      %v503 = vadd.f32 %v455, %v369
      %v504 = vadd.f32 %v456, %v370
      %v505 = vadd.f32 %v457, %v371
      %v506 = vadd.f32 %v458, %v372
      %v507 = vadd.f32 %v459, %v373
      %v508 = vadd.f32 %v460, %v374
      %v509 = vadd.f32 %v461, %v375
      %v510 = vadd.f32 %v462, %v376
      %v511 = vadd.f32 %v463, %v377
      %v512 = vadd.f32 %v464, %v378
      %v513 = vadd.f32 %v465, %v379
      %v514 = vadd.f32 %v466, %v380
      %v515 = vadd.f32 %v467, %v381
      %v516 = vadd.f32 %v468, %v382
      %v517 = vadd.f32 %v469, %v383
      %v518 = vadd.f32 %v470, %v384
      %v519 = vadd.f32 %v471, %v385
      %v520 = vadd.f32 %v472, %v386
      %v521 = vadd.f32 %v473, %v387
      %v522 = vadd.f32 %v474, %v388
      %v523 = vadd.f32 %v475, %v389
      %v524 = vadd.f32 %v476, %v390
      %v525 = vadd.f32 %v477, %v391
      %v526 = vadd.f32 %v478, %v392
      %v527 = vadd.f32 %v479, %v393
      %v528 = vadd.f32 %v480, %v394
      %v529 = vadd.f32 %v481, %v395
      %v530 = vadd.f32 %v482, %v396
      %v531 = vadd.f32 %v483, %v397
      %v532 = vadd.f32 %v484, %v398
      %v533 = vadd.f32 %v485, %v399
      %v534 = vadd.f32 %v486, %v400
      %v535 = vadd.f32 %v487, %v401
      %v536 = vadd.f32 %v488, %v402
      %v537 = vadd.f32 %v489, %v403
      %v538 = vadd.f32 %v490, %v404
      %v539 = vadd.f32 %v491, %v405
      %v540 = vadd.f32 %v492, %v406
      %v541 = vadd.f32 %v493, %v407
      %v542 = vadd.f32 %v494, %v408
      %v543 = vadd.f32 %v495, %v409
      %v544 = vadd.f32 %v496, %v410
      %v545 = vadd.f32 %v497, %v411
      %v546 = vadd.f32 %v498, %v412
      %v547 = vadd.f32 %v499, %v413
      %vm596 = vcmask 1046528
      %v597 = vrot.slane %v500, 1
      %v598 = vrot.slane %v501, 1
      %v599 = vsel %vm596, %v597, %v598
      %v600 = vrot.slane %v502, 1
      %v601 = vsel %vm596, %v598, %v600
      %v602 = vrot.slane %v503, 1
      %v603 = vrot.slane %v504, 1
      %v604 = vsel %vm596, %v602, %v603
      %v605 = vrot.slane %v505, 1
      %v606 = vsel %vm596, %v603, %v605
      %v607 = vrot.slane %v506, 1
      %v608 = vrot.slane %v507, 1
      %v609 = vsel %vm596, %v607, %v608
      %v610 = vrot.slane %v508, 1
      %v611 = vsel %vm596, %v608, %v610
      %v612 = vrot.slane %v509, 1
      %v613 = vrot.slane %v510, 1
      %v614 = vsel %vm596, %v612, %v613
      %v615 = vrot.slane %v511, 1
      %v616 = vsel %vm596, %v613, %v615
      %v617 = vrot.slane %v512, 1
      %v618 = vrot.slane %v513, 1
      %v619 = vsel %vm596, %v617, %v618
      %v620 = vrot.slane %v514, 1
      %v621 = vsel %vm596, %v618, %v620
      %v622 = vrot.slane %v515, 1
      %v623 = vrot.slane %v516, 1
      %v624 = vsel %vm596, %v622, %v623
      %v625 = vrot.slane %v517, 1
      %v626 = vsel %vm596, %v623, %v625
      %v627 = vrot.slane %v518, 1
      %v628 = vrot.slane %v519, 1
      %v629 = vsel %vm596, %v627, %v628
      %v630 = vrot.slane %v520, 1
      %v631 = vsel %vm596, %v628, %v630
      %v632 = vrot.slane %v521, 1
      %v633 = vrot.slane %v522, 1
      %v634 = vsel %vm596, %v632, %v633
      %v635 = vrot.slane %v523, 1
      %v636 = vsel %vm596, %v633, %v635
      %v637 = vrot.slane %v524, 1
      %v638 = vrot.slane %v525, 1
      %v639 = vsel %vm596, %v637, %v638
      %v640 = vrot.slane %v526, 1
      %v641 = vsel %vm596, %v638, %v640
      %v642 = vrot.slane %v527, 1
      %v643 = vrot.slane %v528, 1
      %v644 = vsel %vm596, %v642, %v643
      %v645 = vrot.slane %v529, 1
      %v646 = vsel %vm596, %v643, %v645
      %v647 = vrot.slane %v530, 1
      %v648 = vrot.slane %v531, 1
      %v649 = vsel %vm596, %v647, %v648
      %v650 = vrot.slane %v532, 1
      %v651 = vsel %vm596, %v648, %v650
      %v652 = vrot.slane %v533, 1
      %v653 = vrot.slane %v534, 1
      %v654 = vsel %vm596, %v652, %v653
      %v655 = vrot.slane %v535, 1
      %v656 = vsel %vm596, %v653, %v655
      %v657 = vrot.slane %v536, 1
      %v658 = vrot.slane %v537, 1
      %v659 = vsel %vm596, %v657, %v658
      %v660 = vrot.slane %v538, 1
      %v661 = vsel %vm596, %v658, %v660
      %v662 = vrot.slane %v539, 1
      %v663 = vrot.slane %v540, 1
      %v664 = vsel %vm596, %v662, %v663
      %v665 = vrot.slane %v541, 1
      %v666 = vsel %vm596, %v663, %v665
      %v667 = vrot.slane %v542, 1
      %v668 = vrot.slane %v543, 1
      %v669 = vsel %vm596, %v667, %v668
      %v670 = vrot.slane %v544, 1
      %v671 = vsel %vm596, %v668, %v670
      %v672 = vrot.slane %v545, 1
      %v673 = vrot.slane %v546, 1
      %v674 = vsel %vm596, %v672, %v673
      %v675 = vrot.slane %v547, 1
      %v676 = vsel %vm596, %v673, %v675
      %v709 = vadd.f32 %v500, %v599
      %v710 = vadd.f32 %v501, %v601
      %v711 = vadd.f32 %v503, %v604
      %v712 = vadd.f32 %v504, %v606
      %v713 = vadd.f32 %v506, %v609
      %v714 = vadd.f32 %v507, %v611
      %v715 = vadd.f32 %v509, %v614
      %v716 = vadd.f32 %v510, %v616
      %v717 = vadd.f32 %v512, %v619
      %v718 = vadd.f32 %v513, %v621
      %v719 = vadd.f32 %v515, %v624
      %v720 = vadd.f32 %v516, %v626
      %v721 = vadd.f32 %v518, %v629
      %v722 = vadd.f32 %v519, %v631
      %v723 = vadd.f32 %v521, %v634
      %v724 = vadd.f32 %v522, %v636
      %v725 = vadd.f32 %v524, %v639
      %v726 = vadd.f32 %v525, %v641
      %v727 = vadd.f32 %v527, %v644
      %v728 = vadd.f32 %v528, %v646
      %v729 = vadd.f32 %v530, %v649
      %v730 = vadd.f32 %v531, %v651
      %v731 = vadd.f32 %v533, %v654
      %v732 = vadd.f32 %v534, %v656
      %v733 = vadd.f32 %v536, %v659
      %v734 = vadd.f32 %v537, %v661
      %v735 = vadd.f32 %v539, %v664
      %v736 = vadd.f32 %v540, %v666
      %v737 = vadd.f32 %v542, %v669
      %v738 = vadd.f32 %v543, %v671
      %v739 = vadd.f32 %v545, %v674
      %v740 = vadd.f32 %v546, %v676
      %vm741 = vcmask 1045504
      %v742 = vrot.slane %v500, 2
      %v743 = vrot.slane %v501, 2
      %v744 = vsel %vm741, %v742, %v743
      %v745 = vrot.slane %v502, 2
      %v746 = vsel %vm741, %v743, %v745
      %v747 = vrot.slane %v503, 2
      %v748 = vrot.slane %v504, 2
      %v749 = vsel %vm741, %v747, %v748
      %v750 = vrot.slane %v505, 2
      %v751 = vsel %vm741, %v748, %v750
      %v752 = vrot.slane %v506, 2
      %v753 = vrot.slane %v507, 2
      %v754 = vsel %vm741, %v752, %v753
      %v755 = vrot.slane %v508, 2
      %v756 = vsel %vm741, %v753, %v755
      %v757 = vrot.slane %v509, 2
      %v758 = vrot.slane %v510, 2
      %v759 = vsel %vm741, %v757, %v758
      %v760 = vrot.slane %v511, 2
      %v761 = vsel %vm741, %v758, %v760
      %v762 = vrot.slane %v512, 2
      %v763 = vrot.slane %v513, 2
      %v764 = vsel %vm741, %v762, %v763
      %v765 = vrot.slane %v514, 2
      %v766 = vsel %vm741, %v763, %v765
      %v767 = vrot.slane %v515, 2
      %v768 = vrot.slane %v516, 2
      %v769 = vsel %vm741, %v767, %v768
      %v770 = vrot.slane %v517, 2
      %v771 = vsel %vm741, %v768, %v770
      %v772 = vrot.slane %v518, 2
      %v773 = vrot.slane %v519, 2
      %v774 = vsel %vm741, %v772, %v773
      %v775 = vrot.slane %v520, 2
      %v776 = vsel %vm741, %v773, %v775
      %v777 = vrot.slane %v521, 2
      %v778 = vrot.slane %v522, 2
      %v779 = vsel %vm741, %v777, %v778
      %v780 = vrot.slane %v523, 2
      %v781 = vsel %vm741, %v778, %v780
      %v782 = vrot.slane %v524, 2
      %v783 = vrot.slane %v525, 2
      %v784 = vsel %vm741, %v782, %v783
      %v785 = vrot.slane %v526, 2
      %v786 = vsel %vm741, %v783, %v785
      %v787 = vrot.slane %v527, 2
      %v788 = vrot.slane %v528, 2
      %v789 = vsel %vm741, %v787, %v788
      %v790 = vrot.slane %v529, 2
      %v791 = vsel %vm741, %v788, %v790
      %v792 = vrot.slane %v530, 2
      %v793 = vrot.slane %v531, 2
      %v794 = vsel %vm741, %v792, %v793
      %v795 = vrot.slane %v532, 2
      %v796 = vsel %vm741, %v793, %v795
      %v797 = vrot.slane %v533, 2
      %v798 = vrot.slane %v534, 2
      %v799 = vsel %vm741, %v797, %v798
      %v800 = vrot.slane %v535, 2
      %v801 = vsel %vm741, %v798, %v800
      %v802 = vrot.slane %v536, 2
      %v803 = vrot.slane %v537, 2
      %v804 = vsel %vm741, %v802, %v803
      %v805 = vrot.slane %v538, 2
      %v806 = vsel %vm741, %v803, %v805
      %v807 = vrot.slane %v539, 2
      %v808 = vrot.slane %v540, 2
      %v809 = vsel %vm741, %v807, %v808
      %v810 = vrot.slane %v541, 2
      %v811 = vsel %vm741, %v808, %v810
      %v812 = vrot.slane %v542, 2
      %v813 = vrot.slane %v543, 2
      %v814 = vsel %vm741, %v812, %v813
      %v815 = vrot.slane %v544, 2
      %v816 = vsel %vm741, %v813, %v815
      %v817 = vrot.slane %v545, 2
      %v818 = vrot.slane %v546, 2
      %v819 = vsel %vm741, %v817, %v818
      %v820 = vrot.slane %v547, 2
      %v821 = vsel %vm741, %v818, %v820
      %v854 = vadd.f32 %v709, %v744
      %v855 = vadd.f32 %v710, %v746
      %v856 = vadd.f32 %v711, %v749
      %v857 = vadd.f32 %v712, %v751
      %v858 = vadd.f32 %v713, %v754
      %v859 = vadd.f32 %v714, %v756
      %v860 = vadd.f32 %v715, %v759
      %v861 = vadd.f32 %v716, %v761
      %v862 = vadd.f32 %v717, %v764
      %v863 = vadd.f32 %v718, %v766
      %v864 = vadd.f32 %v719, %v769
      %v865 = vadd.f32 %v720, %v771
      %v866 = vadd.f32 %v721, %v774
      %v867 = vadd.f32 %v722, %v776
      %v868 = vadd.f32 %v723, %v779
      %v869 = vadd.f32 %v724, %v781
      %v870 = vadd.f32 %v725, %v784
      %v871 = vadd.f32 %v726, %v786
      %v872 = vadd.f32 %v727, %v789
      %v873 = vadd.f32 %v728, %v791
      %v874 = vadd.f32 %v729, %v794
      %v875 = vadd.f32 %v730, %v796
      %v876 = vadd.f32 %v731, %v799
      %v877 = vadd.f32 %v732, %v801
      %v878 = vadd.f32 %v733, %v804
      %v879 = vadd.f32 %v734, %v806
      %v880 = vadd.f32 %v735, %v809
      %v881 = vadd.f32 %v736, %v811
      %v882 = vadd.f32 %v737, %v814
      %v883 = vadd.f32 %v738, %v816
      %v884 = vadd.f32 %v739, %v819
      %v885 = vadd.f32 %v740, %v821
      %v886 = vld [vmem:[%s3] sm:$0xff]
      %v887 = vld [vmem:[%s3 + $0x8] sm:$0xff]
      %v888 = vld [vmem:[%s3 + $0x10] sm:$0xff]
      %v889 = vld [vmem:[%s3 + $0x18] sm:$0xff]
      %v890 = vld [vmem:[%s3 + $0x20] sm:$0xff]
      %v891 = vld [vmem:[%s3 + $0x28] sm:$0xff]
      %v892 = vld [vmem:[%s3 + $0x30] sm:$0xff]
      %v893 = vld [vmem:[%s3 + $0x38] sm:$0xff]
      %v894 = vld [vmem:[%s3 + $0x40] sm:$0xff]
      %v895 = vld [vmem:[%s3 + $0x48] sm:$0xff]
      %v896 = vld [vmem:[%s3 + $0x50] sm:$0xff]
      %v897 = vld [vmem:[%s3 + $0x58] sm:$0xff]
      %v898 = vld [vmem:[%s3 + $0x60] sm:$0xff]
      %v899 = vld [vmem:[%s3 + $0x68] sm:$0xff]
      %v900 = vld [vmem:[%s3 + $0x70] sm:$0xff]
      %v901 = vld [vmem:[%s3 + $0x78] sm:$0xff]
      %v902 = vld [vmem:[%s3 + $0x80] sm:$0xff]
      %v903 = vld [vmem:[%s3 + $0x88] sm:$0xff]
      %v904 = vld [vmem:[%s3 + $0x90] sm:$0xff]
      %v905 = vld [vmem:[%s3 + $0x98] sm:$0xff]
      %v906 = vld [vmem:[%s3 + $0xa0] sm:$0xff]
      %v907 = vld [vmem:[%s3 + $0xa8] sm:$0xff]
      %v908 = vld [vmem:[%s3 + $0xb0] sm:$0xff]
      %v909 = vld [vmem:[%s3 + $0xb8] sm:$0xff]
      %v910 = vld [vmem:[%s3 + $0xc0] sm:$0xff]
      %v911 = vld [vmem:[%s3 + $0xc8] sm:$0xff]
      %v912 = vld [vmem:[%s3 + $0xd0] sm:$0xff]
      %v913 = vld [vmem:[%s3 + $0xd8] sm:$0xff]
      %v914 = vld [vmem:[%s3 + $0xe0] sm:$0xff]
      %v915 = vld [vmem:[%s3 + $0xe8] sm:$0xff]
      %v916 = vld [vmem:[%s3 + $0xf0] sm:$0xff]
      %v917 = vld [vmem:[%s3 + $0xf8] sm:$0xff]
      %919 = vset.pattern.permute.xlu0 0
      %920 = vperm.xlu0 %919, %v886
      %v921 = vpop.permute.xlu0 %920
      %924 = vset.pattern.permute.xlu0 0
      %925 = vperm.xlu0 %924, %v887
      %v926 = vpop.permute.xlu0 %925
      %929 = vset.pattern.permute.xlu0 0
      %930 = vperm.xlu0 %929, %v888
      %v931 = vpop.permute.xlu0 %930
      %934 = vset.pattern.permute.xlu0 0
      %935 = vperm.xlu0 %934, %v889
      %v936 = vpop.permute.xlu0 %935
      %939 = vset.pattern.permute.xlu0 0
      %940 = vperm.xlu0 %939, %v890
      %v941 = vpop.permute.xlu0 %940
      %944 = vset.pattern.permute.xlu0 0
      %945 = vperm.xlu0 %944, %v891
      %v946 = vpop.permute.xlu0 %945
      %949 = vset.pattern.permute.xlu0 0
      %950 = vperm.xlu0 %949, %v892
      %v951 = vpop.permute.xlu0 %950
      %954 = vset.pattern.permute.xlu0 0
      %955 = vperm.xlu0 %954, %v893
      %v956 = vpop.permute.xlu0 %955
      %959 = vset.pattern.permute.xlu0 0
      %960 = vperm.xlu0 %959, %v894
      %v961 = vpop.permute.xlu0 %960
      %964 = vset.pattern.permute.xlu0 0
      %965 = vperm.xlu0 %964, %v895
      %v966 = vpop.permute.xlu0 %965
      %969 = vset.pattern.permute.xlu0 0
      %970 = vperm.xlu0 %969, %v896
      %v971 = vpop.permute.xlu0 %970
      %974 = vset.pattern.permute.xlu0 0
      %975 = vperm.xlu0 %974, %v897
      %v976 = vpop.permute.xlu0 %975
      %979 = vset.pattern.permute.xlu0 0
      %980 = vperm.xlu0 %979, %v898
      %v981 = vpop.permute.xlu0 %980
      %984 = vset.pattern.permute.xlu0 0
      %985 = vperm.xlu0 %984, %v899
      %v986 = vpop.permute.xlu0 %985
      %989 = vset.pattern.permute.xlu0 0
      %990 = vperm.xlu0 %989, %v900
      %v991 = vpop.permute.xlu0 %990
      %994 = vset.pattern.permute.xlu0 0
      %995 = vperm.xlu0 %994, %v901
      %v996 = vpop.permute.xlu0 %995
      %999 = vset.pattern.permute.xlu0 0
      %1000 = vperm.xlu0 %999, %v902
      %v1001 = vpop.permute.xlu0 %1000
      %1004 = vset.pattern.permute.xlu0 0
      %1005 = vperm.xlu0 %1004, %v903
      %v1006 = vpop.permute.xlu0 %1005
      %1009 = vset.pattern.permute.xlu0 0
      %1010 = vperm.xlu0 %1009, %v904
      %v1011 = vpop.permute.xlu0 %1010
      %1014 = vset.pattern.permute.xlu0 0
      %1015 = vperm.xlu0 %1014, %v905
      %v1016 = vpop.permute.xlu0 %1015
      %1019 = vset.pattern.permute.xlu0 0
      %1020 = vperm.xlu0 %1019, %v906
      %v1021 = vpop.permute.xlu0 %1020
      %1024 = vset.pattern.permute.xlu0 0
      %1025 = vperm.xlu0 %1024, %v907
      %v1026 = vpop.permute.xlu0 %1025
      %1029 = vset.pattern.permute.xlu0 0
      %1030 = vperm.xlu0 %1029, %v908
      %v1031 = vpop.permute.xlu0 %1030
      %1034 = vset.pattern.permute.xlu0 0
      %1035 = vperm.xlu0 %1034, %v909
      %v1036 = vpop.permute.xlu0 %1035
      %1039 = vset.pattern.permute.xlu0 0
      %1040 = vperm.xlu0 %1039, %v910
      %v1041 = vpop.permute.xlu0 %1040
      %1044 = vset.pattern.permute.xlu0 0
      %1045 = vperm.xlu0 %1044, %v911
      %v1046 = vpop.permute.xlu0 %1045
      %1049 = vset.pattern.permute.xlu0 0
      %1050 = vperm.xlu0 %1049, %v912
      %v1051 = vpop.permute.xlu0 %1050
      %1054 = vset.pattern.permute.xlu0 0
      %1055 = vperm.xlu0 %1054, %v913
      %v1056 = vpop.permute.xlu0 %1055
      %1059 = vset.pattern.permute.xlu0 0
      %1060 = vperm.xlu0 %1059, %v914
      %v1061 = vpop.permute.xlu0 %1060
      %1064 = vset.pattern.permute.xlu0 0
      %1065 = vperm.xlu0 %1064, %v915
      %v1066 = vpop.permute.xlu0 %1065
      %1069 = vset.pattern.permute.xlu0 0
      %1070 = vperm.xlu0 %1069, %v916
      %v1071 = vpop.permute.xlu0 %1070
      %1074 = vset.pattern.permute.xlu0 0
      %1075 = vperm.xlu0 %1074, %v917
      %v1076 = vpop.permute.xlu0 %1075
      %v1078 = vmul.f32 %v854, %v921
      %v1079 = vmul.f32 %v855, %v926
      %v1080 = vmul.f32 %v856, %v931
      %v1081 = vmul.f32 %v857, %v936
      %v1082 = vmul.f32 %v858, %v941
      %v1083 = vmul.f32 %v859, %v946
      %v1084 = vmul.f32 %v860, %v951
      %v1085 = vmul.f32 %v861, %v956
      %v1086 = vmul.f32 %v862, %v961
      %v1087 = vmul.f32 %v863, %v966
      %v1088 = vmul.f32 %v864, %v971
      %v1089 = vmul.f32 %v865, %v976
      %v1090 = vmul.f32 %v866, %v981
      %v1091 = vmul.f32 %v867, %v986
      %v1092 = vmul.f32 %v868, %v991
      %v1093 = vmul.f32 %v869, %v996
      %v1094 = vmul.f32 %v870, %v1001
      %v1095 = vmul.f32 %v871, %v1006
      %v1096 = vmul.f32 %v872, %v1011
      %v1097 = vmul.f32 %v873, %v1016
      %v1098 = vmul.f32 %v874, %v1021
      %v1099 = vmul.f32 %v875, %v1026
      %v1100 = vmul.f32 %v876, %v1031
      %v1101 = vmul.f32 %v877, %v1036
      %v1102 = vmul.f32 %v878, %v1041
      %v1103 = vmul.f32 %v879, %v1046
      %v1104 = vmul.f32 %v880, %v1051
      %v1105 = vmul.f32 %v881, %v1056
      %v1106 = vmul.f32 %v882, %v1061
      %v1107 = vmul.f32 %v883, %v1066
      %v1108 = vmul.f32 %v884, %v1071
      %v1109 = vmul.f32 %v885, %v1076
      %v1110 = vadd.f32 %v420, %v1078
      %v1111 = vadd.f32 %v421, %v1079
      %v1112 = vadd.f32 %v422, %v1080
      %v1113 = vadd.f32 %v423, %v1081
      %v1114 = vadd.f32 %v424, %v1082
      %v1115 = vadd.f32 %v425, %v1083
      %v1116 = vadd.f32 %v426, %v1084
      %v1117 = vadd.f32 %v427, %v1085
      %v1118 = vadd.f32 %v428, %v1086
      %v1119 = vadd.f32 %v429, %v1087
      %v1120 = vadd.f32 %v430, %v1088
      %v1121 = vadd.f32 %v431, %v1089
      %v1122 = vadd.f32 %v432, %v1090
      %v1123 = vadd.f32 %v433, %v1091
      %v1124 = vadd.f32 %v434, %v1092
      %v1125 = vadd.f32 %v435, %v1093
      %v1126 = vadd.f32 %v436, %v1094
      %v1127 = vadd.f32 %v437, %v1095
      %v1128 = vadd.f32 %v438, %v1096
      %v1129 = vadd.f32 %v439, %v1097
      %v1130 = vadd.f32 %v440, %v1098
      %v1131 = vadd.f32 %v441, %v1099
      %v1132 = vadd.f32 %v442, %v1100
      %v1133 = vadd.f32 %v443, %v1101
      %v1134 = vadd.f32 %v444, %v1102
      %v1135 = vadd.f32 %v445, %v1103
      %v1136 = vadd.f32 %v446, %v1104
      %v1137 = vadd.f32 %v447, %v1105
      %v1138 = vadd.f32 %v448, %v1106
      %v1139 = vadd.f32 %v449, %v1107
      %v1140 = vadd.f32 %v450, %v1108
      %v1141 = vadd.f32 %v451, %v1109
      %v1142 = vld [vmem:[%s4] sm:$0xff]
      %v1143 = vld [vmem:[%s4 + $0x8] sm:$0xff]
      %v1144 = vld [vmem:[%s4 + $0x10] sm:$0x3]
      %v1145 = vld [vmem:[%s4 + $0x18] sm:$0xff]
      %v1146 = vld [vmem:[%s4 + $0x20] sm:$0xff]
      %v1147 = vld [vmem:[%s4 + $0x28] sm:$0x3]
      %v1148 = vld [vmem:[%s4 + $0x30] sm:$0xff]
      %v1149 = vld [vmem:[%s4 + $0x38] sm:$0xff]
      %v1150 = vld [vmem:[%s4 + $0x40] sm:$0x3]
      %v1151 = vld [vmem:[%s4 + $0x48] sm:$0xff]
      %v1152 = vld [vmem:[%s4 + $0x50] sm:$0xff]
      %v1153 = vld [vmem:[%s4 + $0x58] sm:$0x3]
      %v1154 = vld [vmem:[%s4 + $0x60] sm:$0xff]
      %v1155 = vld [vmem:[%s4 + $0x68] sm:$0xff]
      %v1156 = vld [vmem:[%s4 + $0x70] sm:$0x3]
      %v1157 = vld [vmem:[%s4 + $0x78] sm:$0xff]
      %v1158 = vld [vmem:[%s4 + $0x80] sm:$0xff]
      %v1159 = vld [vmem:[%s4 + $0x88] sm:$0x3]
      %v1160 = vld [vmem:[%s4 + $0x90] sm:$0xff]
      %v1161 = vld [vmem:[%s4 + $0x98] sm:$0xff]
      %v1162 = vld [vmem:[%s4 + $0xa0] sm:$0x3]
      %v1163 = vld [vmem:[%s4 + $0xa8] sm:$0xff]
      %v1164 = vld [vmem:[%s4 + $0xb0] sm:$0xff]
      %v1165 = vld [vmem:[%s4 + $0xb8] sm:$0x3]
      %v1166 = vld [vmem:[%s4 + $0xc0] sm:$0xff]
      %v1167 = vld [vmem:[%s4 + $0xc8] sm:$0xff]
      %v1168 = vld [vmem:[%s4 + $0xd0] sm:$0x3]
      %v1169 = vld [vmem:[%s4 + $0xd8] sm:$0xff]
      %v1170 = vld [vmem:[%s4 + $0xe0] sm:$0xff]
      %v1171 = vld [vmem:[%s4 + $0xe8] sm:$0x3]
      %v1172 = vld [vmem:[%s4 + $0xf0] sm:$0xff]
      %v1173 = vld [vmem:[%s4 + $0xf8] sm:$0xff]
      %v1174 = vld [vmem:[%s4 + $0x100] sm:$0x3]
      %v1175 = vld [vmem:[%s4 + $0x108] sm:$0xff]
      %v1176 = vld [vmem:[%s4 + $0x110] sm:$0xff]
      %v1177 = vld [vmem:[%s4 + $0x118] sm:$0x3]
      %v1178 = vld [vmem:[%s4 + $0x120] sm:$0xff]
      %v1179 = vld [vmem:[%s4 + $0x128] sm:$0xff]
      %v1180 = vld [vmem:[%s4 + $0x130] sm:$0x3]
      %v1181 = vld [vmem:[%s4 + $0x138] sm:$0xff]
      %v1182 = vld [vmem:[%s4 + $0x140] sm:$0xff]
      %v1183 = vld [vmem:[%s4 + $0x148] sm:$0x3]
      %v1184 = vld [vmem:[%s4 + $0x150] sm:$0xff]
      %v1185 = vld [vmem:[%s4 + $0x158] sm:$0xff]
      %v1186 = vld [vmem:[%s4 + $0x160] sm:$0x3]
      %v1187 = vld [vmem:[%s4 + $0x168] sm:$0xff]
      %v1188 = vld [vmem:[%s4 + $0x170] sm:$0xff]
      %v1189 = vld [vmem:[%s4 + $0x178] sm:$0x3]
      %v1190 = vld [vmem:[%s4 + $0x180] sm:$0xff]
      %v1191 = vld [vmem:[%s4 + $0x188] sm:$0xff]
      %v1192 = vld [vmem:[%s4 + $0x190] sm:$0x3]
      %v1193 = vld [vmem:[%s4 + $0x198] sm:$0xff]
      %v1194 = vld [vmem:[%s4 + $0x1a0] sm:$0xff]
      %v1195 = vld [vmem:[%s4 + $0x1a8] sm:$0x3]
      %1197 = vset.pattern.permute.xlu0 0
      %1198 = vperm.xlu0 %1197, %v1142
      %v1199 = vpop.permute.xlu0 %1198
      %1202 = vset.pattern.permute.xlu0 0
      %1203 = vperm.xlu0 %1202, %v1143
      %v1204 = vpop.permute.xlu0 %1203
      %1207 = vset.pattern.permute.xlu0 0
      %1208 = vperm.xlu0 %1207, %v1144
      %v1209 = vpop.permute.xlu0 %1208
      %1212 = vset.pattern.permute.xlu0 0
      %1213 = vperm.xlu0 %1212, %v1145
      %v1214 = vpop.permute.xlu0 %1213
      %1217 = vset.pattern.permute.xlu0 0
      %1218 = vperm.xlu0 %1217, %v1146
      %v1219 = vpop.permute.xlu0 %1218
      %1222 = vset.pattern.permute.xlu0 0
      %1223 = vperm.xlu0 %1222, %v1147
      %v1224 = vpop.permute.xlu0 %1223
      %1227 = vset.pattern.permute.xlu0 0
      %1228 = vperm.xlu0 %1227, %v1148
      %v1229 = vpop.permute.xlu0 %1228
      %1232 = vset.pattern.permute.xlu0 0
      %1233 = vperm.xlu0 %1232, %v1149
      %v1234 = vpop.permute.xlu0 %1233
      %1237 = vset.pattern.permute.xlu0 0
      %1238 = vperm.xlu0 %1237, %v1150
      %v1239 = vpop.permute.xlu0 %1238
      %1242 = vset.pattern.permute.xlu0 0
      %1243 = vperm.xlu0 %1242, %v1151
      %v1244 = vpop.permute.xlu0 %1243
      %1247 = vset.pattern.permute.xlu0 0
      %1248 = vperm.xlu0 %1247, %v1152
      %v1249 = vpop.permute.xlu0 %1248
      %1252 = vset.pattern.permute.xlu0 0
      %1253 = vperm.xlu0 %1252, %v1153
      %v1254 = vpop.permute.xlu0 %1253
      %1257 = vset.pattern.permute.xlu0 0
      %1258 = vperm.xlu0 %1257, %v1154
      %v1259 = vpop.permute.xlu0 %1258
      %1262 = vset.pattern.permute.xlu0 0
      %1263 = vperm.xlu0 %1262, %v1155
      %v1264 = vpop.permute.xlu0 %1263
      %1267 = vset.pattern.permute.xlu0 0
      %1268 = vperm.xlu0 %1267, %v1156
      %v1269 = vpop.permute.xlu0 %1268
      %1272 = vset.pattern.permute.xlu0 0
      %1273 = vperm.xlu0 %1272, %v1157
      %v1274 = vpop.permute.xlu0 %1273
      %1277 = vset.pattern.permute.xlu0 0
      %1278 = vperm.xlu0 %1277, %v1158
      %v1279 = vpop.permute.xlu0 %1278
      %1282 = vset.pattern.permute.xlu0 0
      %1283 = vperm.xlu0 %1282, %v1159
      %v1284 = vpop.permute.xlu0 %1283
      %1287 = vset.pattern.permute.xlu0 0
      %1288 = vperm.xlu0 %1287, %v1160
      %v1289 = vpop.permute.xlu0 %1288
      %1292 = vset.pattern.permute.xlu0 0
      %1293 = vperm.xlu0 %1292, %v1161
      %v1294 = vpop.permute.xlu0 %1293
      %1297 = vset.pattern.permute.xlu0 0
      %1298 = vperm.xlu0 %1297, %v1162
      %v1299 = vpop.permute.xlu0 %1298
      %1302 = vset.pattern.permute.xlu0 0
      %1303 = vperm.xlu0 %1302, %v1163
      %v1304 = vpop.permute.xlu0 %1303
      %1307 = vset.pattern.permute.xlu0 0
      %1308 = vperm.xlu0 %1307, %v1164
      %v1309 = vpop.permute.xlu0 %1308
      %1312 = vset.pattern.permute.xlu0 0
      %1313 = vperm.xlu0 %1312, %v1165
      %v1314 = vpop.permute.xlu0 %1313
      %1317 = vset.pattern.permute.xlu0 0
      %1318 = vperm.xlu0 %1317, %v1166
      %v1319 = vpop.permute.xlu0 %1318
      %1322 = vset.pattern.permute.xlu0 0
      %1323 = vperm.xlu0 %1322, %v1167
      %v1324 = vpop.permute.xlu0 %1323
      %1327 = vset.pattern.permute.xlu0 0
      %1328 = vperm.xlu0 %1327, %v1168
      %v1329 = vpop.permute.xlu0 %1328
      %1332 = vset.pattern.permute.xlu0 0
      %1333 = vperm.xlu0 %1332, %v1169
      %v1334 = vpop.permute.xlu0 %1333
      %1337 = vset.pattern.permute.xlu0 0
      %1338 = vperm.xlu0 %1337, %v1170
      %v1339 = vpop.permute.xlu0 %1338
      %1342 = vset.pattern.permute.xlu0 0
      %1343 = vperm.xlu0 %1342, %v1171
      %v1344 = vpop.permute.xlu0 %1343
      %1347 = vset.pattern.permute.xlu0 0
      %1348 = vperm.xlu0 %1347, %v1172
      %v1349 = vpop.permute.xlu0 %1348
      %1352 = vset.pattern.permute.xlu0 0
      %1353 = vperm.xlu0 %1352, %v1173
      %v1354 = vpop.permute.xlu0 %1353
      %1357 = vset.pattern.permute.xlu0 0
      %1358 = vperm.xlu0 %1357, %v1174
      %v1359 = vpop.permute.xlu0 %1358
      %1362 = vset.pattern.permute.xlu0 0
      %1363 = vperm.xlu0 %1362, %v1175
      %v1364 = vpop.permute.xlu0 %1363
      %1367 = vset.pattern.permute.xlu0 0
      %1368 = vperm.xlu0 %1367, %v1176
      %v1369 = vpop.permute.xlu0 %1368
      %1372 = vset.pattern.permute.xlu0 0
      %1373 = vperm.xlu0 %1372, %v1177
      %v1374 = vpop.permute.xlu0 %1373
      %1377 = vset.pattern.permute.xlu0 0
      %1378 = vperm.xlu0 %1377, %v1178
      %v1379 = vpop.permute.xlu0 %1378
      %1382 = vset.pattern.permute.xlu0 0
      %1383 = vperm.xlu0 %1382, %v1179
      %v1384 = vpop.permute.xlu0 %1383
      %1387 = vset.pattern.permute.xlu0 0
      %1388 = vperm.xlu0 %1387, %v1180
      %v1389 = vpop.permute.xlu0 %1388
      %1392 = vset.pattern.permute.xlu0 0
      %1393 = vperm.xlu0 %1392, %v1181
      %v1394 = vpop.permute.xlu0 %1393
      %1397 = vset.pattern.permute.xlu0 0
      %1398 = vperm.xlu0 %1397, %v1182
      %v1399 = vpop.permute.xlu0 %1398
      %1402 = vset.pattern.permute.xlu0 0
      %1403 = vperm.xlu0 %1402, %v1183
      %v1404 = vpop.permute.xlu0 %1403
      %1407 = vset.pattern.permute.xlu0 0
      %1408 = vperm.xlu0 %1407, %v1184
      %v1409 = vpop.permute.xlu0 %1408
      %1412 = vset.pattern.permute.xlu0 0
      %1413 = vperm.xlu0 %1412, %v1185
      %v1414 = vpop.permute.xlu0 %1413
      %1417 = vset.pattern.permute.xlu0 0
      %1418 = vperm.xlu0 %1417, %v1186
      %v1419 = vpop.permute.xlu0 %1418
      %1422 = vset.pattern.permute.xlu0 0
      %1423 = vperm.xlu0 %1422, %v1187
      %v1424 = vpop.permute.xlu0 %1423
      %1427 = vset.pattern.permute.xlu0 0
      %1428 = vperm.xlu0 %1427, %v1188
      %v1429 = vpop.permute.xlu0 %1428
      %1432 = vset.pattern.permute.xlu0 0
      %1433 = vperm.xlu0 %1432, %v1189
      %v1434 = vpop.permute.xlu0 %1433
      %1437 = vset.pattern.permute.xlu0 0
      %1438 = vperm.xlu0 %1437, %v1190
      %v1439 = vpop.permute.xlu0 %1438
      %1442 = vset.pattern.permute.xlu0 0
      %1443 = vperm.xlu0 %1442, %v1191
      %v1444 = vpop.permute.xlu0 %1443
      %1447 = vset.pattern.permute.xlu0 0
      %1448 = vperm.xlu0 %1447, %v1192
      %v1449 = vpop.permute.xlu0 %1448
      %1452 = vset.pattern.permute.xlu0 0
      %1453 = vperm.xlu0 %1452, %v1193
      %v1454 = vpop.permute.xlu0 %1453
      %1457 = vset.pattern.permute.xlu0 0
      %1458 = vperm.xlu0 %1457, %v1194
      %v1459 = vpop.permute.xlu0 %1458
      %1462 = vset.pattern.permute.xlu0 0
      %1463 = vperm.xlu0 %1462, %v1195
      %v1464 = vpop.permute.xlu0 %1463
      %v1466 = vadd.f32 %v360, %v1199
      %v1467 = vadd.f32 %v361, %v1204
      %v1468 = vadd.f32 %v362, %v1209
      %v1469 = vadd.f32 %v363, %v1214
      %v1470 = vadd.f32 %v364, %v1219
      %v1471 = vadd.f32 %v365, %v1224
      %v1472 = vadd.f32 %v366, %v1229
      %v1473 = vadd.f32 %v367, %v1234
      %v1474 = vadd.f32 %v368, %v1239
      %v1475 = vadd.f32 %v369, %v1244
      %v1476 = vadd.f32 %v370, %v1249
      %v1477 = vadd.f32 %v371, %v1254
      %v1478 = vadd.f32 %v372, %v1259
      %v1479 = vadd.f32 %v373, %v1264
      %v1480 = vadd.f32 %v374, %v1269
      %v1481 = vadd.f32 %v375, %v1274
      %v1482 = vadd.f32 %v376, %v1279
      %v1483 = vadd.f32 %v377, %v1284
      %v1484 = vadd.f32 %v378, %v1289
      %v1485 = vadd.f32 %v379, %v1294
      %v1486 = vadd.f32 %v380, %v1299
      %v1487 = vadd.f32 %v381, %v1304
      %v1488 = vadd.f32 %v382, %v1309
      %v1489 = vadd.f32 %v383, %v1314
      %v1490 = vadd.f32 %v384, %v1319
      %v1491 = vadd.f32 %v385, %v1324
      %v1492 = vadd.f32 %v386, %v1329
      %v1493 = vadd.f32 %v387, %v1334
      %v1494 = vadd.f32 %v388, %v1339
      %v1495 = vadd.f32 %v389, %v1344
      %v1496 = vadd.f32 %v390, %v1349
      %v1497 = vadd.f32 %v391, %v1354
      %v1498 = vadd.f32 %v392, %v1359
      %v1499 = vadd.f32 %v393, %v1364
      %v1500 = vadd.f32 %v394, %v1369
      %v1501 = vadd.f32 %v395, %v1374
      %v1502 = vadd.f32 %v396, %v1379
      %v1503 = vadd.f32 %v397, %v1384
      %v1504 = vadd.f32 %v398, %v1389
      %v1505 = vadd.f32 %v399, %v1394
      %v1506 = vadd.f32 %v400, %v1399
      %v1507 = vadd.f32 %v401, %v1404
      %v1508 = vadd.f32 %v402, %v1409
      %v1509 = vadd.f32 %v403, %v1414
      %v1510 = vadd.f32 %v404, %v1419
      %v1511 = vadd.f32 %v405, %v1424
      %v1512 = vadd.f32 %v406, %v1429
      %v1513 = vadd.f32 %v407, %v1434
      %v1514 = vadd.f32 %v408, %v1439
      %v1515 = vadd.f32 %v409, %v1444
      %v1516 = vadd.f32 %v410, %v1449
      %v1517 = vadd.f32 %v411, %v1454
      %v1518 = vadd.f32 %v412, %v1459
      %v1519 = vadd.f32 %v413, %v1464
      %v1520 = vmax.f32 %v1466, %v1469
      %v1521 = vmax.f32 %v1467, %v1470
      %v1522 = vmax.f32 %v1468, %v1471
      %v1523 = vmax.f32 %v1469, %v1472
      %v1524 = vmax.f32 %v1470, %v1473
      %v1525 = vmax.f32 %v1471, %v1474
      %v1526 = vmax.f32 %v1472, %v1475
      %v1527 = vmax.f32 %v1473, %v1476
      %v1528 = vmax.f32 %v1474, %v1477
      %v1529 = vmax.f32 %v1475, %v1478
      %v1530 = vmax.f32 %v1476, %v1479
      %v1531 = vmax.f32 %v1477, %v1480
      %v1532 = vmax.f32 %v1478, %v1481
      %v1533 = vmax.f32 %v1479, %v1482
      %v1534 = vmax.f32 %v1480, %v1483
      %v1535 = vmax.f32 %v1481, %v1484
      %v1536 = vmax.f32 %v1482, %v1485
      %v1537 = vmax.f32 %v1483, %v1486
      %v1538 = vmax.f32 %v1484, %v1487
      %v1539 = vmax.f32 %v1485, %v1488
      %v1540 = vmax.f32 %v1486, %v1489
      %v1541 = vmax.f32 %v1487, %v1490
      %v1542 = vmax.f32 %v1488, %v1491
      %v1543 = vmax.f32 %v1489, %v1492
      %v1544 = vmax.f32 %v1490, %v1493
      %v1545 = vmax.f32 %v1491, %v1494
      %v1546 = vmax.f32 %v1492, %v1495
      %v1547 = vmax.f32 %v1493, %v1496
      %v1548 = vmax.f32 %v1494, %v1497
      %v1549 = vmax.f32 %v1495, %v1498
      %v1550 = vmax.f32 %v1496, %v1499
      %v1551 = vmax.f32 %v1497, %v1500
      %v1552 = vmax.f32 %v1498, %v1501
      %v1553 = vmax.f32 %v1499, %v1502
      %v1554 = vmax.f32 %v1500, %v1503
      %v1555 = vmax.f32 %v1501, %v1504
      %v1556 = vmax.f32 %v1502, %v1505
      %v1557 = vmax.f32 %v1503, %v1506
      %v1558 = vmax.f32 %v1504, %v1507
      %v1559 = vmax.f32 %v1505, %v1508
      %v1560 = vmax.f32 %v1506, %v1509
      %v1561 = vmax.f32 %v1507, %v1510
      %v1562 = vmax.f32 %v1508, %v1511
      %v1563 = vmax.f32 %v1509, %v1512
      %v1564 = vmax.f32 %v1510, %v1513
      %v1565 = vmax.f32 %v1511, %v1514
      %v1566 = vmax.f32 %v1512, %v1515
      %v1567 = vmax.f32 %v1513, %v1516
      %v1568 = vmax.f32 %v1520, %v1472
      %v1569 = vmax.f32 %v1521, %v1473
      %v1570 = vmax.f32 %v1522, %v1474
      %v1571 = vmax.f32 %v1523, %v1475
      %v1572 = vmax.f32 %v1524, %v1476
      %v1573 = vmax.f32 %v1525, %v1477
      %v1574 = vmax.f32 %v1526, %v1478
      %v1575 = vmax.f32 %v1527, %v1479
      %v1576 = vmax.f32 %v1528, %v1480
      %v1577 = vmax.f32 %v1529, %v1481
      %v1578 = vmax.f32 %v1530, %v1482
      %v1579 = vmax.f32 %v1531, %v1483
      %v1580 = vmax.f32 %v1532, %v1484
      %v1581 = vmax.f32 %v1533, %v1485
      %v1582 = vmax.f32 %v1534, %v1486
      %v1583 = vmax.f32 %v1535, %v1487
      %v1584 = vmax.f32 %v1536, %v1488
      %v1585 = vmax.f32 %v1537, %v1489
      %v1586 = vmax.f32 %v1538, %v1490
      %v1587 = vmax.f32 %v1539, %v1491
      %v1588 = vmax.f32 %v1540, %v1492
      %v1589 = vmax.f32 %v1541, %v1493
      %v1590 = vmax.f32 %v1542, %v1494
      %v1591 = vmax.f32 %v1543, %v1495
      %v1592 = vmax.f32 %v1544, %v1496
      %v1593 = vmax.f32 %v1545, %v1497
      %v1594 = vmax.f32 %v1546, %v1498
      %v1595 = vmax.f32 %v1547, %v1499
      %v1596 = vmax.f32 %v1548, %v1500
      %v1597 = vmax.f32 %v1549, %v1501
      %v1598 = vmax.f32 %v1550, %v1502
      %v1599 = vmax.f32 %v1551, %v1503
      %v1600 = vmax.f32 %v1552, %v1504
      %v1601 = vmax.f32 %v1553, %v1505
      %v1602 = vmax.f32 %v1554, %v1506
      %v1603 = vmax.f32 %v1555, %v1507
      %v1604 = vmax.f32 %v1556, %v1508
      %v1605 = vmax.f32 %v1557, %v1509
      %v1606 = vmax.f32 %v1558, %v1510
      %v1607 = vmax.f32 %v1559, %v1511
      %v1608 = vmax.f32 %v1560, %v1512
      %v1609 = vmax.f32 %v1561, %v1513
      %v1610 = vmax.f32 %v1562, %v1514
      %v1611 = vmax.f32 %v1563, %v1515
      %v1612 = vmax.f32 %v1564, %v1516
      %v1613 = vmax.f32 %v1565, %v1517
      %v1614 = vmax.f32 %v1566, %v1518
      %v1615 = vmax.f32 %v1567, %v1519
      %v1664 = vrot.slane %v1568, 1
      %v1665 = vrot.slane %v1569, 1
      %v1666 = vsel %vm596, %v1664, %v1665
      %v1667 = vrot.slane %v1570, 1
      %v1668 = vsel %vm596, %v1665, %v1667
      %v1669 = vrot.slane %v1571, 1
      %v1670 = vrot.slane %v1572, 1
      %v1671 = vsel %vm596, %v1669, %v1670
      %v1672 = vrot.slane %v1573, 1
      %v1673 = vsel %vm596, %v1670, %v1672
      %v1674 = vrot.slane %v1574, 1
      %v1675 = vrot.slane %v1575, 1
      %v1676 = vsel %vm596, %v1674, %v1675
      %v1677 = vrot.slane %v1576, 1
      %v1678 = vsel %vm596, %v1675, %v1677
      %v1679 = vrot.slane %v1577, 1
      %v1680 = vrot.slane %v1578, 1
      %v1681 = vsel %vm596, %v1679, %v1680
      %v1682 = vrot.slane %v1579, 1
      %v1683 = vsel %vm596, %v1680, %v1682
      %v1684 = vrot.slane %v1580, 1
      %v1685 = vrot.slane %v1581, 1
      %v1686 = vsel %vm596, %v1684, %v1685
      %v1687 = vrot.slane %v1582, 1
      %v1688 = vsel %vm596, %v1685, %v1687
      %v1689 = vrot.slane %v1583, 1
      %v1690 = vrot.slane %v1584, 1
      %v1691 = vsel %vm596, %v1689, %v1690
      %v1692 = vrot.slane %v1585, 1
      %v1693 = vsel %vm596, %v1690, %v1692
      %v1694 = vrot.slane %v1586, 1
      %v1695 = vrot.slane %v1587, 1
      %v1696 = vsel %vm596, %v1694, %v1695
      %v1697 = vrot.slane %v1588, 1
      %v1698 = vsel %vm596, %v1695, %v1697
      %v1699 = vrot.slane %v1589, 1
      %v1700 = vrot.slane %v1590, 1
      %v1701 = vsel %vm596, %v1699, %v1700
      %v1702 = vrot.slane %v1591, 1
      %v1703 = vsel %vm596, %v1700, %v1702
      %v1704 = vrot.slane %v1592, 1
      %v1705 = vrot.slane %v1593, 1
      %v1706 = vsel %vm596, %v1704, %v1705
      %v1707 = vrot.slane %v1594, 1
      %v1708 = vsel %vm596, %v1705, %v1707
      %v1709 = vrot.slane %v1595, 1
      %v1710 = vrot.slane %v1596, 1
      %v1711 = vsel %vm596, %v1709, %v1710
      %v1712 = vrot.slane %v1597, 1
      %v1713 = vsel %vm596, %v1710, %v1712
      %v1714 = vrot.slane %v1598, 1
      %v1715 = vrot.slane %v1599, 1
      %v1716 = vsel %vm596, %v1714, %v1715
      %v1717 = vrot.slane %v1600, 1
      %v1718 = vsel %vm596, %v1715, %v1717
      %v1719 = vrot.slane %v1601, 1
      %v1720 = vrot.slane %v1602, 1
      %v1721 = vsel %vm596, %v1719, %v1720
      %v1722 = vrot.slane %v1603, 1
      %v1723 = vsel %vm596, %v1720, %v1722
      %v1724 = vrot.slane %v1604, 1
      %v1725 = vrot.slane %v1605, 1
      %v1726 = vsel %vm596, %v1724, %v1725
      %v1727 = vrot.slane %v1606, 1
      %v1728 = vsel %vm596, %v1725, %v1727
      %v1729 = vrot.slane %v1607, 1
      %v1730 = vrot.slane %v1608, 1
      %v1731 = vsel %vm596, %v1729, %v1730
      %v1732 = vrot.slane %v1609, 1
      %v1733 = vsel %vm596, %v1730, %v1732
      %v1734 = vrot.slane %v1610, 1
      %v1735 = vrot.slane %v1611, 1
      %v1736 = vsel %vm596, %v1734, %v1735
      %v1737 = vrot.slane %v1612, 1
      %v1738 = vsel %vm596, %v1735, %v1737
      %v1739 = vrot.slane %v1613, 1
      %v1740 = vrot.slane %v1614, 1
      %v1741 = vsel %vm596, %v1739, %v1740
      %v1742 = vrot.slane %v1615, 1
      %v1743 = vsel %vm596, %v1740, %v1742
      %v1776 = vmax.f32 %v1568, %v1666
      %v1777 = vmax.f32 %v1569, %v1668
      %v1778 = vmax.f32 %v1571, %v1671
      %v1779 = vmax.f32 %v1572, %v1673
      %v1780 = vmax.f32 %v1574, %v1676
      %v1781 = vmax.f32 %v1575, %v1678
      %v1782 = vmax.f32 %v1577, %v1681
      %v1783 = vmax.f32 %v1578, %v1683
      %v1784 = vmax.f32 %v1580, %v1686
      %v1785 = vmax.f32 %v1581, %v1688
      %v1786 = vmax.f32 %v1583, %v1691
      %v1787 = vmax.f32 %v1584, %v1693
      %v1788 = vmax.f32 %v1586, %v1696
      %v1789 = vmax.f32 %v1587, %v1698
      %v1790 = vmax.f32 %v1589, %v1701
      %v1791 = vmax.f32 %v1590, %v1703
      %v1792 = vmax.f32 %v1592, %v1706
      %v1793 = vmax.f32 %v1593, %v1708
      %v1794 = vmax.f32 %v1595, %v1711
      %v1795 = vmax.f32 %v1596, %v1713
      %v1796 = vmax.f32 %v1598, %v1716
      %v1797 = vmax.f32 %v1599, %v1718
      %v1798 = vmax.f32 %v1601, %v1721
      %v1799 = vmax.f32 %v1602, %v1723
      %v1800 = vmax.f32 %v1604, %v1726
      %v1801 = vmax.f32 %v1605, %v1728
      %v1802 = vmax.f32 %v1607, %v1731
      %v1803 = vmax.f32 %v1608, %v1733
      %v1804 = vmax.f32 %v1610, %v1736
      %v1805 = vmax.f32 %v1611, %v1738
      %v1806 = vmax.f32 %v1613, %v1741
      %v1807 = vmax.f32 %v1614, %v1743
      %v1808 = vrot.slane %v1568, 2
      %v1809 = vrot.slane %v1569, 2
      %v1810 = vsel %vm741, %v1808, %v1809
      %v1811 = vrot.slane %v1570, 2
      %v1812 = vsel %vm741, %v1809, %v1811
      %v1813 = vrot.slane %v1571, 2
      %v1814 = vrot.slane %v1572, 2
      %v1815 = vsel %vm741, %v1813, %v1814
      %v1816 = vrot.slane %v1573, 2
      %v1817 = vsel %vm741, %v1814, %v1816
      %v1818 = vrot.slane %v1574, 2
      %v1819 = vrot.slane %v1575, 2
      %v1820 = vsel %vm741, %v1818, %v1819
      %v1821 = vrot.slane %v1576, 2
      %v1822 = vsel %vm741, %v1819, %v1821
      %v1823 = vrot.slane %v1577, 2
      %v1824 = vrot.slane %v1578, 2
      %v1825 = vsel %vm741, %v1823, %v1824
      %v1826 = vrot.slane %v1579, 2
      %v1827 = vsel %vm741, %v1824, %v1826
      %v1828 = vrot.slane %v1580, 2
      %v1829 = vrot.slane %v1581, 2
      %v1830 = vsel %vm741, %v1828, %v1829
      %v1831 = vrot.slane %v1582, 2
      %v1832 = vsel %vm741, %v1829, %v1831
      %v1833 = vrot.slane %v1583, 2
      %v1834 = vrot.slane %v1584, 2
      %v1835 = vsel %vm741, %v1833, %v1834
      %v1836 = vrot.slane %v1585, 2
      %v1837 = vsel %vm741, %v1834, %v1836
      %v1838 = vrot.slane %v1586, 2
      %v1839 = vrot.slane %v1587, 2
      %v1840 = vsel %vm741, %v1838, %v1839
      %v1841 = vrot.slane %v1588, 2
      %v1842 = vsel %vm741, %v1839, %v1841
      %v1843 = vrot.slane %v1589, 2
      %v1844 = vrot.slane %v1590, 2
      %v1845 = vsel %vm741, %v1843, %v1844
      %v1846 = vrot.slane %v1591, 2
      %v1847 = vsel %vm741, %v1844, %v1846
      %v1848 = vrot.slane %v1592, 2
      %v1849 = vrot.slane %v1593, 2
      %v1850 = vsel %vm741, %v1848, %v1849
      %v1851 = vrot.slane %v1594, 2
      %v1852 = vsel %vm741, %v1849, %v1851
      %v1853 = vrot.slane %v1595, 2
      %v1854 = vrot.slane %v1596, 2
      %v1855 = vsel %vm741, %v1853, %v1854
      %v1856 = vrot.slane %v1597, 2
      %v1857 = vsel %vm741, %v1854, %v1856
      %v1858 = vrot.slane %v1598, 2
      %v1859 = vrot.slane %v1599, 2
      %v1860 = vsel %vm741, %v1858, %v1859
      %v1861 = vrot.slane %v1600, 2
      %v1862 = vsel %vm741, %v1859, %v1861
      %v1863 = vrot.slane %v1601, 2
      %v1864 = vrot.slane %v1602, 2
      %v1865 = vsel %vm741, %v1863, %v1864
      %v1866 = vrot.slane %v1603, 2
      %v1867 = vsel %vm741, %v1864, %v1866
      %v1868 = vrot.slane %v1604, 2
      %v1869 = vrot.slane %v1605, 2
      %v1870 = vsel %vm741, %v1868, %v1869
      %v1871 = vrot.slane %v1606, 2
      %v1872 = vsel %vm741, %v1869, %v1871
      %v1873 = vrot.slane %v1607, 2
      %v1874 = vrot.slane %v1608, 2
      %v1875 = vsel %vm741, %v1873, %v1874
      %v1876 = vrot.slane %v1609, 2
      %v1877 = vsel %vm741, %v1874, %v1876
      %v1878 = vrot.slane %v1610, 2
      %v1879 = vrot.slane %v1611, 2
      %v1880 = vsel %vm741, %v1878, %v1879
      %v1881 = vrot.slane %v1612, 2
      %v1882 = vsel %vm741, %v1879, %v1881
      %v1883 = vrot.slane %v1613, 2
      %v1884 = vrot.slane %v1614, 2
      %v1885 = vsel %vm741, %v1883, %v1884
      %v1886 = vrot.slane %v1615, 2
      %v1887 = vsel %vm741, %v1884, %v1886
      %v1920 = vmax.f32 %v1776, %v1810
      %v1921 = vmax.f32 %v1777, %v1812
      %v1922 = vmax.f32 %v1778, %v1815
      %v1923 = vmax.f32 %v1779, %v1817
      %v1924 = vmax.f32 %v1780, %v1820
      %v1925 = vmax.f32 %v1781, %v1822
      %v1926 = vmax.f32 %v1782, %v1825
      %v1927 = vmax.f32 %v1783, %v1827
      %v1928 = vmax.f32 %v1784, %v1830
      %v1929 = vmax.f32 %v1785, %v1832
      %v1930 = vmax.f32 %v1786, %v1835
      %v1931 = vmax.f32 %v1787, %v1837
      %v1932 = vmax.f32 %v1788, %v1840
      %v1933 = vmax.f32 %v1789, %v1842
      %v1934 = vmax.f32 %v1790, %v1845
      %v1935 = vmax.f32 %v1791, %v1847
      %v1936 = vmax.f32 %v1792, %v1850
      %v1937 = vmax.f32 %v1793, %v1852
      %v1938 = vmax.f32 %v1794, %v1855
      %v1939 = vmax.f32 %v1795, %v1857
      %v1940 = vmax.f32 %v1796, %v1860
      %v1941 = vmax.f32 %v1797, %v1862
      %v1942 = vmax.f32 %v1798, %v1865
      %v1943 = vmax.f32 %v1799, %v1867
      %v1944 = vmax.f32 %v1800, %v1870
      %v1945 = vmax.f32 %v1801, %v1872
      %v1946 = vmax.f32 %v1802, %v1875
      %v1947 = vmax.f32 %v1803, %v1877
      %v1948 = vmax.f32 %v1804, %v1880
      %v1949 = vmax.f32 %v1805, %v1882
      %v1950 = vmax.f32 %v1806, %v1885
      %v1951 = vmax.f32 %v1807, %v1887
      %v1952 = vperm.slane %v415, 0
      %v1953 = vmul.f32 %v1920, %v1952
      %v1954 = vmul.f32 %v1921, %v1952
      %v1955 = vmul.f32 %v1922, %v1952
      %v1956 = vmul.f32 %v1923, %v1952
      %v1957 = vmul.f32 %v1924, %v1952
      %v1958 = vmul.f32 %v1925, %v1952
      %v1959 = vmul.f32 %v1926, %v1952
      %v1960 = vmul.f32 %v1927, %v1952
      %v1961 = vmul.f32 %v1928, %v1952
      %v1962 = vmul.f32 %v1929, %v1952
      %v1963 = vmul.f32 %v1930, %v1952
      %v1964 = vmul.f32 %v1931, %v1952
      %v1965 = vmul.f32 %v1932, %v1952
      %v1966 = vmul.f32 %v1933, %v1952
      %v1967 = vmul.f32 %v1934, %v1952
      %v1968 = vmul.f32 %v1935, %v1952
      %v1969 = vmul.f32 %v1936, %v1952
      %v1970 = vmul.f32 %v1937, %v1952
      %v1971 = vmul.f32 %v1938, %v1952
      %v1972 = vmul.f32 %v1939, %v1952
      %v1973 = vmul.f32 %v1940, %v1952
      %v1974 = vmul.f32 %v1941, %v1952
      %v1975 = vmul.f32 %v1942, %v1952
      %v1976 = vmul.f32 %v1943, %v1952
      %v1977 = vmul.f32 %v1944, %v1952
      %v1978 = vmul.f32 %v1945, %v1952
      %v1979 = vmul.f32 %v1946, %v1952
      %v1980 = vmul.f32 %v1947, %v1952
      %v1981 = vmul.f32 %v1948, %v1952
      %v1982 = vmul.f32 %v1949, %v1952
      %v1983 = vmul.f32 %v1950, %v1952
      %v1984 = vmul.f32 %v1951, %v1952
      %v1985 = vadd.f32 %v1110, %v1953
      %v1986 = vadd.f32 %v1111, %v1954
      %v1987 = vadd.f32 %v1112, %v1955
      %v1988 = vadd.f32 %v1113, %v1956
      %v1989 = vadd.f32 %v1114, %v1957
      %v1990 = vadd.f32 %v1115, %v1958
      %v1991 = vadd.f32 %v1116, %v1959
      %v1992 = vadd.f32 %v1117, %v1960
      %v1993 = vadd.f32 %v1118, %v1961
      %v1994 = vadd.f32 %v1119, %v1962
      %v1995 = vadd.f32 %v1120, %v1963
      %v1996 = vadd.f32 %v1121, %v1964
      %v1997 = vadd.f32 %v1122, %v1965
      %v1998 = vadd.f32 %v1123, %v1966
      %v1999 = vadd.f32 %v1124, %v1967
      %v2000 = vadd.f32 %v1125, %v1968
      %v2001 = vadd.f32 %v1126, %v1969
      %v2002 = vadd.f32 %v1127, %v1970
      %v2003 = vadd.f32 %v1128, %v1971
      %v2004 = vadd.f32 %v1129, %v1972
      %v2005 = vadd.f32 %v1130, %v1973
      %v2006 = vadd.f32 %v1131, %v1974
      %v2007 = vadd.f32 %v1132, %v1975
      %v2008 = vadd.f32 %v1133, %v1976
      %v2009 = vadd.f32 %v1134, %v1977
      %v2010 = vadd.f32 %v1135, %v1978
      %v2011 = vadd.f32 %v1136, %v1979
      %v2012 = vadd.f32 %v1137, %v1980
      %v2013 = vadd.f32 %v1138, %v1981
      %v2014 = vadd.f32 %v1139, %v1982
      %v2015 = vadd.f32 %v1140, %v1983
      %v2016 = vadd.f32 %v1141, %v1984
      %v2017 = vmax.f32 %v253, 0.0
      %v2018 = vmax.f32 %v254, 0.0
      %v2019 = vmax.f32 %v255, 0.0
      %v2020 = vmax.f32 %v256, 0.0
      %v2021 = vmax.f32 %v257, 0.0
      %v2022 = vmax.f32 %v258, 0.0
      %v2023 = vmax.f32 %v259, 0.0
      %v2024 = vmax.f32 %v260, 0.0
      %v2025 = vmax.f32 %v261, 0.0
      %v2026 = vmax.f32 %v262, 0.0
      %v2027 = vmax.f32 %v263, 0.0
      %v2028 = vmax.f32 %v264, 0.0
      %v2029 = vmax.f32 %v265, 0.0
      %v2030 = vmax.f32 %v266, 0.0
      %v2031 = vmax.f32 %v267, 0.0
      %v2032 = vmax.f32 %v268, 0.0
      %v2033 = vmax.f32 %v269, 0.0
      %v2034 = vmax.f32 %v270, 0.0
      %v2035 = vmax.f32 %v271, 0.0
      %v2036 = vmax.f32 %v272, 0.0
      %v2037 = vmax.f32 %v273, 0.0
      %v2038 = vmax.f32 %v274, 0.0
      %v2039 = vmax.f32 %v275, 0.0
      %v2040 = vmax.f32 %v276, 0.0
      %v2041 = vmax.f32 %v277, 0.0
      %v2042 = vmax.f32 %v278, 0.0
      %v2043 = vmax.f32 %v279, 0.0
      %v2044 = vmax.f32 %v280, 0.0
      %v2045 = vmax.f32 %v281, 0.0
      %v2046 = vmax.f32 %v282, 0.0
      %v2047 = vmax.f32 %v283, 0.0
      %v2048 = vmax.f32 %v284, 0.0
      %v2049 = vpack.c.bf16 %v2017, %v2017
      %v2050 = vpack.c.bf16 %v2018, %v2018
      %v2051 = vpack.c.bf16 %v2019, %v2019
      %v2052 = vpack.c.bf16 %v2020, %v2020
      %v2053 = vpack.c.bf16 %v2021, %v2021
      %v2054 = vpack.c.bf16 %v2022, %v2022
      %v2055 = vpack.c.bf16 %v2023, %v2023
      %v2056 = vpack.c.bf16 %v2024, %v2024
      %v2057 = vpack.c.bf16 %v2025, %v2025
      %v2058 = vpack.c.bf16 %v2026, %v2026
      %v2059 = vpack.c.bf16 %v2027, %v2027
      %v2060 = vpack.c.bf16 %v2028, %v2028
      %v2061 = vpack.c.bf16 %v2029, %v2029
      %v2062 = vpack.c.bf16 %v2030, %v2030
      %v2063 = vpack.c.bf16 %v2031, %v2031
      %v2064 = vpack.c.bf16 %v2032, %v2032
      %v2065 = vpack.c.bf16 %v2033, %v2033
      %v2066 = vpack.c.bf16 %v2034, %v2034
      %v2067 = vpack.c.bf16 %v2035, %v2035
      %v2068 = vpack.c.bf16 %v2036, %v2036
      %v2069 = vpack.c.bf16 %v2037, %v2037
      %v2070 = vpack.c.bf16 %v2038, %v2038
      %v2071 = vpack.c.bf16 %v2039, %v2039
      %v2072 = vpack.c.bf16 %v2040, %v2040
      %v2073 = vpack.c.bf16 %v2041, %v2041
      %v2074 = vpack.c.bf16 %v2042, %v2042
      %v2075 = vpack.c.bf16 %v2043, %v2043
      %v2076 = vpack.c.bf16 %v2044, %v2044
      %v2077 = vpack.c.bf16 %v2045, %v2045
      %v2078 = vpack.c.bf16 %v2046, %v2046
      %v2079 = vpack.c.bf16 %v2047, %v2047
      %v2080 = vpack.c.bf16 %v2048, %v2048
      %v2081 = vld [vmem:[%s2] sm:$0xf]
      %v2114 = vunpack.c.l.b16 %v2049
      %v2115 = vunpack.c.l.b16 %v2050
      %v2116 = vunpack.c.l.b16 %v2051
      %v2117 = vunpack.c.l.b16 %v2052
      %v2118 = vunpack.c.l.b16 %v2053
      %v2119 = vunpack.c.l.b16 %v2054
      %v2120 = vunpack.c.l.b16 %v2055
      %v2121 = vunpack.c.l.b16 %v2056
      %v2122 = vunpack.c.l.b16 %v2057
      %v2123 = vunpack.c.l.b16 %v2058
      %v2124 = vunpack.c.l.b16 %v2059
      %v2125 = vunpack.c.l.b16 %v2060
      %v2126 = vunpack.c.l.b16 %v2061
      %v2127 = vunpack.c.l.b16 %v2062
      %v2128 = vunpack.c.l.b16 %v2063
      %v2129 = vunpack.c.l.b16 %v2064
      %v2130 = vunpack.c.l.b16 %v2065
      %v2131 = vunpack.c.l.b16 %v2066
      %v2132 = vunpack.c.l.b16 %v2067
      %v2133 = vunpack.c.l.b16 %v2068
      %v2134 = vunpack.c.l.b16 %v2069
      %v2135 = vunpack.c.l.b16 %v2070
      %v2136 = vunpack.c.l.b16 %v2071
      %v2137 = vunpack.c.l.b16 %v2072
      %v2138 = vunpack.c.l.b16 %v2073
      %v2139 = vunpack.c.l.b16 %v2074
      %v2140 = vunpack.c.l.b16 %v2075
      %v2141 = vunpack.c.l.b16 %v2076
      %v2142 = vunpack.c.l.b16 %v2077
      %v2143 = vunpack.c.l.b16 %v2078
      %v2144 = vunpack.c.l.b16 %v2079
      %v2145 = vunpack.c.l.b16 %v2080
      %v2146 = vpack.c.b16 %v2115, %v2114
      %v2147 = vpack.c.b16 %v2117, %v2116
      %v2148 = vpack.c.b16 %v2119, %v2118
      %v2149 = vpack.c.b16 %v2121, %v2120
      %v2150 = vpack.c.b16 %v2123, %v2122
      %v2151 = vpack.c.b16 %v2125, %v2124
      %v2152 = vpack.c.b16 %v2127, %v2126
      %v2153 = vpack.c.b16 %v2129, %v2128
      %v2154 = vpack.c.b16 %v2131, %v2130
      %v2155 = vpack.c.b16 %v2133, %v2132
      %v2156 = vpack.c.b16 %v2135, %v2134
      %v2157 = vpack.c.b16 %v2137, %v2136
      %v2158 = vpack.c.b16 %v2139, %v2138
      %v2159 = vpack.c.b16 %v2141, %v2140
      %v2160 = vpack.c.b16 %v2143, %v2142
      %v2161 = vpack.c.b16 %v2145, %v2144
      %v2163 = vsel %vm285, %v2146, 0
      %v2166 = vsel %vm285, %v2147, 0
      %v2169 = vsel %vm285, %v2148, 0
      %v2172 = vsel %vm285, %v2149, 0
      %v2175 = vsel %vm285, %v2150, 0
      %v2178 = vsel %vm285, %v2151, 0
      %v2181 = vsel %vm285, %v2152, 0
      %v2184 = vsel %vm285, %v2153, 0
      %v2187 = vsel %vm285, %v2154, 0
      %v2190 = vsel %vm285, %v2155, 0
      %v2193 = vsel %vm285, %v2156, 0
      %v2196 = vsel %vm285, %v2157, 0
      %v2199 = vsel %vm285, %v2158, 0
      %v2202 = vsel %vm285, %v2159, 0
      %v2205 = vsel %vm285, %v2160, 0
      %v2208 = vsel %vm285, %v2161, 0
      %vm2210 = vcmask 1043456
      %v2212 = vsel %vm2210, %v2081, 0
      %2214 = vmatpush.bf16.msra.mxu0 0
      %2215 = vmatpush.bf16.msra.mxu0 0
      %2216 = vmatpush.bf16.msra.mxu0 0
      %2217 = vmatpush.bf16.msra.mxu0 0
      %2218 = vmatpush.bf16.msra.mxu0 0
      %2219 = vmatpush.bf16.msra.mxu0 0
      %2220 = vmatpush.bf16.msra.mxu0 0
      %2221 = vmatpush.bf16.msra.mxu0 %v2212
      %2222 = vmatmul.bf16.gmra.mxu0 %v2163
      %v2223 = vpop.f32.mrf.mxu0
      %v2224 = vadd.f32 0.0, %v2223
      %v2225 = vpop.f32.mrf.mxu0
      %v2226 = vadd.f32 0.0, %v2225
      %2227 = vmatmul.bf16.gmra.mxu0 %v2166
      %v2228 = vpop.f32.mrf.mxu0
      %v2229 = vadd.f32 0.0, %v2228
      %v2230 = vpop.f32.mrf.mxu0
      %v2231 = vadd.f32 0.0, %v2230
      %2232 = vmatmul.bf16.gmra.mxu0 %v2169
      %v2233 = vpop.f32.mrf.mxu0
      %v2234 = vadd.f32 0.0, %v2233
      %v2235 = vpop.f32.mrf.mxu0
      %v2236 = vadd.f32 0.0, %v2235
      %2237 = vmatmul.bf16.gmra.mxu0 %v2172
      %v2238 = vpop.f32.mrf.mxu0
      %v2239 = vadd.f32 0.0, %v2238
      %v2240 = vpop.f32.mrf.mxu0
      %v2241 = vadd.f32 0.0, %v2240
      %2242 = vmatmul.bf16.gmra.mxu0 %v2175
      %v2243 = vpop.f32.mrf.mxu0
      %v2244 = vadd.f32 0.0, %v2243
      %v2245 = vpop.f32.mrf.mxu0
      %v2246 = vadd.f32 0.0, %v2245
      %2247 = vmatmul.bf16.gmra.mxu0 %v2178
      %v2248 = vpop.f32.mrf.mxu0
      %v2249 = vadd.f32 0.0, %v2248
      %v2250 = vpop.f32.mrf.mxu0
      %v2251 = vadd.f32 0.0, %v2250
      %2252 = vmatmul.bf16.gmra.mxu0 %v2181
      %v2253 = vpop.f32.mrf.mxu0
      %v2254 = vadd.f32 0.0, %v2253
      %v2255 = vpop.f32.mrf.mxu0
      %v2256 = vadd.f32 0.0, %v2255
      %2257 = vmatmul.bf16.gmra.mxu0 %v2184
      %v2258 = vpop.f32.mrf.mxu0
      %v2259 = vadd.f32 0.0, %v2258
      %v2260 = vpop.f32.mrf.mxu0
      %v2261 = vadd.f32 0.0, %v2260
      %2262 = vmatmul.bf16.gmra.mxu0 %v2187
      %v2263 = vpop.f32.mrf.mxu0
      %v2264 = vadd.f32 0.0, %v2263
      %v2265 = vpop.f32.mrf.mxu0
      %v2266 = vadd.f32 0.0, %v2265
      %2267 = vmatmul.bf16.gmra.mxu0 %v2190
      %v2268 = vpop.f32.mrf.mxu0
      %v2269 = vadd.f32 0.0, %v2268
      %v2270 = vpop.f32.mrf.mxu0
      %v2271 = vadd.f32 0.0, %v2270
      %2272 = vmatmul.bf16.gmra.mxu0 %v2193
      %v2273 = vpop.f32.mrf.mxu0
      %v2274 = vadd.f32 0.0, %v2273
      %v2275 = vpop.f32.mrf.mxu0
      %v2276 = vadd.f32 0.0, %v2275
      %2277 = vmatmul.bf16.gmra.mxu0 %v2196
      %v2278 = vpop.f32.mrf.mxu0
      %v2279 = vadd.f32 0.0, %v2278
      %v2280 = vpop.f32.mrf.mxu0
      %v2281 = vadd.f32 0.0, %v2280
      %2282 = vmatmul.bf16.gmra.mxu0 %v2199
      %v2283 = vpop.f32.mrf.mxu0
      %v2284 = vadd.f32 0.0, %v2283
      %v2285 = vpop.f32.mrf.mxu0
      %v2286 = vadd.f32 0.0, %v2285
      %2287 = vmatmul.bf16.gmra.mxu0 %v2202
      %v2288 = vpop.f32.mrf.mxu0
      %v2289 = vadd.f32 0.0, %v2288
      %v2290 = vpop.f32.mrf.mxu0
      %v2291 = vadd.f32 0.0, %v2290
      %2292 = vmatmul.bf16.gmra.mxu0 %v2205
      %v2293 = vpop.f32.mrf.mxu0
      %v2294 = vadd.f32 0.0, %v2293
      %v2295 = vpop.f32.mrf.mxu0
      %v2296 = vadd.f32 0.0, %v2295
      %2297 = vmatmul.bf16.gmra.mxu0 %v2208
      %v2298 = vpop.f32.mrf.mxu0
      %v2299 = vadd.f32 0.0, %v2298
      %v2300 = vpop.f32.mrf.mxu0
      %v2301 = vadd.f32 0.0, %v2300
      %2302 = vdwg.mxu0
      %v2303 = vmax.f32 %v360, 0.0
      %v2304 = vmax.f32 %v361, 0.0
      %v2305 = vmax.f32 %v363, 0.0
      %v2306 = vmax.f32 %v364, 0.0
      %v2307 = vmax.f32 %v366, 0.0
      %v2308 = vmax.f32 %v367, 0.0
      %v2309 = vmax.f32 %v369, 0.0
      %v2310 = vmax.f32 %v370, 0.0
      %v2311 = vmax.f32 %v372, 0.0
      %v2312 = vmax.f32 %v373, 0.0
      %v2313 = vmax.f32 %v375, 0.0
      %v2314 = vmax.f32 %v376, 0.0
      %v2315 = vmax.f32 %v378, 0.0
      %v2316 = vmax.f32 %v379, 0.0
      %v2317 = vmax.f32 %v381, 0.0
      %v2318 = vmax.f32 %v382, 0.0
      %v2319 = vmax.f32 %v384, 0.0
      %v2320 = vmax.f32 %v385, 0.0
      %v2321 = vmax.f32 %v387, 0.0
      %v2322 = vmax.f32 %v388, 0.0
      %v2323 = vmax.f32 %v390, 0.0
      %v2324 = vmax.f32 %v391, 0.0
      %v2325 = vmax.f32 %v393, 0.0
      %v2326 = vmax.f32 %v394, 0.0
      %v2327 = vmax.f32 %v396, 0.0
      %v2328 = vmax.f32 %v397, 0.0
      %v2329 = vmax.f32 %v399, 0.0
      %v2330 = vmax.f32 %v400, 0.0
      %v2331 = vmax.f32 %v402, 0.0
      %v2332 = vmax.f32 %v403, 0.0
      %v2333 = vmax.f32 %v405, 0.0
      %v2334 = vmax.f32 %v406, 0.0
      %v2335 = vpack.c.bf16 %v2303, %v2303
      %v2336 = vpack.c.bf16 %v2304, %v2304
      %v2337 = vpack.c.bf16 %v2305, %v2305
      %v2338 = vpack.c.bf16 %v2306, %v2306
      %v2339 = vpack.c.bf16 %v2307, %v2307
      %v2340 = vpack.c.bf16 %v2308, %v2308
      %v2341 = vpack.c.bf16 %v2309, %v2309
      %v2342 = vpack.c.bf16 %v2310, %v2310
      %v2343 = vpack.c.bf16 %v2311, %v2311
      %v2344 = vpack.c.bf16 %v2312, %v2312
      %v2345 = vpack.c.bf16 %v2313, %v2313
      %v2346 = vpack.c.bf16 %v2314, %v2314
      %v2347 = vpack.c.bf16 %v2315, %v2315
      %v2348 = vpack.c.bf16 %v2316, %v2316
      %v2349 = vpack.c.bf16 %v2317, %v2317
      %v2350 = vpack.c.bf16 %v2318, %v2318
      %v2351 = vpack.c.bf16 %v2319, %v2319
      %v2352 = vpack.c.bf16 %v2320, %v2320
      %v2353 = vpack.c.bf16 %v2321, %v2321
      %v2354 = vpack.c.bf16 %v2322, %v2322
      %v2355 = vpack.c.bf16 %v2323, %v2323
      %v2356 = vpack.c.bf16 %v2324, %v2324
      %v2357 = vpack.c.bf16 %v2325, %v2325
      %v2358 = vpack.c.bf16 %v2326, %v2326
      %v2359 = vpack.c.bf16 %v2327, %v2327
      %v2360 = vpack.c.bf16 %v2328, %v2328
      %v2361 = vpack.c.bf16 %v2329, %v2329
      %v2362 = vpack.c.bf16 %v2330, %v2330
      %v2363 = vpack.c.bf16 %v2331, %v2331
      %v2364 = vpack.c.bf16 %v2332, %v2332
      %v2365 = vpack.c.bf16 %v2333, %v2333
      %v2366 = vpack.c.bf16 %v2334, %v2334
      %v2367 = vmax.f32 %v362, 0.0
      %v2368 = vmax.f32 %v365, 0.0
      %v2369 = vmax.f32 %v368, 0.0
      %v2370 = vmax.f32 %v371, 0.0
      %v2371 = vmax.f32 %v374, 0.0
      %v2372 = vmax.f32 %v377, 0.0
      %v2373 = vmax.f32 %v380, 0.0
      %v2374 = vmax.f32 %v383, 0.0
      %v2375 = vmax.f32 %v386, 0.0
      %v2376 = vmax.f32 %v389, 0.0
      %v2377 = vmax.f32 %v392, 0.0
      %v2378 = vmax.f32 %v395, 0.0
      %v2379 = vmax.f32 %v398, 0.0
      %v2380 = vmax.f32 %v401, 0.0
      %v2381 = vmax.f32 %v404, 0.0
      %v2382 = vmax.f32 %v407, 0.0
      %v2383 = vpack.c.bf16 %v2367, %v2367
      %v2384 = vpack.c.bf16 %v2368, %v2368
      %v2385 = vpack.c.bf16 %v2369, %v2369
      %v2386 = vpack.c.bf16 %v2370, %v2370
      %v2387 = vpack.c.bf16 %v2371, %v2371
      %v2388 = vpack.c.bf16 %v2372, %v2372
      %v2389 = vpack.c.bf16 %v2373, %v2373
      %v2390 = vpack.c.bf16 %v2374, %v2374
      %v2391 = vpack.c.bf16 %v2375, %v2375
      %v2392 = vpack.c.bf16 %v2376, %v2376
      %v2393 = vpack.c.bf16 %v2377, %v2377
      %v2394 = vpack.c.bf16 %v2378, %v2378
      %v2395 = vpack.c.bf16 %v2379, %v2379
      %v2396 = vpack.c.bf16 %v2380, %v2380
      %v2397 = vpack.c.bf16 %v2381, %v2381
      %v2398 = vpack.c.bf16 %v2382, %v2382
      %vm2399 = vsmask.f32 3328
      %vm2400 = vsmask.f32 7440
      %vm2401 = vmor %vm2399, %vm2400
      %v2403 = vshrl.u32 %v2335, 16
      %v2405 = vrot.slane %v2403, 4
      %v2406 = vshll.u32 %v2335, 16
      %v2408 = vrot.slane %v2406, 5
      %v2409 = vor.u32 %v2405, %v2408
      %v2410 = vrot.slane %v2409, 4
      %v2412 = vshll.u32 %v2336, 16
      %v2414 = vrot.slane %v2412, 5
      %v2415 = vsel %vm2401, %v2410, %v2414
      %v2416 = vshrl.u32 %v2336, 16
      %v2418 = vrot.slane %v2416, 4
      %v2419 = vor.u32 %v2418, %v2414
      %v2420 = vrot.slane %v2419, 4
      %v2422 = vshll.u32 %v2383, 16
      %v2424 = vrot.slane %v2422, 5
      %v2425 = vsel %vm2401, %v2420, %v2424
      %v2427 = vshrl.u32 %v2337, 16
      %v2429 = vrot.slane %v2427, 4
      %v2430 = vshll.u32 %v2337, 16
      %v2432 = vrot.slane %v2430, 5
      %v2433 = vor.u32 %v2429, %v2432
      %v2434 = vrot.slane %v2433, 4
      %v2436 = vshll.u32 %v2338, 16
      %v2438 = vrot.slane %v2436, 5
      %v2439 = vsel %vm2401, %v2434, %v2438
      %v2440 = vshrl.u32 %v2338, 16
      %v2442 = vrot.slane %v2440, 4
      %v2443 = vor.u32 %v2442, %v2438
      %v2444 = vrot.slane %v2443, 4
      %v2446 = vshll.u32 %v2384, 16
      %v2448 = vrot.slane %v2446, 5
      %v2449 = vsel %vm2401, %v2444, %v2448
      %v2451 = vshrl.u32 %v2339, 16
      %v2453 = vrot.slane %v2451, 4
      %v2454 = vshll.u32 %v2339, 16
      %v2456 = vrot.slane %v2454, 5
      %v2457 = vor.u32 %v2453, %v2456
      %v2458 = vrot.slane %v2457, 4
      %v2460 = vshll.u32 %v2340, 16
      %v2462 = vrot.slane %v2460, 5
      %v2463 = vsel %vm2401, %v2458, %v2462
      %v2464 = vshrl.u32 %v2340, 16
      %v2466 = vrot.slane %v2464, 4
      %v2467 = vor.u32 %v2466, %v2462
      %v2468 = vrot.slane %v2467, 4
      %v2470 = vshll.u32 %v2385, 16
      %v2472 = vrot.slane %v2470, 5
      %v2473 = vsel %vm2401, %v2468, %v2472
      %v2475 = vshrl.u32 %v2341, 16
      %v2477 = vrot.slane %v2475, 4
      %v2478 = vshll.u32 %v2341, 16
      %v2480 = vrot.slane %v2478, 5
      %v2481 = vor.u32 %v2477, %v2480
      %v2482 = vrot.slane %v2481, 4
      %v2484 = vshll.u32 %v2342, 16
      %v2486 = vrot.slane %v2484, 5
      %v2487 = vsel %vm2401, %v2482, %v2486
      %v2488 = vshrl.u32 %v2342, 16
      %v2490 = vrot.slane %v2488, 4
      %v2491 = vor.u32 %v2490, %v2486
      %v2492 = vrot.slane %v2491, 4
      %v2494 = vshll.u32 %v2386, 16
      %v2496 = vrot.slane %v2494, 5
      %v2497 = vsel %vm2401, %v2492, %v2496
      %v2499 = vshrl.u32 %v2343, 16
      %v2501 = vrot.slane %v2499, 4
      %v2502 = vshll.u32 %v2343, 16
      %v2504 = vrot.slane %v2502, 5
      %v2505 = vor.u32 %v2501, %v2504
      %v2506 = vrot.slane %v2505, 4
      %v2508 = vshll.u32 %v2344, 16
      %v2510 = vrot.slane %v2508, 5
      %v2511 = vsel %vm2401, %v2506, %v2510
      %v2512 = vshrl.u32 %v2344, 16
      %v2514 = vrot.slane %v2512, 4
      %v2515 = vor.u32 %v2514, %v2510
      %v2516 = vrot.slane %v2515, 4
      %v2518 = vshll.u32 %v2387, 16
      %v2520 = vrot.slane %v2518, 5
      %v2521 = vsel %vm2401, %v2516, %v2520
      %v2523 = vshrl.u32 %v2345, 16
      %v2525 = vrot.slane %v2523, 4
      %v2526 = vshll.u32 %v2345, 16
      %v2528 = vrot.slane %v2526, 5
      %v2529 = vor.u32 %v2525, %v2528
      %v2530 = vrot.slane %v2529, 4
      %v2532 = vshll.u32 %v2346, 16
      %v2534 = vrot.slane %v2532, 5
      %v2535 = vsel %vm2401, %v2530, %v2534
      %v2536 = vshrl.u32 %v2346, 16
      %v2538 = vrot.slane %v2536, 4
      %v2539 = vor.u32 %v2538, %v2534
      %v2540 = vrot.slane %v2539, 4
      %v2542 = vshll.u32 %v2388, 16
      %v2544 = vrot.slane %v2542, 5
      %v2545 = vsel %vm2401, %v2540, %v2544
      %v2547 = vshrl.u32 %v2347, 16
      %v2549 = vrot.slane %v2547, 4
      %v2550 = vshll.u32 %v2347, 16
      %v2552 = vrot.slane %v2550, 5
      %v2553 = vor.u32 %v2549, %v2552
      %v2554 = vrot.slane %v2553, 4
      %v2556 = vshll.u32 %v2348, 16
      %v2558 = vrot.slane %v2556, 5
      %v2559 = vsel %vm2401, %v2554, %v2558
      %v2560 = vshrl.u32 %v2348, 16
      %v2562 = vrot.slane %v2560, 4
      %v2563 = vor.u32 %v2562, %v2558
      %v2564 = vrot.slane %v2563, 4
      %v2566 = vshll.u32 %v2389, 16
      %v2568 = vrot.slane %v2566, 5
      %v2569 = vsel %vm2401, %v2564, %v2568
      %v2571 = vshrl.u32 %v2349, 16
      %v2573 = vrot.slane %v2571, 4
      %v2574 = vshll.u32 %v2349, 16
      %v2576 = vrot.slane %v2574, 5
      %v2577 = vor.u32 %v2573, %v2576
      %v2578 = vrot.slane %v2577, 4
      %v2580 = vshll.u32 %v2350, 16
      %v2582 = vrot.slane %v2580, 5
      %v2583 = vsel %vm2401, %v2578, %v2582
      %v2584 = vshrl.u32 %v2350, 16
      %v2586 = vrot.slane %v2584, 4
      %v2587 = vor.u32 %v2586, %v2582
      %v2588 = vrot.slane %v2587, 4
      %v2590 = vshll.u32 %v2390, 16
      %v2592 = vrot.slane %v2590, 5
      %v2593 = vsel %vm2401, %v2588, %v2592
      %v2595 = vshrl.u32 %v2351, 16
      %v2597 = vrot.slane %v2595, 4
      %v2598 = vshll.u32 %v2351, 16
      %v2600 = vrot.slane %v2598, 5
      %v2601 = vor.u32 %v2597, %v2600
      %v2602 = vrot.slane %v2601, 4
      %v2604 = vshll.u32 %v2352, 16
      %v2606 = vrot.slane %v2604, 5
      %v2607 = vsel %vm2401, %v2602, %v2606
      %v2608 = vshrl.u32 %v2352, 16
      %v2610 = vrot.slane %v2608, 4
      %v2611 = vor.u32 %v2610, %v2606
      %v2612 = vrot.slane %v2611, 4
      %v2614 = vshll.u32 %v2391, 16
      %v2616 = vrot.slane %v2614, 5
      %v2617 = vsel %vm2401, %v2612, %v2616
      %v2619 = vshrl.u32 %v2353, 16
      %v2621 = vrot.slane %v2619, 4
      %v2622 = vshll.u32 %v2353, 16
      %v2624 = vrot.slane %v2622, 5
      %v2625 = vor.u32 %v2621, %v2624
      %v2626 = vrot.slane %v2625, 4
      %v2628 = vshll.u32 %v2354, 16
      %v2630 = vrot.slane %v2628, 5
      %v2631 = vsel %vm2401, %v2626, %v2630
      %v2632 = vshrl.u32 %v2354, 16
      %v2634 = vrot.slane %v2632, 4
      %v2635 = vor.u32 %v2634, %v2630
      %v2636 = vrot.slane %v2635, 4
      %v2638 = vshll.u32 %v2392, 16
      %v2640 = vrot.slane %v2638, 5
      %v2641 = vsel %vm2401, %v2636, %v2640
      %v2643 = vshrl.u32 %v2355, 16
      %v2645 = vrot.slane %v2643, 4
      %v2646 = vshll.u32 %v2355, 16
      %v2648 = vrot.slane %v2646, 5
      %v2649 = vor.u32 %v2645, %v2648
      %v2650 = vrot.slane %v2649, 4
      %v2652 = vshll.u32 %v2356, 16
      %v2654 = vrot.slane %v2652, 5
      %v2655 = vsel %vm2401, %v2650, %v2654
      %v2656 = vshrl.u32 %v2356, 16
      %v2658 = vrot.slane %v2656, 4
      %v2659 = vor.u32 %v2658, %v2654
      %v2660 = vrot.slane %v2659, 4
      %v2662 = vshll.u32 %v2393, 16
      %v2664 = vrot.slane %v2662, 5
      %v2665 = vsel %vm2401, %v2660, %v2664
      %v2667 = vshrl.u32 %v2357, 16
      %v2669 = vrot.slane %v2667, 4
      %v2670 = vshll.u32 %v2357, 16
      %v2672 = vrot.slane %v2670, 5
      %v2673 = vor.u32 %v2669, %v2672
      %v2674 = vrot.slane %v2673, 4
      %v2676 = vshll.u32 %v2358, 16
      %v2678 = vrot.slane %v2676, 5
      %v2679 = vsel %vm2401, %v2674, %v2678
      %v2680 = vshrl.u32 %v2358, 16
      %v2682 = vrot.slane %v2680, 4
      %v2683 = vor.u32 %v2682, %v2678
      %v2684 = vrot.slane %v2683, 4
      %v2686 = vshll.u32 %v2394, 16
      %v2688 = vrot.slane %v2686, 5
      %v2689 = vsel %vm2401, %v2684, %v2688
      %v2691 = vshrl.u32 %v2359, 16
      %v2693 = vrot.slane %v2691, 4
      %v2694 = vshll.u32 %v2359, 16
      %v2696 = vrot.slane %v2694, 5
      %v2697 = vor.u32 %v2693, %v2696
      %v2698 = vrot.slane %v2697, 4
      %v2700 = vshll.u32 %v2360, 16
      %v2702 = vrot.slane %v2700, 5
      %v2703 = vsel %vm2401, %v2698, %v2702
      %v2704 = vshrl.u32 %v2360, 16
      %v2706 = vrot.slane %v2704, 4
      %v2707 = vor.u32 %v2706, %v2702
      %v2708 = vrot.slane %v2707, 4
      %v2710 = vshll.u32 %v2395, 16
      %v2712 = vrot.slane %v2710, 5
      %v2713 = vsel %vm2401, %v2708, %v2712
      %v2715 = vshrl.u32 %v2361, 16
      %v2717 = vrot.slane %v2715, 4
      %v2718 = vshll.u32 %v2361, 16
      %v2720 = vrot.slane %v2718, 5
      %v2721 = vor.u32 %v2717, %v2720
      %v2722 = vrot.slane %v2721, 4
      %v2724 = vshll.u32 %v2362, 16
      %v2726 = vrot.slane %v2724, 5
      %v2727 = vsel %vm2401, %v2722, %v2726
      %v2728 = vshrl.u32 %v2362, 16
      %v2730 = vrot.slane %v2728, 4
      %v2731 = vor.u32 %v2730, %v2726
      %v2732 = vrot.slane %v2731, 4
      %v2734 = vshll.u32 %v2396, 16
      %v2736 = vrot.slane %v2734, 5
      %v2737 = vsel %vm2401, %v2732, %v2736
      %v2739 = vshrl.u32 %v2363, 16
      %v2741 = vrot.slane %v2739, 4
      %v2742 = vshll.u32 %v2363, 16
      %v2744 = vrot.slane %v2742, 5
      %v2745 = vor.u32 %v2741, %v2744
      %v2746 = vrot.slane %v2745, 4
      %v2748 = vshll.u32 %v2364, 16
      %v2750 = vrot.slane %v2748, 5
      %v2751 = vsel %vm2401, %v2746, %v2750
      %v2752 = vshrl.u32 %v2364, 16
      %v2754 = vrot.slane %v2752, 4
      %v2755 = vor.u32 %v2754, %v2750
      %v2756 = vrot.slane %v2755, 4
      %v2758 = vshll.u32 %v2397, 16
      %v2760 = vrot.slane %v2758, 5
      %v2761 = vsel %vm2401, %v2756, %v2760
      %v2763 = vshrl.u32 %v2365, 16
      %v2765 = vrot.slane %v2763, 4
      %v2766 = vshll.u32 %v2365, 16
      %v2768 = vrot.slane %v2766, 5
      %v2769 = vor.u32 %v2765, %v2768
      %v2770 = vrot.slane %v2769, 4
      %v2772 = vshll.u32 %v2366, 16
      %v2774 = vrot.slane %v2772, 5
      %v2775 = vsel %vm2401, %v2770, %v2774
      %v2776 = vshrl.u32 %v2366, 16
      %v2778 = vrot.slane %v2776, 4
      %v2779 = vor.u32 %v2778, %v2774
      %v2780 = vrot.slane %v2779, 4
      %v2782 = vshll.u32 %v2398, 16
      %v2784 = vrot.slane %v2782, 5
      %v2785 = vsel %vm2401, %v2780, %v2784
      %vm2834 = vcmask 1042432
      %vm2835 = vcmask 1046532
      %vm2836 = vmor %vm2834, %vm2835
      %v2837 = vrot.slane %v2335, 5
      %v2838 = vrot.slane %v2837, 4
      %v2839 = vrot.slane %v2336, 5
      %v2840 = vsel %vm2836, %v2838, %v2839
      %v2841 = vrot.slane %v2839, 4
      %v2842 = vrot.slane %v2383, 5
      %v2843 = vsel %vm2836, %v2841, %v2842
      %v2844 = vrot.slane %v2337, 5
      %v2845 = vrot.slane %v2844, 4
      %v2846 = vrot.slane %v2338, 5
      %v2847 = vsel %vm2836, %v2845, %v2846
      %v2848 = vrot.slane %v2846, 4
      %v2849 = vrot.slane %v2384, 5
      %v2850 = vsel %vm2836, %v2848, %v2849
      %v2851 = vrot.slane %v2339, 5
      %v2852 = vrot.slane %v2851, 4
      %v2853 = vrot.slane %v2340, 5
      %v2854 = vsel %vm2836, %v2852, %v2853
      %v2855 = vrot.slane %v2853, 4
      %v2856 = vrot.slane %v2385, 5
      %v2857 = vsel %vm2836, %v2855, %v2856
      %v2858 = vrot.slane %v2341, 5
      %v2859 = vrot.slane %v2858, 4
      %v2860 = vrot.slane %v2342, 5
      %v2861 = vsel %vm2836, %v2859, %v2860
      %v2862 = vrot.slane %v2860, 4
      %v2863 = vrot.slane %v2386, 5
      %v2864 = vsel %vm2836, %v2862, %v2863
      %v2865 = vrot.slane %v2343, 5
      %v2866 = vrot.slane %v2865, 4
      %v2867 = vrot.slane %v2344, 5
      %v2868 = vsel %vm2836, %v2866, %v2867
      %v2869 = vrot.slane %v2867, 4
      %v2870 = vrot.slane %v2387, 5
      %v2871 = vsel %vm2836, %v2869, %v2870
      %v2872 = vrot.slane %v2345, 5
      %v2873 = vrot.slane %v2872, 4
      %v2874 = vrot.slane %v2346, 5
      %v2875 = vsel %vm2836, %v2873, %v2874
      %v2876 = vrot.slane %v2874, 4
      %v2877 = vrot.slane %v2388, 5
      %v2878 = vsel %vm2836, %v2876, %v2877
      %v2879 = vrot.slane %v2347, 5
      %v2880 = vrot.slane %v2879, 4
      %v2881 = vrot.slane %v2348, 5
      %v2882 = vsel %vm2836, %v2880, %v2881
      %v2883 = vrot.slane %v2881, 4
      %v2884 = vrot.slane %v2389, 5
      %v2885 = vsel %vm2836, %v2883, %v2884
      %v2886 = vrot.slane %v2349, 5
      %v2887 = vrot.slane %v2886, 4
      %v2888 = vrot.slane %v2350, 5
      %v2889 = vsel %vm2836, %v2887, %v2888
      %v2890 = vrot.slane %v2888, 4
      %v2891 = vrot.slane %v2390, 5
      %v2892 = vsel %vm2836, %v2890, %v2891
      %v2893 = vrot.slane %v2351, 5
      %v2894 = vrot.slane %v2893, 4
      %v2895 = vrot.slane %v2352, 5
      %v2896 = vsel %vm2836, %v2894, %v2895
      %v2897 = vrot.slane %v2895, 4
      %v2898 = vrot.slane %v2391, 5
      %v2899 = vsel %vm2836, %v2897, %v2898
      %v2900 = vrot.slane %v2353, 5
      %v2901 = vrot.slane %v2900, 4
      %v2902 = vrot.slane %v2354, 5
      %v2903 = vsel %vm2836, %v2901, %v2902
      %v2904 = vrot.slane %v2902, 4
      %v2905 = vrot.slane %v2392, 5
      %v2906 = vsel %vm2836, %v2904, %v2905
      %v2907 = vrot.slane %v2355, 5
      %v2908 = vrot.slane %v2907, 4
      %v2909 = vrot.slane %v2356, 5
      %v2910 = vsel %vm2836, %v2908, %v2909
      %v2911 = vrot.slane %v2909, 4
      %v2912 = vrot.slane %v2393, 5
      %v2913 = vsel %vm2836, %v2911, %v2912
      %v2914 = vrot.slane %v2357, 5
      %v2915 = vrot.slane %v2914, 4
      %v2916 = vrot.slane %v2358, 5
      %v2917 = vsel %vm2836, %v2915, %v2916
      %v2918 = vrot.slane %v2916, 4
      %v2919 = vrot.slane %v2394, 5
      %v2920 = vsel %vm2836, %v2918, %v2919
      %v2921 = vrot.slane %v2359, 5
      %v2922 = vrot.slane %v2921, 4
      %v2923 = vrot.slane %v2360, 5
      %v2924 = vsel %vm2836, %v2922, %v2923
      %v2925 = vrot.slane %v2923, 4
      %v2926 = vrot.slane %v2395, 5
      %v2927 = vsel %vm2836, %v2925, %v2926
      %v2928 = vrot.slane %v2361, 5
      %v2929 = vrot.slane %v2928, 4
      %v2930 = vrot.slane %v2362, 5
      %v2931 = vsel %vm2836, %v2929, %v2930
      %v2932 = vrot.slane %v2930, 4
      %v2933 = vrot.slane %v2396, 5
      %v2934 = vsel %vm2836, %v2932, %v2933
      %v2935 = vrot.slane %v2363, 5
      %v2936 = vrot.slane %v2935, 4
      %v2937 = vrot.slane %v2364, 5
      %v2938 = vsel %vm2836, %v2936, %v2937
      %v2939 = vrot.slane %v2937, 4
      %v2940 = vrot.slane %v2397, 5
      %v2941 = vsel %vm2836, %v2939, %v2940
      %v2942 = vrot.slane %v2365, 5
      %v2943 = vrot.slane %v2942, 4
      %v2944 = vrot.slane %v2366, 5
      %v2945 = vsel %vm2836, %v2943, %v2944
      %v2946 = vrot.slane %v2944, 4
      %v2947 = vrot.slane %v2398, 5
      %v2948 = vsel %vm2836, %v2946, %v2947
      %v2949 = vmax.f32 %v408, 0.0
      %v2950 = vmax.f32 %v409, 0.0
      %v2951 = vpack.c.bf16 %v2949, %v2949
      %v2952 = vpack.c.bf16 %v2950, %v2950
      %v2953 = vmax.f32 %v410, 0.0
      %v2954 = vpack.c.bf16 %v2953, %v2953
      %v2956 = vshrl.u32 %v2951, 16
      %v2958 = vrot.slane %v2956, 4
      %v2959 = vshll.u32 %v2951, 16
      %v2961 = vrot.slane %v2959, 5
      %v2962 = vor.u32 %v2958, %v2961
      %v2963 = vrot.slane %v2962, 4
      %v2965 = vshll.u32 %v2952, 16
      %v2967 = vrot.slane %v2965, 5
      %v2968 = vsel %vm2401, %v2963, %v2967
      %v2969 = vshrl.u32 %v2952, 16
      %v2971 = vrot.slane %v2969, 4
      %v2972 = vor.u32 %v2971, %v2967
      %v2973 = vrot.slane %v2972, 4
      %v2975 = vshll.u32 %v2954, 16
      %v2977 = vrot.slane %v2975, 5
      %v2978 = vsel %vm2401, %v2973, %v2977
      %v2982 = vrot.slane %v2951, 5
      %v2983 = vrot.slane %v2982, 4
      %v2984 = vrot.slane %v2952, 5
      %v2985 = vsel %vm2836, %v2983, %v2984
      %v2986 = vrot.slane %v2984, 4
      %v2987 = vrot.slane %v2954, 5
      %v2988 = vsel %vm2836, %v2986, %v2987
      %v2989 = vmax.f32 %v411, 0.0
      %v2990 = vmax.f32 %v412, 0.0
      %v2991 = vpack.c.bf16 %v2989, %v2989
      %v2992 = vpack.c.bf16 %v2990, %v2990
      %v2993 = vmax.f32 %v413, 0.0
      %v2994 = vpack.c.bf16 %v2993, %v2993
      %v2996 = vshrl.u32 %v2991, 16
      %v2998 = vrot.slane %v2996, 4
      %v2999 = vshll.u32 %v2991, 16
      %v3001 = vrot.slane %v2999, 5
      %v3002 = vor.u32 %v2998, %v3001
      %v3003 = vrot.slane %v3002, 4
      %v3005 = vshll.u32 %v2992, 16
      %v3007 = vrot.slane %v3005, 5
      %v3008 = vsel %vm2401, %v3003, %v3007
      %v3009 = vshrl.u32 %v2992, 16
      %v3011 = vrot.slane %v3009, 4
      %v3012 = vor.u32 %v3011, %v3007
      %v3013 = vrot.slane %v3012, 4
      %v3015 = vshll.u32 %v2994, 16
      %v3017 = vrot.slane %v3015, 5
      %v3018 = vsel %vm2401, %v3013, %v3017
      %v3022 = vrot.slane %v2991, 5
      %v3023 = vrot.slane %v3022, 4
      %v3024 = vrot.slane %v2992, 5
      %v3025 = vsel %vm2836, %v3023, %v3024
      %v3026 = vrot.slane %v3024, 4
      %v3027 = vrot.slane %v2994, 5
      %v3028 = vsel %vm2836, %v3026, %v3027
      %v3029 = vunpack.c.l.b16 %v2335
      %v3030 = vunpack.c.l.b16 %v2336
      %v3031 = vunpack.c.l.b16 %v2337
      %v3032 = vunpack.c.l.b16 %v2338
      %v3033 = vunpack.c.l.b16 %v2339
      %v3034 = vunpack.c.l.b16 %v2340
      %v3035 = vunpack.c.l.b16 %v2341
      %v3036 = vunpack.c.l.b16 %v2342
      %v3037 = vunpack.c.l.b16 %v2343
      %v3038 = vunpack.c.l.b16 %v2344
      %v3039 = vunpack.c.l.b16 %v2345
      %v3040 = vunpack.c.l.b16 %v2346
      %v3041 = vunpack.c.l.b16 %v2347
      %v3042 = vunpack.c.l.b16 %v2348
      %v3043 = vunpack.c.l.b16 %v2349
      %v3044 = vunpack.c.l.b16 %v2350
      %v3045 = vunpack.c.l.b16 %v2351
      %v3046 = vunpack.c.l.b16 %v2352
      %v3047 = vunpack.c.l.b16 %v2353
      %v3048 = vunpack.c.l.b16 %v2354
      %v3049 = vunpack.c.l.b16 %v2355
      %v3050 = vunpack.c.l.b16 %v2356
      %v3051 = vunpack.c.l.b16 %v2357
      %v3052 = vunpack.c.l.b16 %v2358
      %v3053 = vunpack.c.l.b16 %v2359
      %v3054 = vunpack.c.l.b16 %v2360
      %v3055 = vunpack.c.l.b16 %v2361
      %v3056 = vunpack.c.l.b16 %v2362
      %v3057 = vunpack.c.l.b16 %v2363
      %v3058 = vunpack.c.l.b16 %v2364
      %v3059 = vunpack.c.l.b16 %v2365
      %v3060 = vunpack.c.l.b16 %v2366
      %v3061 = vpack.c.b16 %v3030, %v3029
      %v3062 = vpack.c.b16 %v3032, %v3031
      %v3063 = vpack.c.b16 %v3034, %v3033
      %v3064 = vpack.c.b16 %v3036, %v3035
      %v3065 = vpack.c.b16 %v3038, %v3037
      %v3066 = vpack.c.b16 %v3040, %v3039
      %v3067 = vpack.c.b16 %v3042, %v3041
      %v3068 = vpack.c.b16 %v3044, %v3043
      %v3069 = vpack.c.b16 %v3046, %v3045
      %v3070 = vpack.c.b16 %v3048, %v3047
      %v3071 = vpack.c.b16 %v3050, %v3049
      %v3072 = vpack.c.b16 %v3052, %v3051
      %v3073 = vpack.c.b16 %v3054, %v3053
      %v3074 = vpack.c.b16 %v3056, %v3055
      %v3075 = vpack.c.b16 %v3058, %v3057
      %v3076 = vpack.c.b16 %v3060, %v3059
      %v3077 = vunpack.c.l.b16 %v2415
      %v3078 = vunpack.c.l.b16 %v2425
      %v3079 = vunpack.c.l.b16 %v2439
      %v3080 = vunpack.c.l.b16 %v2449
      %v3081 = vunpack.c.l.b16 %v2463
      %v3082 = vunpack.c.l.b16 %v2473
      %v3083 = vunpack.c.l.b16 %v2487
      %v3084 = vunpack.c.l.b16 %v2497
      %v3085 = vunpack.c.l.b16 %v2511
      %v3086 = vunpack.c.l.b16 %v2521
      %v3087 = vunpack.c.l.b16 %v2535
      %v3088 = vunpack.c.l.b16 %v2545
      %v3089 = vunpack.c.l.b16 %v2559
      %v3090 = vunpack.c.l.b16 %v2569
      %v3091 = vunpack.c.l.b16 %v2583
      %v3092 = vunpack.c.l.b16 %v2593
      %v3093 = vunpack.c.l.b16 %v2607
      %v3094 = vunpack.c.l.b16 %v2617
      %v3095 = vunpack.c.l.b16 %v2631
      %v3096 = vunpack.c.l.b16 %v2641
      %v3097 = vunpack.c.l.b16 %v2655
      %v3098 = vunpack.c.l.b16 %v2665
      %v3099 = vunpack.c.l.b16 %v2679
      %v3100 = vunpack.c.l.b16 %v2689
      %v3101 = vunpack.c.l.b16 %v2703
      %v3102 = vunpack.c.l.b16 %v2713
      %v3103 = vunpack.c.l.b16 %v2727
      %v3104 = vunpack.c.l.b16 %v2737
      %v3105 = vunpack.c.l.b16 %v2751
      %v3106 = vunpack.c.l.b16 %v2761
      %v3107 = vunpack.c.l.b16 %v2775
      %v3108 = vunpack.c.l.b16 %v2785
      %v3109 = vpack.c.b16 %v3078, %v3077
      %v3110 = vpack.c.b16 %v3080, %v3079
      %v3111 = vpack.c.b16 %v3082, %v3081
      %v3112 = vpack.c.b16 %v3084, %v3083
      %v3113 = vpack.c.b16 %v3086, %v3085
      %v3114 = vpack.c.b16 %v3088, %v3087
      %v3115 = vpack.c.b16 %v3090, %v3089
      %v3116 = vpack.c.b16 %v3092, %v3091
      %v3117 = vpack.c.b16 %v3094, %v3093
      %v3118 = vpack.c.b16 %v3096, %v3095
      %v3119 = vpack.c.b16 %v3098, %v3097
      %v3120 = vpack.c.b16 %v3100, %v3099
      %v3121 = vpack.c.b16 %v3102, %v3101
      %v3122 = vpack.c.b16 %v3104, %v3103
      %v3123 = vpack.c.b16 %v3106, %v3105
      %v3124 = vpack.c.b16 %v3108, %v3107
      %3125 = vrot.lane.b32.xlu0 %v3109, 8
      %v3126 = vpop.permute.xlu0 %3125
      %3127 = vrot.lane.b32.xlu0 %v3110, 8
      %v3128 = vpop.permute.xlu0 %3127
      %3129 = vrot.lane.b32.xlu0 %v3111, 8
      %v3130 = vpop.permute.xlu0 %3129
      %3131 = vrot.lane.b32.xlu0 %v3112, 8
      %v3132 = vpop.permute.xlu0 %3131
      %3133 = vrot.lane.b32.xlu0 %v3113, 8
      %v3134 = vpop.permute.xlu0 %3133
      %3135 = vrot.lane.b32.xlu0 %v3114, 8
      %v3136 = vpop.permute.xlu0 %3135
      %3137 = vrot.lane.b32.xlu0 %v3115, 8
      %v3138 = vpop.permute.xlu0 %3137
      %3139 = vrot.lane.b32.xlu0 %v3116, 8
      %v3140 = vpop.permute.xlu0 %3139
      %3141 = vrot.lane.b32.xlu0 %v3117, 8
      %v3142 = vpop.permute.xlu0 %3141
      %3143 = vrot.lane.b32.xlu0 %v3118, 8
      %v3144 = vpop.permute.xlu0 %3143
      %3145 = vrot.lane.b32.xlu0 %v3119, 8
      %v3146 = vpop.permute.xlu0 %3145
      %3147 = vrot.lane.b32.xlu0 %v3120, 8
      %v3148 = vpop.permute.xlu0 %3147
      %3149 = vrot.lane.b32.xlu0 %v3121, 8
      %v3150 = vpop.permute.xlu0 %3149
      %3151 = vrot.lane.b32.xlu0 %v3122, 8
      %v3152 = vpop.permute.xlu0 %3151
      %3153 = vrot.lane.b32.xlu0 %v3123, 8
      %v3154 = vpop.permute.xlu0 %3153
      %3155 = vrot.lane.b32.xlu0 %v3124, 8
      %v3156 = vpop.permute.xlu0 %3155
      %v3157 = vunpack.c.l.b16 %v2840
      %v3158 = vunpack.c.l.b16 %v2843
      %v3159 = vunpack.c.l.b16 %v2847
      %v3160 = vunpack.c.l.b16 %v2850
      %v3161 = vunpack.c.l.b16 %v2854
      %v3162 = vunpack.c.l.b16 %v2857
      %v3163 = vunpack.c.l.b16 %v2861
      %v3164 = vunpack.c.l.b16 %v2864
      %v3165 = vunpack.c.l.b16 %v2868
      %v3166 = vunpack.c.l.b16 %v2871
      %v3167 = vunpack.c.l.b16 %v2875
      %v3168 = vunpack.c.l.b16 %v2878
      %v3169 = vunpack.c.l.b16 %v2882
      %v3170 = vunpack.c.l.b16 %v2885
      %v3171 = vunpack.c.l.b16 %v2889
      %v3172 = vunpack.c.l.b16 %v2892
      %v3173 = vunpack.c.l.b16 %v2896
      %v3174 = vunpack.c.l.b16 %v2899
      %v3175 = vunpack.c.l.b16 %v2903
      %v3176 = vunpack.c.l.b16 %v2906
      %v3177 = vunpack.c.l.b16 %v2910
      %v3178 = vunpack.c.l.b16 %v2913
      %v3179 = vunpack.c.l.b16 %v2917
      %v3180 = vunpack.c.l.b16 %v2920
      %v3181 = vunpack.c.l.b16 %v2924
      %v3182 = vunpack.c.l.b16 %v2927
      %v3183 = vunpack.c.l.b16 %v2931
      %v3184 = vunpack.c.l.b16 %v2934
      %v3185 = vunpack.c.l.b16 %v2938
      %v3186 = vunpack.c.l.b16 %v2941
      %v3187 = vunpack.c.l.b16 %v2945
      %v3188 = vunpack.c.l.b16 %v2948
      %v3189 = vpack.c.b16 %v3158, %v3157
      %v3190 = vpack.c.b16 %v3160, %v3159
      %v3191 = vpack.c.b16 %v3162, %v3161
      %v3192 = vpack.c.b16 %v3164, %v3163
      %v3193 = vpack.c.b16 %v3166, %v3165
      %v3194 = vpack.c.b16 %v3168, %v3167
      %v3195 = vpack.c.b16 %v3170, %v3169
      %v3196 = vpack.c.b16 %v3172, %v3171
      %v3197 = vpack.c.b16 %v3174, %v3173
      %v3198 = vpack.c.b16 %v3176, %v3175
      %v3199 = vpack.c.b16 %v3178, %v3177
      %v3200 = vpack.c.b16 %v3180, %v3179
      %v3201 = vpack.c.b16 %v3182, %v3181
      %v3202 = vpack.c.b16 %v3184, %v3183
      %v3203 = vpack.c.b16 %v3186, %v3185
      %v3204 = vpack.c.b16 %v3188, %v3187
      %3205 = vrot.lane.b32.xlu0 %v3189, 16
      %v3206 = vpop.permute.xlu0 %3205
      %3207 = vrot.lane.b32.xlu0 %v3190, 16
      %v3208 = vpop.permute.xlu0 %3207
      %3209 = vrot.lane.b32.xlu0 %v3191, 16
      %v3210 = vpop.permute.xlu0 %3209
      %3211 = vrot.lane.b32.xlu0 %v3192, 16
      %v3212 = vpop.permute.xlu0 %3211
      %3213 = vrot.lane.b32.xlu0 %v3193, 16
      %v3214 = vpop.permute.xlu0 %3213
      %3215 = vrot.lane.b32.xlu0 %v3194, 16
      %v3216 = vpop.permute.xlu0 %3215
      %3217 = vrot.lane.b32.xlu0 %v3195, 16
      %v3218 = vpop.permute.xlu0 %3217
      %3219 = vrot.lane.b32.xlu0 %v3196, 16
      %v3220 = vpop.permute.xlu0 %3219
      %3221 = vrot.lane.b32.xlu0 %v3197, 16
      %v3222 = vpop.permute.xlu0 %3221
      %3223 = vrot.lane.b32.xlu0 %v3198, 16
      %v3224 = vpop.permute.xlu0 %3223
      %3225 = vrot.lane.b32.xlu0 %v3199, 16
      %v3226 = vpop.permute.xlu0 %3225
      %3227 = vrot.lane.b32.xlu0 %v3200, 16
      %v3228 = vpop.permute.xlu0 %3227
      %3229 = vrot.lane.b32.xlu0 %v3201, 16
      %v3230 = vpop.permute.xlu0 %3229
      %3231 = vrot.lane.b32.xlu0 %v3202, 16
      %v3232 = vpop.permute.xlu0 %3231
      %3233 = vrot.lane.b32.xlu0 %v3203, 16
      %v3234 = vpop.permute.xlu0 %3233
      %3235 = vrot.lane.b32.xlu0 %v3204, 16
      %v3236 = vpop.permute.xlu0 %3235
      %v3237 = vunpack.c.l.b16 %v2951
      %v3238 = vunpack.c.l.b16 %v2952
      %v3239 = vpack.c.b16 %v3238, %v3237
      %3240 = vrot.lane.b32.xlu0 %v3062, 24
      %v3241 = vpop.permute.xlu0 %3240
      %3242 = vrot.lane.b32.xlu0 %v3063, 24
      %v3243 = vpop.permute.xlu0 %3242
      %3244 = vrot.lane.b32.xlu0 %v3064, 24
      %v3245 = vpop.permute.xlu0 %3244
      %3246 = vrot.lane.b32.xlu0 %v3065, 24
      %v3247 = vpop.permute.xlu0 %3246
      %3248 = vrot.lane.b32.xlu0 %v3066, 24
      %v3249 = vpop.permute.xlu0 %3248
      %3250 = vrot.lane.b32.xlu0 %v3067, 24
      %v3251 = vpop.permute.xlu0 %3250
      %3252 = vrot.lane.b32.xlu0 %v3068, 24
      %v3253 = vpop.permute.xlu0 %3252
      %3254 = vrot.lane.b32.xlu0 %v3069, 24
      %v3255 = vpop.permute.xlu0 %3254
      %3256 = vrot.lane.b32.xlu0 %v3070, 24
      %v3257 = vpop.permute.xlu0 %3256
      %3258 = vrot.lane.b32.xlu0 %v3071, 24
      %v3259 = vpop.permute.xlu0 %3258
      %3260 = vrot.lane.b32.xlu0 %v3072, 24
      %v3261 = vpop.permute.xlu0 %3260
      %3262 = vrot.lane.b32.xlu0 %v3073, 24
      %v3263 = vpop.permute.xlu0 %3262
      %3264 = vrot.lane.b32.xlu0 %v3074, 24
      %v3265 = vpop.permute.xlu0 %3264
      %3266 = vrot.lane.b32.xlu0 %v3075, 24
      %v3267 = vpop.permute.xlu0 %3266
      %3268 = vrot.lane.b32.xlu0 %v3076, 24
      %v3269 = vpop.permute.xlu0 %3268
      %3270 = vrot.lane.b32.xlu0 %v3239, 24
      %v3271 = vpop.permute.xlu0 %3270
      %v3272 = vunpack.c.l.b16 %v2968
      %v3273 = vunpack.c.l.b16 %v2978
      %v3274 = vpack.c.b16 %v3273, %v3272
      %3275 = vrot.lane.b32.xlu0 %v3110, 32
      %v3276 = vpop.permute.xlu0 %3275
      %3277 = vrot.lane.b32.xlu0 %v3111, 32
      %v3278 = vpop.permute.xlu0 %3277
      %3279 = vrot.lane.b32.xlu0 %v3112, 32
      %v3280 = vpop.permute.xlu0 %3279
      %3281 = vrot.lane.b32.xlu0 %v3113, 32
      %v3282 = vpop.permute.xlu0 %3281
      %3283 = vrot.lane.b32.xlu0 %v3114, 32
      %v3284 = vpop.permute.xlu0 %3283
      %3285 = vrot.lane.b32.xlu0 %v3115, 32
      %v3286 = vpop.permute.xlu0 %3285
      %3287 = vrot.lane.b32.xlu0 %v3116, 32
      %v3288 = vpop.permute.xlu0 %3287
      %3289 = vrot.lane.b32.xlu0 %v3117, 32
      %v3290 = vpop.permute.xlu0 %3289
      %3291 = vrot.lane.b32.xlu0 %v3118, 32
      %v3292 = vpop.permute.xlu0 %3291
      %3293 = vrot.lane.b32.xlu0 %v3119, 32
      %v3294 = vpop.permute.xlu0 %3293
      %3295 = vrot.lane.b32.xlu0 %v3120, 32
      %v3296 = vpop.permute.xlu0 %3295
      %3297 = vrot.lane.b32.xlu0 %v3121, 32
      %v3298 = vpop.permute.xlu0 %3297
      %3299 = vrot.lane.b32.xlu0 %v3122, 32
      %v3300 = vpop.permute.xlu0 %3299
      %3301 = vrot.lane.b32.xlu0 %v3123, 32
      %v3302 = vpop.permute.xlu0 %3301
      %3303 = vrot.lane.b32.xlu0 %v3124, 32
      %v3304 = vpop.permute.xlu0 %3303
      %3305 = vrot.lane.b32.xlu0 %v3274, 32
      %v3306 = vpop.permute.xlu0 %3305
      %v3307 = vunpack.c.l.b16 %v2985
      %v3308 = vunpack.c.l.b16 %v2988
      %v3309 = vpack.c.b16 %v3308, %v3307
      %3310 = vrot.lane.b32.xlu0 %v3190, 40
      %v3311 = vpop.permute.xlu0 %3310
      %3312 = vrot.lane.b32.xlu0 %v3191, 40
      %v3313 = vpop.permute.xlu0 %3312
      %3314 = vrot.lane.b32.xlu0 %v3192, 40
      %v3315 = vpop.permute.xlu0 %3314
      %3316 = vrot.lane.b32.xlu0 %v3193, 40
      %v3317 = vpop.permute.xlu0 %3316
      %3318 = vrot.lane.b32.xlu0 %v3194, 40
      %v3319 = vpop.permute.xlu0 %3318
      %3320 = vrot.lane.b32.xlu0 %v3195, 40
      %v3321 = vpop.permute.xlu0 %3320
      %3322 = vrot.lane.b32.xlu0 %v3196, 40
      %v3323 = vpop.permute.xlu0 %3322
      %3324 = vrot.lane.b32.xlu0 %v3197, 40
      %v3325 = vpop.permute.xlu0 %3324
      %3326 = vrot.lane.b32.xlu0 %v3198, 40
      %v3327 = vpop.permute.xlu0 %3326
      %3328 = vrot.lane.b32.xlu0 %v3199, 40
      %v3329 = vpop.permute.xlu0 %3328
      %3330 = vrot.lane.b32.xlu0 %v3200, 40
      %v3331 = vpop.permute.xlu0 %3330
      %3332 = vrot.lane.b32.xlu0 %v3201, 40
      %v3333 = vpop.permute.xlu0 %3332
      %3334 = vrot.lane.b32.xlu0 %v3202, 40
      %v3335 = vpop.permute.xlu0 %3334
      %3336 = vrot.lane.b32.xlu0 %v3203, 40
      %v3337 = vpop.permute.xlu0 %3336
      %3338 = vrot.lane.b32.xlu0 %v3204, 40
      %v3339 = vpop.permute.xlu0 %3338
      %3340 = vrot.lane.b32.xlu0 %v3309, 40
      %v3341 = vpop.permute.xlu0 %3340
      %v3342 = vunpack.c.l.b16 %v2991
      %v3343 = vunpack.c.l.b16 %v2992
      %v3344 = vpack.c.b16 %v3343, %v3342
      %3345 = vrot.lane.b32.xlu0 %v3063, 48
      %v3346 = vpop.permute.xlu0 %3345
      %3347 = vrot.lane.b32.xlu0 %v3064, 48
      %v3348 = vpop.permute.xlu0 %3347
      %3349 = vrot.lane.b32.xlu0 %v3065, 48
      %v3350 = vpop.permute.xlu0 %3349
      %3351 = vrot.lane.b32.xlu0 %v3066, 48
      %v3352 = vpop.permute.xlu0 %3351
      %3353 = vrot.lane.b32.xlu0 %v3067, 48
      %v3354 = vpop.permute.xlu0 %3353
      %3355 = vrot.lane.b32.xlu0 %v3068, 48
      %v3356 = vpop.permute.xlu0 %3355
      %3357 = vrot.lane.b32.xlu0 %v3069, 48
      %v3358 = vpop.permute.xlu0 %3357
      %3359 = vrot.lane.b32.xlu0 %v3070, 48
      %v3360 = vpop.permute.xlu0 %3359
      %3361 = vrot.lane.b32.xlu0 %v3071, 48
      %v3362 = vpop.permute.xlu0 %3361
      %3363 = vrot.lane.b32.xlu0 %v3072, 48
      %v3364 = vpop.permute.xlu0 %3363
      %3365 = vrot.lane.b32.xlu0 %v3073, 48
      %v3366 = vpop.permute.xlu0 %3365
      %3367 = vrot.lane.b32.xlu0 %v3074, 48
      %v3368 = vpop.permute.xlu0 %3367
      %3369 = vrot.lane.b32.xlu0 %v3075, 48
      %v3370 = vpop.permute.xlu0 %3369
      %3371 = vrot.lane.b32.xlu0 %v3076, 48
      %v3372 = vpop.permute.xlu0 %3371
      %3373 = vrot.lane.b32.xlu0 %v3239, 48
      %v3374 = vpop.permute.xlu0 %3373
      %3375 = vrot.lane.b32.xlu0 %v3344, 48
      %v3376 = vpop.permute.xlu0 %3375
      %v3377 = vunpack.c.l.b16 %v3008
      %v3378 = vunpack.c.l.b16 %v3018
      %v3379 = vpack.c.b16 %v3378, %v3377
      %3380 = vrot.lane.b32.xlu0 %v3111, 56
      %v3381 = vpop.permute.xlu0 %3380
      %3382 = vrot.lane.b32.xlu0 %v3112, 56
      %v3383 = vpop.permute.xlu0 %3382
      %3384 = vrot.lane.b32.xlu0 %v3113, 56
      %v3385 = vpop.permute.xlu0 %3384
      %3386 = vrot.lane.b32.xlu0 %v3114, 56
      %v3387 = vpop.permute.xlu0 %3386
      %3388 = vrot.lane.b32.xlu0 %v3115, 56
      %v3389 = vpop.permute.xlu0 %3388
      %3390 = vrot.lane.b32.xlu0 %v3116, 56
      %v3391 = vpop.permute.xlu0 %3390
      %3392 = vrot.lane.b32.xlu0 %v3117, 56
      %v3393 = vpop.permute.xlu0 %3392
      %3394 = vrot.lane.b32.xlu0 %v3118, 56
      %v3395 = vpop.permute.xlu0 %3394
      %3396 = vrot.lane.b32.xlu0 %v3119, 56
      %v3397 = vpop.permute.xlu0 %3396
      %3398 = vrot.lane.b32.xlu0 %v3120, 56
      %v3399 = vpop.permute.xlu0 %3398
      %3400 = vrot.lane.b32.xlu0 %v3121, 56
      %v3401 = vpop.permute.xlu0 %3400
      %3402 = vrot.lane.b32.xlu0 %v3122, 56
      %v3403 = vpop.permute.xlu0 %3402
      %3404 = vrot.lane.b32.xlu0 %v3123, 56
      %v3405 = vpop.permute.xlu0 %3404
      %3406 = vrot.lane.b32.xlu0 %v3124, 56
      %v3407 = vpop.permute.xlu0 %3406
      %3408 = vrot.lane.b32.xlu0 %v3274, 56
      %v3409 = vpop.permute.xlu0 %3408
      %3410 = vrot.lane.b32.xlu0 %v3379, 56
      %v3411 = vpop.permute.xlu0 %3410
      %v3412 = vunpack.c.l.b16 %v3025
      %v3413 = vunpack.c.l.b16 %v3028
      %v3414 = vpack.c.b16 %v3413, %v3412
      %3415 = vrot.lane.b32.xlu0 %v3191, 64
      %v3416 = vpop.permute.xlu0 %3415
      %3417 = vrot.lane.b32.xlu0 %v3192, 64
      %v3418 = vpop.permute.xlu0 %3417
      %3419 = vrot.lane.b32.xlu0 %v3193, 64
      %v3420 = vpop.permute.xlu0 %3419
      %3421 = vrot.lane.b32.xlu0 %v3194, 64
      %v3422 = vpop.permute.xlu0 %3421
      %3423 = vrot.lane.b32.xlu0 %v3195, 64
      %v3424 = vpop.permute.xlu0 %3423
      %3425 = vrot.lane.b32.xlu0 %v3196, 64
      %v3426 = vpop.permute.xlu0 %3425
      %3427 = vrot.lane.b32.xlu0 %v3197, 64
      %v3428 = vpop.permute.xlu0 %3427
      %3429 = vrot.lane.b32.xlu0 %v3198, 64
      %v3430 = vpop.permute.xlu0 %3429
      %3431 = vrot.lane.b32.xlu0 %v3199, 64
      %v3432 = vpop.permute.xlu0 %3431
      %3433 = vrot.lane.b32.xlu0 %v3200, 64
      %v3434 = vpop.permute.xlu0 %3433
      %3435 = vrot.lane.b32.xlu0 %v3201, 64
      %v3436 = vpop.permute.xlu0 %3435
      %3437 = vrot.lane.b32.xlu0 %v3202, 64
      %v3438 = vpop.permute.xlu0 %3437
      %3439 = vrot.lane.b32.xlu0 %v3203, 64
      %v3440 = vpop.permute.xlu0 %3439
      %3441 = vrot.lane.b32.xlu0 %v3204, 64
      %v3442 = vpop.permute.xlu0 %3441
      %3443 = vrot.lane.b32.xlu0 %v3309, 64
      %v3444 = vpop.permute.xlu0 %3443
      %3445 = vrot.lane.b32.xlu0 %v3414, 64
      %v3446 = vpop.permute.xlu0 %3445
      %v3449 = vsel %vm285, %v3061, %v3126
      %v3452 = vsel %vm285, %v3062, %v3128
      %v3455 = vsel %vm285, %v3063, %v3130
      %v3458 = vsel %vm285, %v3064, %v3132
      %v3461 = vsel %vm285, %v3065, %v3134
      %v3464 = vsel %vm285, %v3066, %v3136
      %v3467 = vsel %vm285, %v3067, %v3138
      %v3470 = vsel %vm285, %v3068, %v3140
      %v3473 = vsel %vm285, %v3069, %v3142
      %v3476 = vsel %vm285, %v3070, %v3144
      %v3479 = vsel %vm285, %v3071, %v3146
      %v3482 = vsel %vm285, %v3072, %v3148
      %v3485 = vsel %vm285, %v3073, %v3150
      %v3488 = vsel %vm285, %v3074, %v3152
      %v3491 = vsel %vm285, %v3075, %v3154
      %v3494 = vsel %vm285, %v3076, %v3156
      %vm3495 = vcmask 130048
      %v3497 = vsel %vm3495, %v3449, %v3206
      %v3499 = vsel %vm3495, %v3452, %v3208
      %v3501 = vsel %vm3495, %v3455, %v3210
      %v3503 = vsel %vm3495, %v3458, %v3212
      %v3505 = vsel %vm3495, %v3461, %v3214
      %v3507 = vsel %vm3495, %v3464, %v3216
      %v3509 = vsel %vm3495, %v3467, %v3218
      %v3511 = vsel %vm3495, %v3470, %v3220
      %v3513 = vsel %vm3495, %v3473, %v3222
      %v3515 = vsel %vm3495, %v3476, %v3224
      %v3517 = vsel %vm3495, %v3479, %v3226
      %v3519 = vsel %vm3495, %v3482, %v3228
      %v3521 = vsel %vm3495, %v3485, %v3230
      %v3523 = vsel %vm3495, %v3488, %v3232
      %v3525 = vsel %vm3495, %v3491, %v3234
      %v3527 = vsel %vm3495, %v3494, %v3236
      %vm3528 = vcmask 195584
      %v3530 = vsel %vm3528, %v3497, %v3241
      %v3532 = vsel %vm3528, %v3499, %v3243
      %v3534 = vsel %vm3528, %v3501, %v3245
      %v3536 = vsel %vm3528, %v3503, %v3247
      %v3538 = vsel %vm3528, %v3505, %v3249
      %v3540 = vsel %vm3528, %v3507, %v3251
      %v3542 = vsel %vm3528, %v3509, %v3253
      %v3544 = vsel %vm3528, %v3511, %v3255
      %v3546 = vsel %vm3528, %v3513, %v3257
      %v3548 = vsel %vm3528, %v3515, %v3259
      %v3550 = vsel %vm3528, %v3517, %v3261
      %v3552 = vsel %vm3528, %v3519, %v3263
      %v3554 = vsel %vm3528, %v3521, %v3265
      %v3556 = vsel %vm3528, %v3523, %v3267
      %v3558 = vsel %vm3528, %v3525, %v3269
      %v3560 = vsel %vm3528, %v3527, %v3271
      %vm3561 = vcmask 261120
      %v3563 = vsel %vm3561, %v3530, %v3276
      %v3565 = vsel %vm3561, %v3532, %v3278
      %v3567 = vsel %vm3561, %v3534, %v3280
      %v3569 = vsel %vm3561, %v3536, %v3282
      %v3571 = vsel %vm3561, %v3538, %v3284
      %v3573 = vsel %vm3561, %v3540, %v3286
      %v3575 = vsel %vm3561, %v3542, %v3288
      %v3577 = vsel %vm3561, %v3544, %v3290
      %v3579 = vsel %vm3561, %v3546, %v3292
      %v3581 = vsel %vm3561, %v3548, %v3294
      %v3583 = vsel %vm3561, %v3550, %v3296
      %v3585 = vsel %vm3561, %v3552, %v3298
      %v3587 = vsel %vm3561, %v3554, %v3300
      %v3589 = vsel %vm3561, %v3556, %v3302
      %v3591 = vsel %vm3561, %v3558, %v3304
      %v3593 = vsel %vm3561, %v3560, %v3306
      %vm3594 = vcmask 326656
      %v3596 = vsel %vm3594, %v3563, %v3311
      %v3598 = vsel %vm3594, %v3565, %v3313
      %v3600 = vsel %vm3594, %v3567, %v3315
      %v3602 = vsel %vm3594, %v3569, %v3317
      %v3604 = vsel %vm3594, %v3571, %v3319
      %v3606 = vsel %vm3594, %v3573, %v3321
      %v3608 = vsel %vm3594, %v3575, %v3323
      %v3610 = vsel %vm3594, %v3577, %v3325
      %v3612 = vsel %vm3594, %v3579, %v3327
      %v3614 = vsel %vm3594, %v3581, %v3329
      %v3616 = vsel %vm3594, %v3583, %v3331
      %v3618 = vsel %vm3594, %v3585, %v3333
      %v3620 = vsel %vm3594, %v3587, %v3335
      %v3622 = vsel %vm3594, %v3589, %v3337
      %v3624 = vsel %vm3594, %v3591, %v3339
      %v3626 = vsel %vm3594, %v3593, %v3341
      %vm3627 = vcmask 392192
      %v3629 = vsel %vm3627, %v3596, %v3346
      %v3631 = vsel %vm3627, %v3598, %v3348
      %v3633 = vsel %vm3627, %v3600, %v3350
      %v3635 = vsel %vm3627, %v3602, %v3352
      %v3637 = vsel %vm3627, %v3604, %v3354
      %v3639 = vsel %vm3627, %v3606, %v3356
      %v3641 = vsel %vm3627, %v3608, %v3358
      %v3643 = vsel %vm3627, %v3610, %v3360
      %v3645 = vsel %vm3627, %v3612, %v3362
      %v3647 = vsel %vm3627, %v3614, %v3364
      %v3649 = vsel %vm3627, %v3616, %v3366
      %v3651 = vsel %vm3627, %v3618, %v3368
      %v3653 = vsel %vm3627, %v3620, %v3370
      %v3655 = vsel %vm3627, %v3622, %v3372
      %v3657 = vsel %vm3627, %v3624, %v3374
      %v3659 = vsel %vm3627, %v3626, %v3376
      %vm3660 = vcmask 457728
      %v3662 = vsel %vm3660, %v3629, %v3381
      %v3664 = vsel %vm3660, %v3631, %v3383
      %v3666 = vsel %vm3660, %v3633, %v3385
      %v3668 = vsel %vm3660, %v3635, %v3387
      %v3670 = vsel %vm3660, %v3637, %v3389
      %v3672 = vsel %vm3660, %v3639, %v3391
      %v3674 = vsel %vm3660, %v3641, %v3393
      %v3676 = vsel %vm3660, %v3643, %v3395
      %v3678 = vsel %vm3660, %v3645, %v3397
      %v3680 = vsel %vm3660, %v3647, %v3399
      %v3682 = vsel %vm3660, %v3649, %v3401
      %v3684 = vsel %vm3660, %v3651, %v3403
      %v3686 = vsel %vm3660, %v3653, %v3405
      %v3688 = vsel %vm3660, %v3655, %v3407
      %v3690 = vsel %vm3660, %v3657, %v3409
      %v3692 = vsel %vm3660, %v3659, %v3411
      %vm3693 = vcmask 523264
      %v3695 = vsel %vm3693, %v3662, %v3416
      %v3697 = vsel %vm3693, %v3664, %v3418
      %v3699 = vsel %vm3693, %v3666, %v3420
      %v3701 = vsel %vm3693, %v3668, %v3422
      %v3703 = vsel %vm3693, %v3670, %v3424
      %v3705 = vsel %vm3693, %v3672, %v3426
      %v3707 = vsel %vm3693, %v3674, %v3428
      %v3709 = vsel %vm3693, %v3676, %v3430
      %v3711 = vsel %vm3693, %v3678, %v3432
      %v3713 = vsel %vm3693, %v3680, %v3434
      %v3715 = vsel %vm3693, %v3682, %v3436
      %v3717 = vsel %vm3693, %v3684, %v3438
      %v3719 = vsel %vm3693, %v3686, %v3440
      %v3721 = vsel %vm3693, %v3688, %v3442
      %v3723 = vsel %vm3693, %v3690, %v3444
      %v3725 = vsel %vm3693, %v3692, %v3446
      %v3726 = vld [vmem:[%s1] sm:$0xf]
      %v3727 = vld [vmem:[%s1 + $0x4] sm:$0xf]
      %v3728 = vld [vmem:[%s1 + $0x8] sm:$0xf]
      %v3729 = vld [vmem:[%s1 + $0xc] sm:$0xf]
      %v3730 = vld [vmem:[%s1 + $0x10] sm:$0xf]
      %v3731 = vld [vmem:[%s1 + $0x14] sm:$0xf]
      %v3732 = vld [vmem:[%s1 + $0x18] sm:$0xf]
      %v3733 = vld [vmem:[%s1 + $0x1c] sm:$0xf]
      %v3734 = vld [vmem:[%s1 + $0x20] sm:$0xf]
      %v3744 = vunpack.c.l.b16 %v3726
      %v3745 = vunpack.c.l.b16 %v3727
      %v3746 = vunpack.c.l.b16 %v3728
      %v3747 = vunpack.c.l.b16 %v3729
      %v3748 = vunpack.c.l.b16 %v3730
      %v3749 = vunpack.c.l.b16 %v3731
      %v3750 = vunpack.c.l.b16 %v3732
      %v3751 = vunpack.c.l.b16 %v3733
      %v3752 = vunpack.c.l.b16 %v3734
      %v3753 = vpack.c.b16 %v3745, %v3744
      %v3754 = vpack.c.b16 %v3747, %v3746
      %v3755 = vpack.c.b16 %v3749, %v3748
      %v3756 = vpack.c.b16 %v3751, %v3750
      %v3757 = vpack.c.b16 %v3752, %v3752
      %vm3762 = vcmask 588800
      %v3763 = vsel %vm3762, %v3695, 0
      %v3765 = vsel %vm3762, %v3697, 0
      %v3767 = vsel %vm3762, %v3699, 0
      %v3769 = vsel %vm3762, %v3701, 0
      %v3771 = vsel %vm3762, %v3703, 0
      %v3773 = vsel %vm3762, %v3705, 0
      %v3775 = vsel %vm3762, %v3707, 0
      %v3777 = vsel %vm3762, %v3709, 0
      %v3779 = vsel %vm3762, %v3711, 0
      %v3781 = vsel %vm3762, %v3713, 0
      %v3783 = vsel %vm3762, %v3715, 0
      %v3785 = vsel %vm3762, %v3717, 0
      %v3787 = vsel %vm3762, %v3719, 0
      %v3789 = vsel %vm3762, %v3721, 0
      %v3791 = vsel %vm3762, %v3723, 0
      %v3793 = vsel %vm3762, %v3725, 0
      %v3796 = vsel %vm2210, %v3757, 0
      %3798 = vmatpush.bf16.msra.mxu0 0
      %3799 = vmatpush.bf16.msra.mxu0 0
      %3800 = vmatpush.bf16.msra.mxu0 0
      %3801 = vmatpush.bf16.msra.mxu0 %v3796
      %3802 = vmatpush.bf16.msra.mxu0 %v3756
      %3803 = vmatpush.bf16.msra.mxu0 %v3755
      %3804 = vmatpush.bf16.msra.mxu0 %v3754
      %3805 = vmatpush.bf16.msra.mxu0 %v3753
      %3806 = vmatmul.bf16.gmra.mxu0 %v3763
      %v3807 = vpop.f32.mrf.mxu0
      %v3808 = vadd.f32 0.0, %v3807
      %v3809 = vpop.f32.mrf.mxu0
      %v3810 = vadd.f32 0.0, %v3809
      %3811 = vmatmul.bf16.gmra.mxu0 %v3765
      %v3812 = vpop.f32.mrf.mxu0
      %v3813 = vadd.f32 0.0, %v3812
      %v3814 = vpop.f32.mrf.mxu0
      %v3815 = vadd.f32 0.0, %v3814
      %3816 = vmatmul.bf16.gmra.mxu0 %v3767
      %v3817 = vpop.f32.mrf.mxu0
      %v3818 = vadd.f32 0.0, %v3817
      %v3819 = vpop.f32.mrf.mxu0
      %v3820 = vadd.f32 0.0, %v3819
      %3821 = vmatmul.bf16.gmra.mxu0 %v3769
      %v3822 = vpop.f32.mrf.mxu0
      %v3823 = vadd.f32 0.0, %v3822
      %v3824 = vpop.f32.mrf.mxu0
      %v3825 = vadd.f32 0.0, %v3824
      %3826 = vmatmul.bf16.gmra.mxu0 %v3771
      %v3827 = vpop.f32.mrf.mxu0
      %v3828 = vadd.f32 0.0, %v3827
      %v3829 = vpop.f32.mrf.mxu0
      %v3830 = vadd.f32 0.0, %v3829
      %3831 = vmatmul.bf16.gmra.mxu0 %v3773
      %v3832 = vpop.f32.mrf.mxu0
      %v3833 = vadd.f32 0.0, %v3832
      %v3834 = vpop.f32.mrf.mxu0
      %v3835 = vadd.f32 0.0, %v3834
      %3836 = vmatmul.bf16.gmra.mxu0 %v3775
      %v3837 = vpop.f32.mrf.mxu0
      %v3838 = vadd.f32 0.0, %v3837
      %v3839 = vpop.f32.mrf.mxu0
      %v3840 = vadd.f32 0.0, %v3839
      %3841 = vmatmul.bf16.gmra.mxu0 %v3777
      %v3842 = vpop.f32.mrf.mxu0
      %v3843 = vadd.f32 0.0, %v3842
      %v3844 = vpop.f32.mrf.mxu0
      %v3845 = vadd.f32 0.0, %v3844
      %3846 = vmatmul.bf16.gmra.mxu0 %v3779
      %v3847 = vpop.f32.mrf.mxu0
      %v3848 = vadd.f32 0.0, %v3847
      %v3849 = vpop.f32.mrf.mxu0
      %v3850 = vadd.f32 0.0, %v3849
      %3851 = vmatmul.bf16.gmra.mxu0 %v3781
      %v3852 = vpop.f32.mrf.mxu0
      %v3853 = vadd.f32 0.0, %v3852
      %v3854 = vpop.f32.mrf.mxu0
      %v3855 = vadd.f32 0.0, %v3854
      %3856 = vmatmul.bf16.gmra.mxu0 %v3783
      %v3857 = vpop.f32.mrf.mxu0
      %v3858 = vadd.f32 0.0, %v3857
      %v3859 = vpop.f32.mrf.mxu0
      %v3860 = vadd.f32 0.0, %v3859
      %3861 = vmatmul.bf16.gmra.mxu0 %v3785
      %v3862 = vpop.f32.mrf.mxu0
      %v3863 = vadd.f32 0.0, %v3862
      %v3864 = vpop.f32.mrf.mxu0
      %v3865 = vadd.f32 0.0, %v3864
      %3866 = vmatmul.bf16.gmra.mxu0 %v3787
      %v3867 = vpop.f32.mrf.mxu0
      %v3868 = vadd.f32 0.0, %v3867
      %v3869 = vpop.f32.mrf.mxu0
      %v3870 = vadd.f32 0.0, %v3869
      %3871 = vmatmul.bf16.gmra.mxu0 %v3789
      %v3872 = vpop.f32.mrf.mxu0
      %v3873 = vadd.f32 0.0, %v3872
      %v3874 = vpop.f32.mrf.mxu0
      %v3875 = vadd.f32 0.0, %v3874
      %3876 = vmatmul.bf16.gmra.mxu0 %v3791
      %v3877 = vpop.f32.mrf.mxu0
      %v3878 = vadd.f32 0.0, %v3877
      %v3879 = vpop.f32.mrf.mxu0
      %v3880 = vadd.f32 0.0, %v3879
      %3881 = vmatmul.bf16.gmra.mxu0 %v3793
      %v3882 = vpop.f32.mrf.mxu0
      %v3883 = vadd.f32 0.0, %v3882
      %v3884 = vpop.f32.mrf.mxu0
      %v3885 = vadd.f32 0.0, %v3884
      %3886 = vdwg.mxu0
      %v3887 = vperm.slane %v416, 0
      %v3888 = vmul.f32 %v3808, %v3887
      %v3889 = vmul.f32 %v3810, %v3887
      %v3890 = vmul.f32 %v3813, %v3887
      %v3891 = vmul.f32 %v3815, %v3887
      %v3892 = vmul.f32 %v3818, %v3887
      %v3893 = vmul.f32 %v3820, %v3887
      %v3894 = vmul.f32 %v3823, %v3887
      %v3895 = vmul.f32 %v3825, %v3887
      %v3896 = vmul.f32 %v3828, %v3887
      %v3897 = vmul.f32 %v3830, %v3887
      %v3898 = vmul.f32 %v3833, %v3887
      %v3899 = vmul.f32 %v3835, %v3887
      %v3900 = vmul.f32 %v3838, %v3887
      %v3901 = vmul.f32 %v3840, %v3887
      %v3902 = vmul.f32 %v3843, %v3887
      %v3903 = vmul.f32 %v3845, %v3887
      %v3904 = vmul.f32 %v3848, %v3887
      %v3905 = vmul.f32 %v3850, %v3887
      %v3906 = vmul.f32 %v3853, %v3887
      %v3907 = vmul.f32 %v3855, %v3887
      %v3908 = vmul.f32 %v3858, %v3887
      %v3909 = vmul.f32 %v3860, %v3887
      %v3910 = vmul.f32 %v3863, %v3887
      %v3911 = vmul.f32 %v3865, %v3887
      %v3912 = vmul.f32 %v3868, %v3887
      %v3913 = vmul.f32 %v3870, %v3887
      %v3914 = vmul.f32 %v3873, %v3887
      %v3915 = vmul.f32 %v3875, %v3887
      %v3916 = vmul.f32 %v3878, %v3887
      %v3917 = vmul.f32 %v3880, %v3887
      %v3918 = vmul.f32 %v3883, %v3887
      %v3919 = vmul.f32 %v3885, %v3887
      %v3920 = vperm.slane %v417, 0
      %v3921 = vmul.f32 %v2224, %v3920
      %v3922 = vmul.f32 %v2226, %v3920
      %v3923 = vmul.f32 %v2229, %v3920
      %v3924 = vmul.f32 %v2231, %v3920
      %v3925 = vmul.f32 %v2234, %v3920
      %v3926 = vmul.f32 %v2236, %v3920
      %v3927 = vmul.f32 %v2239, %v3920
      %v3928 = vmul.f32 %v2241, %v3920
      %v3929 = vmul.f32 %v2244, %v3920
      %v3930 = vmul.f32 %v2246, %v3920
      %v3931 = vmul.f32 %v2249, %v3920
      %v3932 = vmul.f32 %v2251, %v3920
      %v3933 = vmul.f32 %v2254, %v3920
      %v3934 = vmul.f32 %v2256, %v3920
      %v3935 = vmul.f32 %v2259, %v3920
      %v3936 = vmul.f32 %v2261, %v3920
      %v3937 = vmul.f32 %v2264, %v3920
      %v3938 = vmul.f32 %v2266, %v3920
      %v3939 = vmul.f32 %v2269, %v3920
      %v3940 = vmul.f32 %v2271, %v3920
      %v3941 = vmul.f32 %v2274, %v3920
      %v3942 = vmul.f32 %v2276, %v3920
      %v3943 = vmul.f32 %v2279, %v3920
      %v3944 = vmul.f32 %v2281, %v3920
      %v3945 = vmul.f32 %v2284, %v3920
      %v3946 = vmul.f32 %v2286, %v3920
      %v3947 = vmul.f32 %v2289, %v3920
      %v3948 = vmul.f32 %v2291, %v3920
      %v3949 = vmul.f32 %v2294, %v3920
      %v3950 = vmul.f32 %v2296, %v3920
      %v3951 = vmul.f32 %v2299, %v3920
      %v3952 = vmul.f32 %v2301, %v3920
      %v3953 = vadd.f32 %v3888, %v3921
      %v3954 = vadd.f32 %v3889, %v3922
      %v3955 = vadd.f32 %v3890, %v3923
      %v3956 = vadd.f32 %v3891, %v3924
      %v3957 = vadd.f32 %v3892, %v3925
      %v3958 = vadd.f32 %v3893, %v3926
      %v3959 = vadd.f32 %v3894, %v3927
      %v3960 = vadd.f32 %v3895, %v3928
      %v3961 = vadd.f32 %v3896, %v3929
      %v3962 = vadd.f32 %v3897, %v3930
      %v3963 = vadd.f32 %v3898, %v3931
      %v3964 = vadd.f32 %v3899, %v3932
      %v3965 = vadd.f32 %v3900, %v3933
      %v3966 = vadd.f32 %v3901, %v3934
      %v3967 = vadd.f32 %v3902, %v3935
      %v3968 = vadd.f32 %v3903, %v3936
      %v3969 = vadd.f32 %v3904, %v3937
      %v3970 = vadd.f32 %v3905, %v3938
      %v3971 = vadd.f32 %v3906, %v3939
      %v3972 = vadd.f32 %v3907, %v3940
      %v3973 = vadd.f32 %v3908, %v3941
      %v3974 = vadd.f32 %v3909, %v3942
      %v3975 = vadd.f32 %v3910, %v3943
      %v3976 = vadd.f32 %v3911, %v3944
      %v3977 = vadd.f32 %v3912, %v3945
      %v3978 = vadd.f32 %v3913, %v3946
      %v3979 = vadd.f32 %v3914, %v3947
      %v3980 = vadd.f32 %v3915, %v3948
      %v3981 = vadd.f32 %v3916, %v3949
      %v3982 = vadd.f32 %v3917, %v3950
      %v3983 = vadd.f32 %v3918, %v3951
      %v3984 = vadd.f32 %v3919, %v3952
      %v3985 = vperm.slane %v418, 0
      %v3986 = vadd.f32 %v3953, %v3985
      %v3987 = vadd.f32 %v3954, %v3985
      %v3988 = vadd.f32 %v3955, %v3985
      %v3989 = vadd.f32 %v3956, %v3985
      %v3990 = vadd.f32 %v3957, %v3985
      %v3991 = vadd.f32 %v3958, %v3985
      %v3992 = vadd.f32 %v3959, %v3985
      %v3993 = vadd.f32 %v3960, %v3985
      %v3994 = vadd.f32 %v3961, %v3985
      %v3995 = vadd.f32 %v3962, %v3985
      %v3996 = vadd.f32 %v3963, %v3985
      %v3997 = vadd.f32 %v3964, %v3985
      %v3998 = vadd.f32 %v3965, %v3985
      %v3999 = vadd.f32 %v3966, %v3985
      %v4000 = vadd.f32 %v3967, %v3985
      %v4001 = vadd.f32 %v3968, %v3985
      %v4002 = vadd.f32 %v3969, %v3985
      %v4003 = vadd.f32 %v3970, %v3985
      %v4004 = vadd.f32 %v3971, %v3985
      %v4005 = vadd.f32 %v3972, %v3985
      %v4006 = vadd.f32 %v3973, %v3985
      %v4007 = vadd.f32 %v3974, %v3985
      %v4008 = vadd.f32 %v3975, %v3985
      %v4009 = vadd.f32 %v3976, %v3985
      %v4010 = vadd.f32 %v3977, %v3985
      %v4011 = vadd.f32 %v3978, %v3985
      %v4012 = vadd.f32 %v3979, %v3985
      %v4013 = vadd.f32 %v3980, %v3985
      %v4014 = vadd.f32 %v3981, %v3985
      %v4015 = vadd.f32 %v3982, %v3985
      %v4016 = vadd.f32 %v3983, %v3985
      %v4017 = vadd.f32 %v3984, %v3985
      %v4018 = vadd.f32 %v1985, %v3986
      %v4019 = vadd.f32 %v1986, %v3987
      %v4020 = vadd.f32 %v1987, %v3988
      %v4021 = vadd.f32 %v1988, %v3989
      %v4022 = vadd.f32 %v1989, %v3990
      %v4023 = vadd.f32 %v1990, %v3991
      %v4024 = vadd.f32 %v1991, %v3992
      %v4025 = vadd.f32 %v1992, %v3993
      %v4026 = vadd.f32 %v1993, %v3994
      %v4027 = vadd.f32 %v1994, %v3995
      %v4028 = vadd.f32 %v1995, %v3996
      %v4029 = vadd.f32 %v1996, %v3997
      %v4030 = vadd.f32 %v1997, %v3998
      %v4031 = vadd.f32 %v1998, %v3999
      %v4032 = vadd.f32 %v1999, %v4000
      %v4033 = vadd.f32 %v2000, %v4001
      %v4034 = vadd.f32 %v2001, %v4002
      %v4035 = vadd.f32 %v2002, %v4003
      %v4036 = vadd.f32 %v2003, %v4004
      %v4037 = vadd.f32 %v2004, %v4005
      %v4038 = vadd.f32 %v2005, %v4006
      %v4039 = vadd.f32 %v2006, %v4007
      %v4040 = vadd.f32 %v2007, %v4008
      %v4041 = vadd.f32 %v2008, %v4009
      %v4042 = vadd.f32 %v2009, %v4010
      %v4043 = vadd.f32 %v2010, %v4011
      %v4044 = vadd.f32 %v2011, %v4012
      %v4045 = vadd.f32 %v2012, %v4013
      %v4046 = vadd.f32 %v2013, %v4014
      %v4047 = vadd.f32 %v2014, %v4015
      %v4048 = vadd.f32 %v2015, %v4016
      %v4049 = vadd.f32 %v2016, %v4017
      %4050 = vst.msk [vmem:[%s251] sm:$0xff] %vm285, %v4018
      %4051 = vst.msk [vmem:[%s251 + $0x8] sm:$0xff] %vm285, %v4019
      %4052 = vst.msk [vmem:[%s251 + $0x10] sm:$0xff] %vm285, %v4020
      %4053 = vst.msk [vmem:[%s251 + $0x18] sm:$0xff] %vm285, %v4021
      %4054 = vst.msk [vmem:[%s251 + $0x20] sm:$0xff] %vm285, %v4022
      %4055 = vst.msk [vmem:[%s251 + $0x28] sm:$0xff] %vm285, %v4023
      %4056 = vst.msk [vmem:[%s251 + $0x30] sm:$0xff] %vm285, %v4024
      %4057 = vst.msk [vmem:[%s251 + $0x38] sm:$0xff] %vm285, %v4025
      %4058 = vst.msk [vmem:[%s251 + $0x40] sm:$0xff] %vm285, %v4026
      %4059 = vst.msk [vmem:[%s251 + $0x48] sm:$0xff] %vm285, %v4027
      %4060 = vst.msk [vmem:[%s251 + $0x50] sm:$0xff] %vm285, %v4028
      %4061 = vst.msk [vmem:[%s251 + $0x58] sm:$0xff] %vm285, %v4029
      %4062 = vst.msk [vmem:[%s251 + $0x60] sm:$0xff] %vm285, %v4030
      %4063 = vst.msk [vmem:[%s251 + $0x68] sm:$0xff] %vm285, %v4031
      %4064 = vst.msk [vmem:[%s251 + $0x70] sm:$0xff] %vm285, %v4032
      %4065 = vst.msk [vmem:[%s251 + $0x78] sm:$0xff] %vm285, %v4033
      %4066 = vst.msk [vmem:[%s251 + $0x80] sm:$0xff] %vm285, %v4034
      %4067 = vst.msk [vmem:[%s251 + $0x88] sm:$0xff] %vm285, %v4035
      %4068 = vst.msk [vmem:[%s251 + $0x90] sm:$0xff] %vm285, %v4036
      %4069 = vst.msk [vmem:[%s251 + $0x98] sm:$0xff] %vm285, %v4037
      %4070 = vst.msk [vmem:[%s251 + $0xa0] sm:$0xff] %vm285, %v4038
      %4071 = vst.msk [vmem:[%s251 + $0xa8] sm:$0xff] %vm285, %v4039
      %4072 = vst.msk [vmem:[%s251 + $0xb0] sm:$0xff] %vm285, %v4040
      %4073 = vst.msk [vmem:[%s251 + $0xb8] sm:$0xff] %vm285, %v4041
      %4074 = vst.msk [vmem:[%s251 + $0xc0] sm:$0xff] %vm285, %v4042
      %4075 = vst.msk [vmem:[%s251 + $0xc8] sm:$0xff] %vm285, %v4043
      %4076 = vst.msk [vmem:[%s251 + $0xd0] sm:$0xff] %vm285, %v4044
      %4077 = vst.msk [vmem:[%s251 + $0xd8] sm:$0xff] %vm285, %v4045
      %4078 = vst.msk [vmem:[%s251 + $0xe0] sm:$0xff] %vm285, %v4046
      %4079 = vst.msk [vmem:[%s251 + $0xe8] sm:$0xff] %vm285, %v4047
      %4080 = vst.msk [vmem:[%s251 + $0xf0] sm:$0xff] %vm285, %v4048
      %4081 = vst.msk [vmem:[%s251 + $0xf8] sm:$0xff] %vm285, %v4049
      %p4082 = scmp.lt.s32.totalorder %s17, 1
      %s4083 = scalar_select %p4082, %s17, 1
      %s4084 = smul.addr %s4083, 32
      %s4085 = smul.addr %s4084, 8
      %s4086 = scalar_lea.vmem %s6, %s4085
      // Predicated region
      $region45: #{_lambda_.3} parent=43 // pred_check
        %p4087 = pneg %p166
      $region46: #{_lambda_.3} parent=43 // pred_check_branch
        %4089 = sbr.rel (%p4087) target = $region48
      $region47: #{_lambda_.3} parent=43 // pred_region
        _
      $region48: #{_lambda_.3} parent=43 // pred_fallthru
        _
    $region44: #{_lambda_.3} parent=5 // pred_fallthru
      _
    %p4090 = scmp.le.s32.totalorder 2, %s12
    // Predicated region
    $region49: #{_lambda_.3} parent=5 // pred_check
      %p4091 = pneg %p4090
    $region50: #{_lambda_.3} parent=5 // pred_check_branch
      %4093 = sbr.rel (%p4091) target = $region52
    $region51: #{_lambda_.3} parent=5 // pred_region
      %s4094 = ssub.s32 %s12, 2
      // Predicated region
      $region53: #{_lambda_.3} parent=51 // pred_check
        %p4095 = pneg %p172
      $region54: #{_lambda_.3} parent=51 // pred_check_branch
        %4097 = sbr.rel (%p4095) target = $region56
      $region55: #{_lambda_.3} parent=51 // pred_region
        %p4098 = scmp.lt.s32.totalorder %s18, 1
        %s4099 = scalar_select %p4098, %s18, 1
        %s4100 = smul.addr %s4099, 32
        %s4101 = smul.addr %s4100, 8
        %s4102 = scalar_lea.vmem %s6, %s4101
      $region56: #{_lambda_.3} parent=51 // pred_fallthru
        _
    $region52: #{_lambda_.3} parent=5 // pred_fallthru
      _
  $region6: #{_lambda_.3} parent=0 // loop_footer
    %s16 = sadd.s32 1, %s12
  $region7: #{_lambda_.3} parent=0 // loop_footer_branch
    %11 = sbr.rel target = $region3
  $region8: #{_lambda_.3} parent=0 // loop_exit
    _

</llo_original>
